<compile_context>
chip_gen: v7x
topology: tpu7x:2x2x1
jax: 0.10.0
libtpu: 0.0.40
codegen_flags: <defaults>
</compile_context>

<pallas_src>
import functools

import jax
import jax.numpy as jnp
import numpy as np
from jax import lax
from jax.experimental import pallas as pl
from jax.experimental.pallas import tpu as pltpu


_LPAD = 8  # left zero-halo width of the conv2 scratch -> sublane-aligned interior


def _pick_row_tile(ho, wo, target=8):
    """Largest TH <= target dividing Ho with (TH*Wo) % 8 == 0, else full Ho."""
    if ho <= target:
        return ho
    for th in range(min(target, ho), 0, -1):
        if ho % th == 0 and (th * wo) % 8 == 0:
            return th
    return ho


def _basic_block_kernel(x_ref, w1_ref, b1_ref, w2_ref, b2_ref, *rest,
                        stride, th, wo, n_row_tiles, rstrip, has_downsample):
    """One grid step = one TH-row tile of one batch image (NHWC, C on lanes).

    x_ref : (1, s*s, Hp+2, Wp, Cin)  phase-split, spatially pre-padded input, bf16
    w1_ref: (3, 3*Cin, Cout)         conv1 weights, ky-major / kx-merged K, BN1 folded
    b1_ref: (1, Cout)                folded BN1 shift, f32
    w2_ref: (3, 3*Cout, Cout)        conv2 weights, BN2 folded
    b2_ref: (1, Cout)                folded BN2 shift, f32
    [wd_ref: (Cin, Cout), bd_ref: (1, Cout)]   folded 1x1 downsample + BN (optional)
    o_ref : (1, TH*Wo, Cout)         NHWC output tile, bf16 (no transpose)
    hpad  : (TH+2, Wpad, Cout)       zero-halo scratch for conv2, bf16
    """
    if has_downsample:
        wd_ref, bd_ref, o_ref, hpad_ref = rest
    else:
        o_ref, hpad_ref = rest

    r = pl.program_id(1)
    cin = x_ref.shape[-1]
    cout = w2_ref.shape[-1]
    th1 = th + 2                      # conv1 rows incl. 1-row recompute halo
    m1 = th1 * wo
    m = th * wo
    wpad = hpad_ref.shape[1]
    f32 = jnp.float32
    row0 = r * th

    def x_win(ky, kx, rows, row_start):
        # Contiguous window of the phase-split padded input for tap (ky, kx).
        p = (ky % stride) * stride + (kx % stride)
        return x_ref[0, p,
                     pl.ds(row_start + ky // stride, rows),
                     pl.ds(kx // stride, wo), :]

    # ---- conv1 (3x3, stride, pad=1) + BN1 folded, over TH+2 rows -------------
    # kx taps merged along K -> 3 matmuls with K = 3*Cin.
    acc1 = jnp.zeros((m1, cout), f32)
    for ky in range(3):
        slab = jnp.concatenate([x_win(ky, kx, th1, row0) for kx in range(3)],
                               axis=-1)                       # (TH1, Wo, 3*Cin) bf16
        acc1 = acc1 + jnp.dot(slab.reshape(m1, 3 * cin), w1_ref[ky],
                              preferred_element_type=f32)
    h1 = jnp.maximum(acc1 + b1_ref[...], 0.0).astype(hpad_ref.dtype)   # bf16

    # ---- stash intermediate into the zero-halo scratch -----------------------
    # 8-wide sublane-aligned zero strips for the left/right halo columns, then a
    # plain aligned store of the interior (which overwrites any overlap).
    hpad_ref[:, 0:_LPAD, :] = jnp.zeros((th1, _LPAD, cout), hpad_ref.dtype)
    hpad_ref[:, rstrip:rstrip + 8, :] = jnp.zeros((th1, 8, cout), hpad_ref.dtype)
    hpad_ref[:, _LPAD:_LPAD + wo, :] = h1.reshape(th1, wo, cout)

    # conv2's zero padding along H exists only at the image boundary tiles.
    @pl.when(r == 0)
    def _():
        hpad_ref[0:1, :, :] = jnp.zeros((1, wpad, cout), hpad_ref.dtype)

    @pl.when(r == n_row_tiles - 1)
    def _():
        hpad_ref[th1 - 1:th1, :, :] = jnp.zeros((1, wpad, cout), hpad_ref.dtype)

    # ---- conv2 (3x3, stride=1, pad=1) + BN2 folded ----------------------------
    acc2 = jnp.zeros((m, cout), f32)
    c0 = _LPAD - 1
    for ky in range(3):
        slab = jnp.concatenate(
            [hpad_ref[ky:ky + th, c0 + kx:c0 + kx + wo, :] for kx in range(3)],
            axis=-1)                                          # (TH, Wo, 3*Cout) bf16
        acc2 = acc2 + jnp.dot(slab.reshape(m, 3 * cout), w2_ref[ky],
                              preferred_element_type=f32)
    y2 = acc2 + b2_ref[...]                                   # (M, Cout) f32

    # ---- identity / downsample path (center tap of the input window) ---------
    xc = x_win(1, 1, th, row0 + 1)
    if has_downsample:
        ident = jnp.dot(xc.reshape(m, cin), wd_ref[...],
                        preferred_element_type=f32) + bd_ref[...]
    else:
        ident = xc.reshape(m, cout).astype(f32)

    out = jnp.maximum(y2 + ident, 0.0)                        # (M, Cout) f32
    o_ref[0] = out.astype(o_ref.dtype)                        # NHWC, bf16, no transpose


def basic_block_forward(x_nchw, params, stride=1):
    """Fused BasicBlock forward. x_nchw: (N, Cin, H, W) f32 -> (N, Cout, Ho, Wo) f32."""
    eps = 1e-5
    w1 = params["w_conv1"]                         # (Cout, Cin, 3, 3)
    w2 = params["w_conv2"]                         # (Cout, Cout, 3, 3)
    cout, cin = int(w1.shape[0]), int(w1.shape[1])
    has_ds = "w_down" in params

    # Fold BN (inference running stats) into conv weights + per-channel f32 bias.
    s1 = params["gamma1"] * lax.rsqrt(params["var1"] + eps)
    b1 = params["beta1"] - params["mean1"] * s1
    s2 = params["gamma2"] * lax.rsqrt(params["var2"] + eps)
    b2 = params["beta2"] - params["mean2"] * s2

    w1m = jnp.transpose(w1 * s1[:, None, None, None], (2, 3, 1, 0))
    w1m = w1m.reshape(3, 3 * cin, cout).astype(jnp.bfloat16)   # (ky, kx*Cin, Cout)
    w2m = jnp.transpose(w2 * s2[:, None, None, None], (2, 3, 1, 0))
    w2m = w2m.reshape(3, 3 * cout, cout).astype(jnp.bfloat16)
    b1r = b1.reshape(1, cout).astype(jnp.float32)
    b2r = b2.reshape(1, cout).astype(jnp.float32)

    if has_ds:
        sd = params["gamma_d"] * lax.rsqrt(params["var_d"] + eps)
        bd = params["beta_d"] - params["mean_d"] * sd
        wdm = (params["w_down"][:, :, 0, 0] * sd[:, None]).T.astype(jnp.bfloat16)
        bdr = bd.reshape(1, cout).astype(jnp.float32)

    # NCHW -> NHWC, pad by 1 (conv halo), split the stride phases along H and W
    # so all in-kernel window reads are contiguous, then add one extra zero row
    # top/bottom (input halo for the recomputed conv2 boundary rows).
    x = jnp.transpose(x_nchw, (0, 2, 3, 1)).astype(jnp.float32)
    n, h, w, _ = x.shape
    ho = (h - 1) // stride + 1
    wo = (w - 1) // stride + 1
    xpad = jnp.pad(x, ((0, 0), (1, 1), (1, 1), (0, 0)))
    hp = ho + 2 // stride
    wp = wo + 2 // stride
    phases = []
    for py in range(stride):
        for px in range(stride):
            ph = xpad[:, py::stride, px::stride, :][:, :hp, :wp, :]
            ph = jnp.pad(ph, ((0, 0), (0, hp - ph.shape[1]),
                              (0, wp - ph.shape[2]), (0, 0)))
            phases.append(ph)
    x_ph = jnp.stack(phases, axis=1)                                  # (N, s*s, hp, wp, Cin)
    x_ph = jnp.pad(x_ph, ((0, 0), (0, 0), (1, 1), (0, 0), (0, 0)))
    x_ph = x_ph.astype(jnp.bfloat16)

    th = _pick_row_tile(ho, wo)
    n_row_tiles = ho // th
    rstrip = ((_LPAD + wo) // 8) * 8        # 8-aligned strip containing the right halo col
    wpad = rstrip + 8

    kernel = functools.partial(
        _basic_block_kernel, stride=stride, th=th, wo=wo,
        n_row_tiles=n_row_tiles, rstrip=rstrip, has_downsample=has_ds)

    operands = [x_ph, w1m, b1r, w2m, b2r]
    in_specs = [
        # Whole (padded, phase-split) image per batch index; the block index is
        # constant across the row-tile axis so it is DMA'd once per image.
        pl.BlockSpec((1, stride * stride, hp + 2, wp, cin),
                     lambda nn, rr: (nn, 0, 0, 0, 0)),
        pl.BlockSpec((3, 3 * cin, cout), lambda nn, rr: (0, 0, 0)),
        pl.BlockSpec((1, cout), lambda nn, rr: (0, 0)),
        pl.BlockSpec((3, 3 * cout, cout), lambda nn, rr: (0, 0, 0)),
        pl.BlockSpec((1, cout), lambda nn, rr: (0, 0)),
    ]
    if has_ds:
        operands += [wdm, bdr]
        in_specs += [pl.BlockSpec((cin, cout), lambda nn, rr: (0, 0)),
                     pl.BlockSpec((1, cout), lambda nn, rr: (0, 0))]

    flops = 2 * n * ho * wo * cout * (9 * cin + 9 * cout + (cin if has_ds else 0))
    bytes_accessed = int(x_ph.size * 2 + w1m.size * 2 + w2m.size * 2
                         + (wdm.size * 2 if has_ds else 0)
                         + n * ho * wo * cout * 2 + 16 * cout)

    out_nhwc = pl.pallas_call(
        kernel,
        out_shape=jax.ShapeDtypeStruct((n, ho * wo, cout), jnp.bfloat16),
        grid_spec=pltpu.PrefetchScalarGridSpec(
            num_scalar_prefetch=0,
            grid=(n, n_row_tiles),
            in_specs=in_specs,
            out_specs=pl.BlockSpec((1, th * wo, cout), lambda nn, rr: (nn, rr, 0)),
            scratch_shapes=[pltpu.VMEM((th + 2, wpad, cout), jnp.bfloat16)],
        ),
        compiler_params=pltpu.CompilerParams(
            dimension_semantics=("parallel", "parallel"),
            vmem_limit_bytes=32 * 1024 * 1024),
        cost_estimate=pl.CostEstimate(flops=flops, transcendentals=0,
                                      bytes_accessed=bytes_accessed),
    )(*operands)

    out = out_nhwc.reshape(n, ho, wo, cout)
    return jnp.transpose(out, (0, 3, 1, 2)).astype(jnp.float32)   # module API is NCHW


def _reference_forward(x, params, stride=1):
    """Pure-JAX f32 reference with the module's exact (inference) semantics."""
    eps = 1e-5

    def bn(h, g, b, m, v):
        s = g / jnp.sqrt(v + eps)
        return h * s[None, :, None, None] + (b - m * s)[None, :, None, None]

    dn = ("NCHW", "OIHW", "NCHW")
    h = lax.conv_general_dilated(x, params["w_conv1"], (stride, stride),
                                 ((1, 1), (1, 1)), dimension_numbers=dn)
    h = jnp.maximum(bn(h, params["gamma1"], params["beta1"],
                       params["mean1"], params["var1"]), 0.0)
    h = lax.conv_general_dilated(h, params["w_conv2"], (1, 1),
                                 ((1, 1), (1, 1)), dimension_numbers=dn)
    h = bn(h, params["gamma2"], params["beta2"], params["mean2"], params["var2"])
    if "w_down" in params:
        idn = lax.conv_general_dilated(x, params["w_down"], (stride, stride),
                                       "VALID", dimension_numbers=dn)
        idn = bn(idn, params["gamma_d"], params["beta_d"],
                 params["mean_d"], params["var_d"])
    else:
        idn = x
    return jnp.maximum(h + idn, 0.0)


def make_params(in_channels, out_channels, stride, key):
    ks = jax.random.split(key, 16)
    p = {
        "w_conv1": jax.random.normal(ks[0], (out_channels, in_channels, 3, 3),
                                     jnp.float32) * 0.1,
        "gamma1": jax.random.uniform(ks[1], (out_channels,), jnp.float32, 0.5, 1.5),
        "beta1": jax.random.normal(ks[2], (out_channels,), jnp.float32) * 0.1,
        "mean1": jax.random.normal(ks[3], (out_channels,), jnp.float32) * 0.1,
        "var1": jax.random.uniform(ks[4], (out_channels,), jnp.float32, 0.5, 1.5),
        "w_conv2": jax.random.normal(ks[5], (out_channels, out_channels, 3, 3),
                                     jnp.float32) * 0.1,
        "gamma2": jax.random.uniform(ks[6], (out_channels,), jnp.float32, 0.5, 1.5),
        "beta2": jax.random.normal(ks[7], (out_channels,), jnp.float32) * 0.1,
        "mean2": jax.random.normal(ks[8], (out_channels,), jnp.float32) * 0.1,
        "var2": jax.random.uniform(ks[9], (out_channels,), jnp.float32, 0.5, 1.5),
    }
    if stride != 1 or in_channels != out_channels:
        p["w_down"] = jax.random.normal(ks[10], (out_channels, in_channels, 1, 1),
                                        jnp.float32) * 0.1
        p["gamma_d"] = jax.random.uniform(ks[11], (out_channels,), jnp.float32, 0.5, 1.5)
        p["beta_d"] = jax.random.normal(ks[12], (out_channels,), jnp.float32) * 0.1
        p["mean_d"] = jax.random.normal(ks[13], (out_channels,), jnp.float32) * 0.1
        p["var_d"] = jax.random.uniform(ks[14], (out_channels,), jnp.float32, 0.5, 1.5)
    return p


if __name__ == "__main__":
    key = jax.random.PRNGKey(0)
    k1, k2, k3, k4, k5, k6 = jax.random.split(key, 6)

    # Case A: channel-changing block -> downsample (1x1 conv + BN) on the skip.
    N, Cin, Cout, H, W = 2, 4, 8, 16, 16
    x = jax.random.normal(k1, (N, Cin, H, W), jnp.float32)
    params = make_params(Cin, Cout, 1, k2)
    out = jax.block_until_ready(basic_block_forward(x, params, stride=1))
    ref = jax.block_until_ready(_reference_forward(x, params, stride=1))
    assert out.shape == (N, Cout, H, W), out.shape
    np.testing.assert_allclose(np.asarray(out), np.asarray(ref),
                               rtol=5e-2, atol=5e-2)

    # Case B: identity skip (in_channels == out_channels, stride=1).
    x2 = jax.random.normal(k3, (N, Cout, H, W), jnp.float32)
    params2 = make_params(Cout, Cout, 1, k4)
    out2 = jax.block_until_ready(basic_block_forward(x2, params2, stride=1))
    ref2 = jax.block_until_ready(_reference_forward(x2, params2, stride=1))
    np.testing.assert_allclose(np.asarray(out2), np.asarray(ref2),
                               rtol=5e-2, atol=5e-2)

    # Case C: stage-transition block (stride=2 + downsample).
    x3 = jax.random.normal(k5, (N, Cin, H, W), jnp.float32)
    params3 = make_params(Cin, Cout, 2, k6)
    out3 = jax.block_until_ready(basic_block_forward(x3, params3, stride=2))
    ref3 = jax.block_until_ready(_reference_forward(x3, params3, stride=2))
    assert out3.shape == (N, Cout, H // 2, W // 2), out3.shape
    np.testing.assert_allclose(np.asarray(out3), np.asarray(ref3),
                               rtol=5e-2, atol=5e-2)

    print("KERNEL_OK")
</pallas_src>

<mosaic_0001>
module attributes {stable_mosaic.version = 11 : i64} {
  func.func @_basic_block_kernel(%arg0: i32, %arg1: i32, %arg2: memref<1x1x20x18x4xbf16, #tpu.memory_space<vmem>>, %arg3: memref<3x12x8xbf16, #tpu.memory_space<vmem>>, %arg4: memref<1x8xf32, #tpu.memory_space<vmem>>, %arg5: memref<3x24x8xbf16, #tpu.memory_space<vmem>>, %arg6: memref<1x8xf32, #tpu.memory_space<vmem>>, %arg7: memref<4x8xbf16, #tpu.memory_space<vmem>>, %arg8: memref<1x8xf32, #tpu.memory_space<vmem>>, %arg9: memref<1x128x8xbf16, #tpu.memory_space<vmem>>, %arg10: memref<10x32x8xbf16, #tpu.memory_space<vmem>>) attributes {dimension_semantics = [#tpu.dimension_semantics<parallel>, #tpu.dimension_semantics<parallel>], iteration_bounds = array<i64: 2, 2>, scalar_prefetch = 0 : i64, scratch_operands = 1 : i64, tpu.core_type = #tpu.core_type<tc>, window_params = [{transform_indices = @transform_0, window_bounds = array<i64: 1, 1, 20, 18, 4>}, {pipeline_mode = #tpu.pipeline_mode<synchronous>, transform_indices = @transform_1, window_bounds = array<i64: 3, 12, 8>}, {pipeline_mode = #tpu.pipeline_mode<synchronous>, transform_indices = @transform_2, window_bounds = array<i64: 1, 8>}, {pipeline_mode = #tpu.pipeline_mode<synchronous>, transform_indices = @transform_3, window_bounds = array<i64: 3, 24, 8>}, {pipeline_mode = #tpu.pipeline_mode<synchronous>, transform_indices = @transform_4, window_bounds = array<i64: 1, 8>}, {pipeline_mode = #tpu.pipeline_mode<synchronous>, transform_indices = @transform_5, window_bounds = array<i64: 4, 8>}, {pipeline_mode = #tpu.pipeline_mode<synchronous>, transform_indices = @transform_6, window_bounds = array<i64: 1, 8>}, {transform_indices = @transform_7, window_bounds = array<i64: 1, 128, 8>}]} {
    %c8_i32 = arith.constant 8 : i32
    %0 = arith.muli %arg1, %c8_i32 : i32
    %cst = arith.constant 0.000000e+00 : f32
    %1 = vector.broadcast %cst : f32 to vector<160x8xf32>
    %c0_i32 = arith.constant 0 : i32
    %2 = arith.addi %0, %c0_i32 : i32
    %c0 = arith.constant 0 : index
    %c0_0 = arith.constant 0 : index
    %3 = arith.index_cast %2 : i32 to index
    %c0_1 = arith.constant 0 : index
    %c0_2 = arith.constant 0 : index
    %4 = vector.load %arg2[%c0, %c0_0, %3, %c0_1, %c0_2] : memref<1x1x20x18x4xbf16, #tpu.memory_space<vmem>>, vector<1x1x10x16x4xbf16>
    %5 = vector.shape_cast %4 : vector<1x1x10x16x4xbf16> to vector<10x16x4xbf16>
    %c0_i32_3 = arith.constant 0 : i32
    %6 = arith.addi %0, %c0_i32_3 : i32
    %c0_4 = arith.constant 0 : index
    %c0_5 = arith.constant 0 : index
    %7 = arith.index_cast %6 : i32 to index
    %c1 = arith.constant 1 : index
    %c0_6 = arith.constant 0 : index
    %8 = vector.load %arg2[%c0_4, %c0_5, %7, %c1, %c0_6] : memref<1x1x20x18x4xbf16, #tpu.memory_space<vmem>>, vector<1x1x10x16x4xbf16>
    %9 = vector.shape_cast %8 : vector<1x1x10x16x4xbf16> to vector<10x16x4xbf16>
    %c0_i32_7 = arith.constant 0 : i32
    %10 = arith.addi %0, %c0_i32_7 : i32
    %c0_8 = arith.constant 0 : index
    %c0_9 = arith.constant 0 : index
    %11 = arith.index_cast %10 : i32 to index
    %c2 = arith.constant 2 : index
    %c0_10 = arith.constant 0 : index
    %12 = vector.load %arg2[%c0_8, %c0_9, %11, %c2, %c0_10] : memref<1x1x20x18x4xbf16, #tpu.memory_space<vmem>>, vector<1x1x10x16x4xbf16>
    %13 = vector.shape_cast %12 : vector<1x1x10x16x4xbf16> to vector<10x16x4xbf16>
    %14 = tpu.concatenate %5, %9, %13 in 2 : vector<10x16x4xbf16>, vector<10x16x4xbf16>, vector<10x16x4xbf16> -> vector<10x16x12xbf16>
    %15 = vector.shape_cast %14 : vector<10x16x12xbf16> to vector<160x12xbf16>
    %c0_11 = arith.constant 0 : index
    %c0_12 = arith.constant 0 : index
    %c0_13 = arith.constant 0 : index
    %16 = vector.load %arg3[%c0_11, %c0_12, %c0_13] : memref<3x12x8xbf16, #tpu.memory_space<vmem>>, vector<1x12x8xbf16>
    %17 = vector.shape_cast %16 : vector<1x12x8xbf16> to vector<12x8xbf16>
    %cst_14 = arith.constant dense<0.000000e+00> : vector<160x8xf32>
    %18 = tpu.matmul %15, %17, %cst_14 {dimension_numbers = #tpu.dot_dimension_numbers<[1], [0], [0], [1], [0, 0, 1, 1], [], []>} : vector<160x12xbf16>, vector<12x8xbf16>, vector<160x8xf32> -> vector<160x8xf32>
    %19 = arith.addf %1, %18 : vector<160x8xf32>
    %c1_i32 = arith.constant 1 : i32
    %20 = arith.addi %0, %c1_i32 : i32
    %c0_15 = arith.constant 0 : index
    %c0_16 = arith.constant 0 : index
    %21 = arith.index_cast %20 : i32 to index
    %c0_17 = arith.constant 0 : index
    %c0_18 = arith.constant 0 : index
    %22 = vector.load %arg2[%c0_15, %c0_16, %21, %c0_17, %c0_18] : memref<1x1x20x18x4xbf16, #tpu.memory_space<vmem>>, vector<1x1x10x16x4xbf16>
    %23 = vector.shape_cast %22 : vector<1x1x10x16x4xbf16> to vector<10x16x4xbf16>
    %c1_i32_19 = arith.constant 1 : i32
    %24 = arith.addi %0, %c1_i32_19 : i32
    %c0_20 = arith.constant 0 : index
    %c0_21 = arith.constant 0 : index
    %25 = arith.index_cast %24 : i32 to index
    %c1_22 = arith.constant 1 : index
    %c0_23 = arith.constant 0 : index
    %26 = vector.load %arg2[%c0_20, %c0_21, %25, %c1_22, %c0_23] : memref<1x1x20x18x4xbf16, #tpu.memory_space<vmem>>, vector<1x1x10x16x4xbf16>
    %27 = vector.shape_cast %26 : vector<1x1x10x16x4xbf16> to vector<10x16x4xbf16>
    %c1_i32_24 = arith.constant 1 : i32
    %28 = arith.addi %0, %c1_i32_24 : i32
    %c0_25 = arith.constant 0 : index
    %c0_26 = arith.constant 0 : index
    %29 = arith.index_cast %28 : i32 to index
    %c2_27 = arith.constant 2 : index
    %c0_28 = arith.constant 0 : index
    %30 = vector.load %arg2[%c0_25, %c0_26, %29, %c2_27, %c0_28] : memref<1x1x20x18x4xbf16, #tpu.memory_space<vmem>>, vector<1x1x10x16x4xbf16>
    %31 = vector.shape_cast %30 : vector<1x1x10x16x4xbf16> to vector<10x16x4xbf16>
    %32 = tpu.concatenate %23, %27, %31 in 2 : vector<10x16x4xbf16>, vector<10x16x4xbf16>, vector<10x16x4xbf16> -> vector<10x16x12xbf16>
    %33 = vector.shape_cast %32 : vector<10x16x12xbf16> to vector<160x12xbf16>
    %c1_29 = arith.constant 1 : index
    %c0_30 = arith.constant 0 : index
    %c0_31 = arith.constant 0 : index
    %34 = vector.load %arg3[%c1_29, %c0_30, %c0_31] : memref<3x12x8xbf16, #tpu.memory_space<vmem>>, vector<1x12x8xbf16>
    %35 = vector.shape_cast %34 : vector<1x12x8xbf16> to vector<12x8xbf16>
    %cst_32 = arith.constant dense<0.000000e+00> : vector<160x8xf32>
    %36 = tpu.matmul %33, %35, %cst_32 {dimension_numbers = #tpu.dot_dimension_numbers<[1], [0], [0], [1], [0, 0, 1, 1], [], []>} : vector<160x12xbf16>, vector<12x8xbf16>, vector<160x8xf32> -> vector<160x8xf32>
    %37 = arith.addf %19, %36 : vector<160x8xf32>
    %c2_i32 = arith.constant 2 : i32
    %38 = arith.addi %0, %c2_i32 : i32
    %c0_33 = arith.constant 0 : index
    %c0_34 = arith.constant 0 : index
    %39 = arith.index_cast %38 : i32 to index
    %c0_35 = arith.constant 0 : index
    %c0_36 = arith.constant 0 : index
    %40 = vector.load %arg2[%c0_33, %c0_34, %39, %c0_35, %c0_36] : memref<1x1x20x18x4xbf16, #tpu.memory_space<vmem>>, vector<1x1x10x16x4xbf16>
    %41 = vector.shape_cast %40 : vector<1x1x10x16x4xbf16> to vector<10x16x4xbf16>
    %c2_i32_37 = arith.constant 2 : i32
    %42 = arith.addi %0, %c2_i32_37 : i32
    %c0_38 = arith.constant 0 : index
    %c0_39 = arith.constant 0 : index
    %43 = arith.index_cast %42 : i32 to index
    %c1_40 = arith.constant 1 : index
    %c0_41 = arith.constant 0 : index
    %44 = vector.load %arg2[%c0_38, %c0_39, %43, %c1_40, %c0_41] : memref<1x1x20x18x4xbf16, #tpu.memory_space<vmem>>, vector<1x1x10x16x4xbf16>
    %45 = vector.shape_cast %44 : vector<1x1x10x16x4xbf16> to vector<10x16x4xbf16>
    %c2_i32_42 = arith.constant 2 : i32
    %46 = arith.addi %0, %c2_i32_42 : i32
    %c0_43 = arith.constant 0 : index
    %c0_44 = arith.constant 0 : index
    %47 = arith.index_cast %46 : i32 to index
    %c2_45 = arith.constant 2 : index
    %c0_46 = arith.constant 0 : index
    %48 = vector.load %arg2[%c0_43, %c0_44, %47, %c2_45, %c0_46] : memref<1x1x20x18x4xbf16, #tpu.memory_space<vmem>>, vector<1x1x10x16x4xbf16>
    %49 = vector.shape_cast %48 : vector<1x1x10x16x4xbf16> to vector<10x16x4xbf16>
    %50 = tpu.concatenate %41, %45, %49 in 2 : vector<10x16x4xbf16>, vector<10x16x4xbf16>, vector<10x16x4xbf16> -> vector<10x16x12xbf16>
    %51 = vector.shape_cast %50 : vector<10x16x12xbf16> to vector<160x12xbf16>
    %c2_47 = arith.constant 2 : index
    %c0_48 = arith.constant 0 : index
    %c0_49 = arith.constant 0 : index
    %52 = vector.load %arg3[%c2_47, %c0_48, %c0_49] : memref<3x12x8xbf16, #tpu.memory_space<vmem>>, vector<1x12x8xbf16>
    %53 = vector.shape_cast %52 : vector<1x12x8xbf16> to vector<12x8xbf16>
    %cst_50 = arith.constant dense<0.000000e+00> : vector<160x8xf32>
    %54 = tpu.matmul %51, %53, %cst_50 {dimension_numbers = #tpu.dot_dimension_numbers<[1], [0], [0], [1], [0, 0, 1, 1], [], []>} : vector<160x12xbf16>, vector<12x8xbf16>, vector<160x8xf32> -> vector<160x8xf32>
    %55 = arith.addf %37, %54 : vector<160x8xf32>
    %c0_51 = arith.constant 0 : index
    %c0_52 = arith.constant 0 : index
    %56 = vector.load %arg4[%c0_51, %c0_52] : memref<1x8xf32, #tpu.memory_space<vmem>>, vector<1x8xf32>
    %57 = vector.broadcast %56 : vector<1x8xf32> to vector<160x8xf32>
    %58 = arith.addf %55, %57 : vector<160x8xf32>
    %cst_53 = arith.constant 0.000000e+00 : f32
    %59 = vector.broadcast %cst_53 : f32 to vector<160x8xf32>
    %60 = arith.maximumf %58, %59 : vector<160x8xf32>
    %61 = arith.truncf %60 : vector<160x8xf32> to vector<160x8xbf16>
    %cst_54 = arith.constant 0.000000e+00 : bf16
    %62 = vector.broadcast %cst_54 : bf16 to vector<10x8x8xbf16>
    %c0_55 = arith.constant 0 : index
    %c0_56 = arith.constant 0 : index
    %c0_57 = arith.constant 0 : index
    %63 = vector.load %arg10[%c0_55, %c0_56, %c0_57] : memref<10x32x8xbf16, #tpu.memory_space<vmem>>, vector<10x8x8xbf16>
    tpu.vector_store %arg10[%c0_55, %c0_56, %c0_57], %62 {strides = array<i32>} : memref<10x32x8xbf16, #tpu.memory_space<vmem>>, vector<10x8x8xbf16>,
    %cst_58 = arith.constant 0.000000e+00 : bf16
    %64 = vector.broadcast %cst_58 : bf16 to vector<10x8x8xbf16>
    %c0_59 = arith.constant 0 : index
    %c24 = arith.constant 24 : index
    %c0_60 = arith.constant 0 : index
    %65 = vector.load %arg10[%c0_59, %c24, %c0_60] : memref<10x32x8xbf16, #tpu.memory_space<vmem>>, vector<10x8x8xbf16>
    tpu.vector_store %arg10[%c0_59, %c24, %c0_60], %64 {strides = array<i32>} : memref<10x32x8xbf16, #tpu.memory_space<vmem>>, vector<10x8x8xbf16>,
    %66 = vector.shape_cast %61 : vector<160x8xbf16> to vector<10x16x8xbf16>
    %c0_61 = arith.constant 0 : index
    %c8 = arith.constant 8 : index
    %c0_62 = arith.constant 0 : index
    %67 = vector.load %arg10[%c0_61, %c8, %c0_62] : memref<10x32x8xbf16, #tpu.memory_space<vmem>>, vector<10x16x8xbf16>
    tpu.vector_store %arg10[%c0_61, %c8, %c0_62], %66 {strides = array<i32>} : memref<10x32x8xbf16, #tpu.memory_space<vmem>>, vector<10x16x8xbf16>,
    %c0_i32_63 = arith.constant 0 : i32
    %68 = arith.cmpi eq, %arg1, %c0_i32_63 : i32
    %69 = arith.extui %68 : i1 to i32
    %c0_i32_64 = arith.constant 0 : i32
    %70 = arith.cmpi ne, %69, %c0_i32_64 : i32
    scf.if %70 {
      %cst_122 = arith.constant 0.000000e+00 : bf16
      %123 = vector.broadcast %cst_122 : bf16 to vector<1x32x8xbf16>
      %c0_123 = arith.constant 0 : index
      %c0_124 = arith.constant 0 : index
      %c0_125 = arith.constant 0 : index
      %124 = vector.load %arg10[%c0_123, %c0_124, %c0_125] : memref<10x32x8xbf16, #tpu.memory_space<vmem>>, vector<1x32x8xbf16>
      tpu.vector_store %arg10[%c0_123, %c0_124, %c0_125], %123 {strides = array<i32>} : memref<10x32x8xbf16, #tpu.memory_space<vmem>>, vector<1x32x8xbf16>,
    } else {
    }
    %c1_i32_65 = arith.constant 1 : i32
    %71 = arith.cmpi eq, %arg1, %c1_i32_65 : i32
    %72 = arith.extui %71 : i1 to i32
    %c0_i32_66 = arith.constant 0 : i32
    %73 = arith.cmpi ne, %72, %c0_i32_66 : i32
    scf.if %73 {
      %cst_122 = arith.constant 0.000000e+00 : bf16
      %123 = vector.broadcast %cst_122 : bf16 to vector<1x32x8xbf16>
      %c9_123 = arith.constant 9 : index
      %c0_124 = arith.constant 0 : index
      %c0_125 = arith.constant 0 : index
      %124 = vector.load %arg10[%c9_123, %c0_124, %c0_125] : memref<10x32x8xbf16, #tpu.memory_space<vmem>>, vector<1x32x8xbf16>
      tpu.vector_store %arg10[%c9_123, %c0_124, %c0_125], %123 {strides = array<i32>} : memref<10x32x8xbf16, #tpu.memory_space<vmem>>, vector<1x32x8xbf16>,
    } else {
    }
    %cst_67 = arith.constant 0.000000e+00 : f32
    %74 = vector.broadcast %cst_67 : f32 to vector<128x8xf32>
    %c0_68 = arith.constant 0 : index
    %c7 = arith.constant 7 : index
    %c0_69 = arith.constant 0 : index
    %75 = vector.load %arg10[%c0_68, %c7, %c0_69] : memref<10x32x8xbf16, #tpu.memory_space<vmem>>, vector<8x16x8xbf16>
    %c0_70 = arith.constant 0 : index
    %c8_71 = arith.constant 8 : index
    %c0_72 = arith.constant 0 : index
    %76 = vector.load %arg10[%c0_70, %c8_71, %c0_72] : memref<10x32x8xbf16, #tpu.memory_space<vmem>>, vector<8x16x8xbf16>
    %c0_73 = arith.constant 0 : index
    %c9 = arith.constant 9 : index
    %c0_74 = arith.constant 0 : index
    %77 = vector.load %arg10[%c0_73, %c9, %c0_74] : memref<10x32x8xbf16, #tpu.memory_space<vmem>>, vector<8x16x8xbf16>
    %78 = tpu.concatenate %75, %76, %77 in 2 : vector<8x16x8xbf16>, vector<8x16x8xbf16>, vector<8x16x8xbf16> -> vector<8x16x24xbf16>
    %79 = vector.shape_cast %78 : vector<8x16x24xbf16> to vector<128x24xbf16>
    %c0_75 = arith.constant 0 : index
    %c0_76 = arith.constant 0 : index
    %c0_77 = arith.constant 0 : index
    %80 = vector.load %arg5[%c0_75, %c0_76, %c0_77] : memref<3x24x8xbf16, #tpu.memory_space<vmem>>, vector<1x24x8xbf16>
    %81 = vector.shape_cast %80 : vector<1x24x8xbf16> to vector<24x8xbf16>
    %cst_78 = arith.constant dense<0.000000e+00> : vector<128x8xf32>
    %82 = tpu.matmul %79, %81, %cst_78 {dimension_numbers = #tpu.dot_dimension_numbers<[1], [0], [0], [1], [0, 0, 1, 1], [], []>} : vector<128x24xbf16>, vector<24x8xbf16>, vector<128x8xf32> -> vector<128x8xf32>
    %83 = arith.addf %74, %82 : vector<128x8xf32>
    %c1_79 = arith.constant 1 : index
    %c7_80 = arith.constant 7 : index
    %c0_81 = arith.constant 0 : index
    %84 = vector.load %arg10[%c1_79, %c7_80, %c0_81] : memref<10x32x8xbf16, #tpu.memory_space<vmem>>, vector<8x16x8xbf16>
    %c1_82 = arith.constant 1 : index
    %c8_83 = arith.constant 8 : index
    %c0_84 = arith.constant 0 : index
    %85 = vector.load %arg10[%c1_82, %c8_83, %c0_84] : memref<10x32x8xbf16, #tpu.memory_space<vmem>>, vector<8x16x8xbf16>
    %c1_85 = arith.constant 1 : index
    %c9_86 = arith.constant 9 : index
    %c0_87 = arith.constant 0 : index
    %86 = vector.load %arg10[%c1_85, %c9_86, %c0_87] : memref<10x32x8xbf16, #tpu.memory_space<vmem>>, vector<8x16x8xbf16>
    %87 = tpu.concatenate %84, %85, %86 in 2 : vector<8x16x8xbf16>, vector<8x16x8xbf16>, vector<8x16x8xbf16> -> vector<8x16x24xbf16>
    %88 = vector.shape_cast %87 : vector<8x16x24xbf16> to vector<128x24xbf16>
    %c1_88 = arith.constant 1 : index
    %c0_89 = arith.constant 0 : index
    %c0_90 = arith.constant 0 : index
    %89 = vector.load %arg5[%c1_88, %c0_89, %c0_90] : memref<3x24x8xbf16, #tpu.memory_space<vmem>>, vector<1x24x8xbf16>
    %90 = vector.shape_cast %89 : vector<1x24x8xbf16> to vector<24x8xbf16>
    %cst_91 = arith.constant dense<0.000000e+00> : vector<128x8xf32>
    %91 = tpu.matmul %88, %90, %cst_91 {dimension_numbers = #tpu.dot_dimension_numbers<[1], [0], [0], [1], [0, 0, 1, 1], [], []>} : vector<128x24xbf16>, vector<24x8xbf16>, vector<128x8xf32> -> vector<128x8xf32>
    %92 = arith.addf %83, %91 : vector<128x8xf32>
    %c2_92 = arith.constant 2 : index
    %c7_93 = arith.constant 7 : index
    %c0_94 = arith.constant 0 : index
    %93 = vector.load %arg10[%c2_92, %c7_93, %c0_94] : memref<10x32x8xbf16, #tpu.memory_space<vmem>>, vector<8x16x8xbf16>
    %c2_95 = arith.constant 2 : index
    %c8_96 = arith.constant 8 : index
    %c0_97 = arith.constant 0 : index
    %94 = vector.load %arg10[%c2_95, %c8_96, %c0_97] : memref<10x32x8xbf16, #tpu.memory_space<vmem>>, vector<8x16x8xbf16>
    %c2_98 = arith.constant 2 : index
    %c9_99 = arith.constant 9 : index
    %c0_100 = arith.constant 0 : index
    %95 = vector.load %arg10[%c2_98, %c9_99, %c0_100] : memref<10x32x8xbf16, #tpu.memory_space<vmem>>, vector<8x16x8xbf16>
    %96 = tpu.concatenate %93, %94, %95 in 2 : vector<8x16x8xbf16>, vector<8x16x8xbf16>, vector<8x16x8xbf16> -> vector<8x16x24xbf16>
    %97 = vector.shape_cast %96 : vector<8x16x24xbf16> to vector<128x24xbf16>
    %c2_101 = arith.constant 2 : index
    %c0_102 = arith.constant 0 : index
    %c0_103 = arith.constant 0 : index
    %98 = vector.load %arg5[%c2_101, %c0_102, %c0_103] : memref<3x24x8xbf16, #tpu.memory_space<vmem>>, vector<1x24x8xbf16>
    %99 = vector.shape_cast %98 : vector<1x24x8xbf16> to vector<24x8xbf16>
    %cst_104 = arith.constant dense<0.000000e+00> : vector<128x8xf32>
    %100 = tpu.matmul %97, %99, %cst_104 {dimension_numbers = #tpu.dot_dimension_numbers<[1], [0], [0], [1], [0, 0, 1, 1], [], []>} : vector<128x24xbf16>, vector<24x8xbf16>, vector<128x8xf32> -> vector<128x8xf32>
    %101 = arith.addf %92, %100 : vector<128x8xf32>
    %c0_105 = arith.constant 0 : index
    %c0_106 = arith.constant 0 : index
    %102 = vector.load %arg6[%c0_105, %c0_106] : memref<1x8xf32, #tpu.memory_space<vmem>>, vector<1x8xf32>
    %103 = vector.broadcast %102 : vector<1x8xf32> to vector<128x8xf32>
    %104 = arith.addf %101, %103 : vector<128x8xf32>
    %c1_i32_107 = arith.constant 1 : i32
    %105 = arith.addi %0, %c1_i32_107 : i32
    %c1_i32_108 = arith.constant 1 : i32
    %106 = arith.addi %105, %c1_i32_108 : i32
    %c0_109 = arith.constant 0 : index
    %c0_110 = arith.constant 0 : index
    %107 = arith.index_cast %106 : i32 to index
    %c1_111 = arith.constant 1 : index
    %c0_112 = arith.constant 0 : index
    %108 = vector.load %arg2[%c0_109, %c0_110, %107, %c1_111, %c0_112] : memref<1x1x20x18x4xbf16, #tpu.memory_space<vmem>>, vector<1x1x8x16x4xbf16>
    %109 = vector.shape_cast %108 : vector<1x1x8x16x4xbf16> to vector<8x16x4xbf16>
    %110 = vector.shape_cast %109 : vector<8x16x4xbf16> to vector<128x4xbf16>
    %c0_113 = arith.constant 0 : index
    %c0_114 = arith.constant 0 : index
    %111 = vector.load %arg7[%c0_113, %c0_114] : memref<4x8xbf16, #tpu.memory_space<vmem>>, vector<4x8xbf16>
    %cst_115 = arith.constant dense<0.000000e+00> : vector<128x8xf32>
    %112 = tpu.matmul %110, %111, %cst_115 {dimension_numbers = #tpu.dot_dimension_numbers<[1], [0], [0], [1], [0, 0, 1, 1], [], []>} : vector<128x4xbf16>, vector<4x8xbf16>, vector<128x8xf32> -> vector<128x8xf32>
    %c0_116 = arith.constant 0 : index
    %c0_117 = arith.constant 0 : index
    %113 = vector.load %arg8[%c0_116, %c0_117] : memref<1x8xf32, #tpu.memory_space<vmem>>, vector<1x8xf32>
    %114 = vector.broadcast %113 : vector<1x8xf32> to vector<128x8xf32>
    %115 = arith.addf %112, %114 : vector<128x8xf32>
    %116 = arith.addf %104, %115 : vector<128x8xf32>
    %cst_118 = arith.constant 0.000000e+00 : f32
    %117 = vector.broadcast %cst_118 : f32 to vector<128x8xf32>
    %118 = arith.maximumf %116, %117 : vector<128x8xf32>
    %119 = arith.truncf %118 : vector<128x8xf32> to vector<128x8xbf16>
    %c0_119 = arith.constant 0 : index
    %c0_120 = arith.constant 0 : index
    %c0_121 = arith.constant 0 : index
    %120 = vector.load %arg9[%c0_119, %c0_120, %c0_121] : memref<1x128x8xbf16, #tpu.memory_space<vmem>>, vector<1x128x8xbf16>
    %121 = vector.shape_cast %120 : vector<1x128x8xbf16> to vector<128x8xbf16>
    %122 = vector.shape_cast %119 : vector<128x8xbf16> to vector<1x128x8xbf16>
    tpu.vector_store %arg9[%c0_119, %c0_120, %c0_121], %122 {strides = array<i32>} : memref<1x128x8xbf16, #tpu.memory_space<vmem>>, vector<1x128x8xbf16>,
    return
  }
  func.func @transform_0(%arg0: i32, %arg1: i32) -> (i32, i32, i32, i32, i32) {
    %c0_i32 = arith.constant 0 : i32
    %c0_i32_0 = arith.constant 0 : i32
    %c0_i32_1 = arith.constant 0 : i32
    %c0_i32_2 = arith.constant 0 : i32
    %c0_i32_3 = arith.constant 0 : i32
    return %arg0, %c0_i32, %c0_i32_0, %c0_i32_1, %c0_i32_2 : i32, i32, i32, i32, i32
  }
  func.func @transform_1(%arg0: i32, %arg1: i32) -> (i32, i32, i32) {
    %c0_i32 = arith.constant 0 : i32
    %c0_i32_0 = arith.constant 0 : i32
    %c0_i32_1 = arith.constant 0 : i32
    %c0_i32_2 = arith.constant 0 : i32
    return %c0_i32, %c0_i32_0, %c0_i32_1 : i32, i32, i32
  }
  func.func @transform_2(%arg0: i32, %arg1: i32) -> (i32, i32) {
    %c0_i32 = arith.constant 0 : i32
    %c0_i32_0 = arith.constant 0 : i32
    %c0_i32_1 = arith.constant 0 : i32
    return %c0_i32, %c0_i32_0 : i32, i32
  }
  func.func @transform_3(%arg0: i32, %arg1: i32) -> (i32, i32, i32) {
    %c0_i32 = arith.constant 0 : i32
    %c0_i32_0 = arith.constant 0 : i32
    %c0_i32_1 = arith.constant 0 : i32
    %c0_i32_2 = arith.constant 0 : i32
    return %c0_i32, %c0_i32_0, %c0_i32_1 : i32, i32, i32
  }
  func.func @transform_4(%arg0: i32, %arg1: i32) -> (i32, i32) {
    %c0_i32 = arith.constant 0 : i32
    %c0_i32_0 = arith.constant 0 : i32
    %c0_i32_1 = arith.constant 0 : i32
    return %c0_i32, %c0_i32_0 : i32, i32
  }
  func.func @transform_5(%arg0: i32, %arg1: i32) -> (i32, i32) {
    %c0_i32 = arith.constant 0 : i32
    %c0_i32_0 = arith.constant 0 : i32
    %c0_i32_1 = arith.constant 0 : i32
    return %c0_i32, %c0_i32_0 : i32, i32
  }
  func.func @transform_6(%arg0: i32, %arg1: i32) -> (i32, i32) {
    %c0_i32 = arith.constant 0 : i32
    %c0_i32_0 = arith.constant 0 : i32
    %c0_i32_1 = arith.constant 0 : i32
    return %c0_i32, %c0_i32_0 : i32, i32
  }
  func.func @transform_7(%arg0: i32, %arg1: i32) -> (i32, i32, i32) {
    %c0_i32 = arith.constant 0 : i32
    %c0_i32_0 = arith.constant 0 : i32
    return %arg0, %arg1, %c0_i32 : i32, i32, i32
  }
}

</mosaic_0001>

<llo_original>
// kernel: tpu_custom_call.1
$region0: #{tpu_custom_call.1}
  #allocation0 [shape = 'u32[]', space=smem, size = 0x4, offset = 0x4, fixed_abs, tag = 'smem constant byte address 0x4 - core index']
  #allocation1 [shape = 'u32[144,128]{1,0:T(1,128)}', space=vmem, size = 0x12000, scoped, tag = 'internal scratch']
  #allocation2 [shape = 'bf16[10,32,8]{2,1,0:T(16,128)(2,1)}', space=vmem, size = 0x14000, scoped, tag = 'scratch operand']
  %s0 = inlined_call_operand.vmem [shape: bf16[2,1,20,18,4], index: 0, kind: input, shape index: {}]
  %s1 = inlined_call_operand.vmem [shape: bf16[3,12,8], index: 1, kind: input, shape index: {}]
  %s2 = inlined_call_operand.vmem [shape: f32[1,8], index: 2, kind: input, shape index: {}]
  %s3 = inlined_call_operand.vmem [shape: bf16[3,24,8], index: 3, kind: input, shape index: {}]
  %s4 = inlined_call_operand.vmem [shape: f32[1,8], index: 4, kind: input, shape index: {}]
  %s5 = inlined_call_operand.vmem [shape: bf16[4,8], index: 5, kind: input, shape index: {}]
  %s6 = inlined_call_operand.vmem [shape: f32[1,8], index: 6, kind: input, shape index: {}]
  %s7 = inlined_call_operand.vmem [shape: bf16[2,256,8], index: 7, kind: output, shape index: {}]
  %s8 = sld [smem:[#allocation0]]
  $region69: #{tpu_custom_call.1} parent=0
    _
  %s10 = ssub.s32 1, %s8
  %s11 = scalar_select 0, %s10, %s8
  loop: start=0, step=1, limit=6
  $region2: #{tpu_custom_call.1} parent=0 // loop_pre_header
    _
  $region3: #{tpu_custom_call.1} parent=0 // loop_header
    %s13 = sphi 0, %s17
    %p14 = scmp.ge.s32.totalorder %s13, 6
    %s20 = sphi 0, %s32
    %s21 = sphi 0, %s28
    %s22 = sphi 0, %s20
    %s23 = sphi 0, %s21
    %s24 = sphi 0, %s22
    %s25 = sphi 0, %s23
    %s35 = sphi 0, %s37
    %s38 = sphi 0, %s35
    %s39 = sphi 0, %s38
    %s55 = sphi 0, %s39
    %s59 = sphi 0, %s59
    %s61 = sphi 0, %s59
    %s62 = sphi 0, %s61
    %s76 = sphi 0, %s62
    %s80 = sphi 0, %s80
    %s82 = sphi 0, %s80
    %s83 = sphi 0, %s82
    %s97 = sphi 0, %s83
    %s101 = sphi 0, %s101
    %s103 = sphi 0, %s101
    %s104 = sphi 0, %s103
    %s118 = sphi 0, %s104
    %s122 = sphi 0, %s122
    %s124 = sphi 0, %s122
    %s125 = sphi 0, %s124
    %s139 = sphi 0, %s125
    %s143 = sphi 0, %s143
    %s145 = sphi 0, %s143
    %s146 = sphi 0, %s145
    %s160 = sphi 0, %s146
    %s164 = sphi 0, %s164
    %s166 = sphi 0, %s164
    %s167 = sphi 0, %s166
    %s181 = sphi 0, %s167
    %s189 = sphi 0, %s191
    %s192 = sphi 0, %s189
    %s193 = sphi 0, %s192
    %s209 = sphi 0, %s193
  $region4: #{tpu_custom_call.1} parent=0 // loop_header_branch
    %16 = sbr.rel (%p14) target = $region8
  $region5: #{tpu_custom_call.1} parent=0 // loop_body
    %s18 = ssub.s32 %s13, 1
    %s19 = ssub.s32 %s13, 2
    %s26 = sadd.s32 1, %s21
    %p27 = scmp.ge.s32.totalorder %s26, 2
    %s28 = scalar_select %p27, 0, %s26
    %s29 = sadd.s32 1, %s20
    %s30 = scalar_select %p27, %s29, %s20
    %p31 = scmp.ge.s32.totalorder %s30, 2
    %s32 = scalar_select %p31, 0, %s30
    %s33 = ssub.s32 %s20, %s32
    %p34 = scmp.eq.s32.totalorder %s33, 0
    %s36 = sadd.s32 %s35, 1
    %s37 = scalar_select %p34, %s35, %s36
    %p40 = pneg %p34
    %p41 = scmp.eq.s32.totalorder %s13, 3
    %p42 = por %p40, %p41
    %p43 = scmp.ne.s32.totalorder %s35, %s38
    %p44 = scmp.eq.s32.totalorder %s13, 0
    %p45 = por %p43, %p44
    %p46 = scmp.ne.s32.totalorder %s35, %s38
    %p47 = scmp.eq.s32.totalorder %s18, 3
    %p48 = por %p46, %p47
    %p49 = scmp.ne.s32.totalorder %s38, %s39
    %p50 = scmp.eq.s32.totalorder %s18, 0
    %p51 = por %p49, %p50
    %p52 = scmp.ne.s32.totalorder %s38, %s39
    %p53 = scmp.eq.s32.totalorder %s19, 3
    %p54 = por %p52, %p53
    %p56 = scmp.ne.s32.totalorder %s39, %s55
    %p57 = scmp.eq.s32.totalorder %s19, 0
    %p58 = por %p56, %p57
    %s60 = sadd.s32 %s59, 1
    %p63 = scmp.eq.s32.totalorder %s13, 3
    %p64 = scmp.ne.s32.totalorder %s59, %s61
    %p65 = scmp.eq.s32.totalorder %s13, 0
    %p66 = por %p64, %p65
    %p67 = scmp.ne.s32.totalorder %s59, %s61
    %p68 = scmp.eq.s32.totalorder %s18, 3
    %p69 = por %p67, %p68
    %p70 = scmp.ne.s32.totalorder %s61, %s62
    %p71 = scmp.eq.s32.totalorder %s18, 0
    %p72 = por %p70, %p71
    %p73 = scmp.ne.s32.totalorder %s61, %s62
    %p74 = scmp.eq.s32.totalorder %s19, 3
    %p75 = por %p73, %p74
    %p77 = scmp.ne.s32.totalorder %s62, %s76
    %p78 = scmp.eq.s32.totalorder %s19, 0
    %p79 = por %p77, %p78
    %s81 = sadd.s32 %s80, 1
    %p84 = scmp.eq.s32.totalorder %s13, 3
    %p85 = scmp.ne.s32.totalorder %s80, %s82
    %p86 = scmp.eq.s32.totalorder %s13, 0
    %p87 = por %p85, %p86
    %p88 = scmp.ne.s32.totalorder %s80, %s82
    %p89 = scmp.eq.s32.totalorder %s18, 3
    %p90 = por %p88, %p89
    %p91 = scmp.ne.s32.totalorder %s82, %s83
    %p92 = scmp.eq.s32.totalorder %s18, 0
    %p93 = por %p91, %p92
    %p94 = scmp.ne.s32.totalorder %s82, %s83
    %p95 = scmp.eq.s32.totalorder %s19, 3
    %p96 = por %p94, %p95
    %p98 = scmp.ne.s32.totalorder %s83, %s97
    %p99 = scmp.eq.s32.totalorder %s19, 0
    %p100 = por %p98, %p99
    %s102 = sadd.s32 %s101, 1
    %p105 = scmp.eq.s32.totalorder %s13, 3
    %p106 = scmp.ne.s32.totalorder %s101, %s103
    %p107 = scmp.eq.s32.totalorder %s13, 0
    %p108 = por %p106, %p107
    %p109 = scmp.ne.s32.totalorder %s101, %s103
    %p110 = scmp.eq.s32.totalorder %s18, 3
    %p111 = por %p109, %p110
    %p112 = scmp.ne.s32.totalorder %s103, %s104
    %p113 = scmp.eq.s32.totalorder %s18, 0
    %p114 = por %p112, %p113
    %p115 = scmp.ne.s32.totalorder %s103, %s104
    %p116 = scmp.eq.s32.totalorder %s19, 3
    %p117 = por %p115, %p116
    %p119 = scmp.ne.s32.totalorder %s104, %s118
    %p120 = scmp.eq.s32.totalorder %s19, 0
    %p121 = por %p119, %p120
    %s123 = sadd.s32 %s122, 1
    %p126 = scmp.eq.s32.totalorder %s13, 3
    %p127 = scmp.ne.s32.totalorder %s122, %s124
    %p128 = scmp.eq.s32.totalorder %s13, 0
    %p129 = por %p127, %p128
    %p130 = scmp.ne.s32.totalorder %s122, %s124
    %p131 = scmp.eq.s32.totalorder %s18, 3
    %p132 = por %p130, %p131
    %p133 = scmp.ne.s32.totalorder %s124, %s125
    %p134 = scmp.eq.s32.totalorder %s18, 0
    %p135 = por %p133, %p134
    %p136 = scmp.ne.s32.totalorder %s124, %s125
    %p137 = scmp.eq.s32.totalorder %s19, 3
    %p138 = por %p136, %p137
    %p140 = scmp.ne.s32.totalorder %s125, %s139
    %p141 = scmp.eq.s32.totalorder %s19, 0
    %p142 = por %p140, %p141
    %s144 = sadd.s32 %s143, 1
    %p147 = scmp.eq.s32.totalorder %s13, 3
    %p148 = scmp.ne.s32.totalorder %s143, %s145
    %p149 = scmp.eq.s32.totalorder %s13, 0
    %p150 = por %p148, %p149
    %p151 = scmp.ne.s32.totalorder %s143, %s145
    %p152 = scmp.eq.s32.totalorder %s18, 3
    %p153 = por %p151, %p152
    %p154 = scmp.ne.s32.totalorder %s145, %s146
    %p155 = scmp.eq.s32.totalorder %s18, 0
    %p156 = por %p154, %p155
    %p157 = scmp.ne.s32.totalorder %s145, %s146
    %p158 = scmp.eq.s32.totalorder %s19, 3
    %p159 = por %p157, %p158
    %p161 = scmp.ne.s32.totalorder %s146, %s160
    %p162 = scmp.eq.s32.totalorder %s19, 0
    %p163 = por %p161, %p162
    %s165 = sadd.s32 %s164, 1
    %p168 = scmp.eq.s32.totalorder %s13, 3
    %p169 = scmp.ne.s32.totalorder %s164, %s166
    %p170 = scmp.eq.s32.totalorder %s13, 0
    %p171 = por %p169, %p170
    %p172 = scmp.ne.s32.totalorder %s164, %s166
    %p173 = scmp.eq.s32.totalorder %s18, 3
    %p174 = por %p172, %p173
    %p175 = scmp.ne.s32.totalorder %s166, %s167
    %p176 = scmp.eq.s32.totalorder %s18, 0
    %p177 = por %p175, %p176
    %p178 = scmp.ne.s32.totalorder %s166, %s167
    %p179 = scmp.eq.s32.totalorder %s19, 3
    %p180 = por %p178, %p179
    %p182 = scmp.ne.s32.totalorder %s167, %s181
    %p183 = scmp.eq.s32.totalorder %s19, 0
    %p184 = por %p182, %p183
    %s185 = ssub.s32 %s20, %s32
    %s186 = ssub.s32 %s21, %s28
    %s187 = sor.u32 %s185, %s186
    %p188 = scmp.eq.s32.totalorder %s187, 0
    %s190 = sadd.s32 %s189, 1
    %s191 = scalar_select %p188, %s189, %s190
    %p194 = pneg %p188
    %p195 = scmp.eq.s32.totalorder %s13, 3
    %p196 = por %p194, %p195
    %p197 = scmp.ne.s32.totalorder %s189, %s192
    %p198 = scmp.eq.s32.totalorder %s13, 0
    %p199 = por %p197, %p198
    %p200 = scmp.ne.s32.totalorder %s189, %s192
    %p201 = scmp.eq.s32.totalorder %s18, 3
    %p202 = por %p200, %p201
    %p203 = scmp.ne.s32.totalorder %s192, %s193
    %p204 = scmp.eq.s32.totalorder %s18, 0
    %p205 = por %p203, %p204
    %p206 = scmp.ne.s32.totalorder %s192, %s193
    %p207 = scmp.eq.s32.totalorder %s19, 3
    %p208 = por %p206, %p207
    %p210 = scmp.ne.s32.totalorder %s193, %s209
    %p211 = scmp.eq.s32.totalorder %s19, 0
    %p212 = por %p210, %p211
    %p213 = scmp.le.s32.totalorder 1, %s13
    %p214 = scmp.lt.s32.totalorder %s13, 5
    %p215 = pnand %p213, %p214
    %p216 = pneg %p215
    // Predicated region
    $region9: #{tpu_custom_call.1} parent=5 // pred_check
      _
    $region10: #{tpu_custom_call.1} parent=5 // pred_check_branch
      %218 = sbr.rel (%p215) target = $region12
    $region11: #{tpu_custom_call.1} parent=5 // pred_region
      %s219 = ssub.s32 %s13, 1
      // Predicated region
      $region13: #{tpu_custom_call.1} parent=11 // pred_check
        %p220 = pneg %p72
      $region14: #{tpu_custom_call.1} parent=11 // pred_check_branch
        %222 = sbr.rel (%p220) target = $region16
      $region15: #{tpu_custom_call.1} parent=11 // pred_region
        _
      $region16: #{tpu_custom_call.1} parent=11 // pred_fallthru
        _
      // Predicated region
      $region17: #{tpu_custom_call.1} parent=11 // pred_check
        %p223 = pneg %p93
      $region18: #{tpu_custom_call.1} parent=11 // pred_check_branch
        %225 = sbr.rel (%p223) target = $region20
      $region19: #{tpu_custom_call.1} parent=11 // pred_region
        _
      $region20: #{tpu_custom_call.1} parent=11 // pred_fallthru
        _
      // Predicated region
      $region21: #{tpu_custom_call.1} parent=11 // pred_check
        %p226 = pneg %p114
      $region22: #{tpu_custom_call.1} parent=11 // pred_check_branch
        %228 = sbr.rel (%p226) target = $region24
      $region23: #{tpu_custom_call.1} parent=11 // pred_region
        _
      $region24: #{tpu_custom_call.1} parent=11 // pred_fallthru
        _
      // Predicated region
      $region25: #{tpu_custom_call.1} parent=11 // pred_check
        %p229 = pneg %p135
      $region26: #{tpu_custom_call.1} parent=11 // pred_check_branch
        %231 = sbr.rel (%p229) target = $region28
      $region27: #{tpu_custom_call.1} parent=11 // pred_region
        _
      $region28: #{tpu_custom_call.1} parent=11 // pred_fallthru
        _
      // Predicated region
      $region29: #{tpu_custom_call.1} parent=11 // pred_check
        %p232 = pneg %p156
      $region30: #{tpu_custom_call.1} parent=11 // pred_check_branch
        %234 = sbr.rel (%p232) target = $region32
      $region31: #{tpu_custom_call.1} parent=11 // pred_region
        _
      $region32: #{tpu_custom_call.1} parent=11 // pred_fallthru
        _
      // Predicated region
      $region33: #{tpu_custom_call.1} parent=11 // pred_check
        %p235 = pneg %p177
      $region34: #{tpu_custom_call.1} parent=11 // pred_check_branch
        %237 = sbr.rel (%p235) target = $region36
      $region35: #{tpu_custom_call.1} parent=11 // pred_region
        _
      $region36: #{tpu_custom_call.1} parent=11 // pred_fallthru
        _
    $region12: #{tpu_custom_call.1} parent=5 // pred_fallthru
      _
    %p238 = scmp.lt.s32.totalorder %s13, 4
    // Predicated region
    $region37: #{tpu_custom_call.1} parent=5 // pred_check
      %p239 = pneg %p238
    $region38: #{tpu_custom_call.1} parent=5 // pred_check_branch
      %241 = sbr.rel (%p239) target = $region40
    $region39: #{tpu_custom_call.1} parent=5 // pred_region
      // Predicated region
      $region41: #{tpu_custom_call.1} parent=39 // pred_check
        %p242 = pneg %p45
      $region42: #{tpu_custom_call.1} parent=39 // pred_check_branch
        %244 = sbr.rel (%p242) target = $region44
      $region43: #{tpu_custom_call.1} parent=39 // pred_region
        %p245 = scmp.lt.s32.totalorder %s20, 1
        %s246 = scalar_select %p245, %s20, 1
        %s247 = smul.addr %s246, 60
        %s248 = smul.addr %s247, 4
        %s249 = scalar_lea.vmem %s0, %s248
      $region44: #{tpu_custom_call.1} parent=39 // pred_fallthru
        _
    $region40: #{tpu_custom_call.1} parent=5 // pred_fallthru
      _
    %p250 = scmp.le.s32.totalorder 1, %s13
    %p251 = scmp.lt.s32.totalorder %s13, 5
    %p252 = pnand %p250, %p251
    %p253 = pneg %p252
    // Predicated region
    $region45: #{tpu_custom_call.1} parent=5 // pred_check
      _
    $region46: #{tpu_custom_call.1} parent=5 // pred_check_branch
      %255 = sbr.rel (%p252) target = $region48
    $region47: #{tpu_custom_call.1} parent=5 // pred_region
      %s256 = ssub.s32 %s13, 1
      %p257 = scmp.lt.s32.totalorder %s22, 1
      %s258 = scalar_select %p257, %s22, 1
      %s259 = smul.addr %s258, 60
      %s260 = smul.addr %s259, 4
      %s261 = scalar_lea.vmem %s0, %s260
      %p262 = pneg %p51
      %p263 = pneg %p48
      %p264 = pneg %p72
      %p265 = pneg %p69
      %p266 = pneg %p93
      %p267 = pneg %p90
      %p268 = pneg %p114
      %p269 = pneg %p111
      %p270 = pneg %p135
      %p271 = pneg %p132
      %p272 = pneg %p156
      %p273 = pneg %p153
      %p274 = pneg %p177
      %p275 = pneg %p174
      %p276 = pneg %p205
      %p277 = pneg %p202
      %s278 = smul.u32 16, %s23
      %p279 = scmp.lt.s32.totalorder %s22, 1
      %s280 = scalar_select %p279, %s22, 1
      %p281 = scmp.lt.s32.totalorder %s278, 31
      %s282 = scalar_select %p281, %s278, 31
      %s283 = smul.addr %s280, 32
      %s284 = sadd.s32 %s282, %s283
      %s285 = smul.addr %s284, 4
      %s286 = scalar_lea.vmem %s7, %s285
      %p287 = scmp.lt.s32.totalorder %s22, 1
      %s288 = scalar_select %p287, %s22, 1
      %s289 = smul.addr %s288, 60
      %s290 = smul.addr %s289, 4
      %s291 = scalar_lea.vmem %s0, %s290
      %s292 = smul.u32 16, %s23
      %p293 = scmp.lt.s32.totalorder %s22, 1
      %s294 = scalar_select %p293, %s22, 1
      %p295 = scmp.lt.s32.totalorder %s292, 31
      %s296 = scalar_select %p295, %s292, 31
      %s297 = smul.addr %s294, 32
      %s298 = sadd.s32 %s296, %s297
      %s299 = smul.addr %s298, 4
      %s300 = scalar_lea.vmem %s7, %s299
      %s301 = smul.u32 16, %s23
      %s303 = smul.u32 %s23, 8
      %s304 = smul.u32 %s303, 3
      %s305 = smul.addr %s304, 4
      %s306 = scalar_lea.vmem %s291, %s305
      %v307 = vld [vmem:[%s306] sm:$0xf]
      %v308 = vld [vmem:[%s306 + $0x4] sm:$0xf]
      %v309 = vld [vmem:[%s306 + $0xc] sm:$0xf]
      %v310 = vld [vmem:[%s306 + $0x10] sm:$0xf]
      %v311 = vld [vmem:[%s306 + $0x18] sm:$0xf]
      %v312 = vld [vmem:[%s306 + $0x1c] sm:$0xf]
      %v313 = vld [vmem:[%s306 + $0x24] sm:$0xf]
      %v314 = vld [vmem:[%s306 + $0x28] sm:$0xf]
      %v315 = vld [vmem:[%s306 + $0x30] sm:$0xf]
      %v316 = vld [vmem:[%s306 + $0x34] sm:$0xf]
      %v317 = vld [vmem:[%s306 + $0x3c] sm:$0xf]
      %v318 = vld [vmem:[%s306 + $0x40] sm:$0xf]
      %v319 = vld [vmem:[%s306 + $0x48] sm:$0xf]
      %v320 = vld [vmem:[%s306 + $0x4c] sm:$0xf]
      %v321 = vld [vmem:[%s306 + $0x54] sm:$0xf]
      %v322 = vld [vmem:[%s306 + $0x58] sm:$0xf]
      %v323 = vld [vmem:[%s306 + $0x60] sm:$0xf]
      %v324 = vld [vmem:[%s306 + $0x64] sm:$0xf]
      %v325 = vld [vmem:[%s306 + $0x6c] sm:$0xf]
      %v326 = vld [vmem:[%s306 + $0x70] sm:$0xf]
      %v327 = vld [vmem:[%s306 + $0x8] sm:$0x1]
      %v328 = vld [vmem:[%s306 + $0x14] sm:$0x1]
      %v329 = vld [vmem:[%s306 + $0x20] sm:$0x1]
      %v330 = vld [vmem:[%s306 + $0x2c] sm:$0x1]
      %v331 = vld [vmem:[%s306 + $0x38] sm:$0x1]
      %v332 = vld [vmem:[%s306 + $0x44] sm:$0x1]
      %v333 = vld [vmem:[%s306 + $0x50] sm:$0x1]
      %v334 = vld [vmem:[%s306 + $0x5c] sm:$0x1]
      %v335 = vld [vmem:[%s306 + $0x68] sm:$0x1]
      %v336 = vld [vmem:[%s306 + $0x74] sm:$0x1]
      %v337 = vld [vmem:[%s306] sm:$0xe]
      %v338 = vld [vmem:[%s306 + $0xc] sm:$0xe]
      %v339 = vld [vmem:[%s306 + $0x18] sm:$0xe]
      %v340 = vld [vmem:[%s306 + $0x24] sm:$0xe]
      %v341 = vld [vmem:[%s306 + $0x30] sm:$0xe]
      %v342 = vld [vmem:[%s306 + $0x3c] sm:$0xe]
      %v343 = vld [vmem:[%s306 + $0x48] sm:$0xe]
      %v344 = vld [vmem:[%s306 + $0x54] sm:$0xe]
      %v345 = vld [vmem:[%s306 + $0x60] sm:$0xe]
      %v346 = vld [vmem:[%s306 + $0x6c] sm:$0xe]
      %v367 = vunpack.c.l.b16 %v307
      %v368 = vunpack.c.l.b16 %v308
      %v369 = vunpack.c.l.b16 %v309
      %v370 = vunpack.c.l.b16 %v310
      %v371 = vunpack.c.l.b16 %v311
      %v372 = vunpack.c.l.b16 %v312
      %v373 = vunpack.c.l.b16 %v313
      %v374 = vunpack.c.l.b16 %v314
      %v375 = vunpack.c.l.b16 %v315
      %v376 = vunpack.c.l.b16 %v316
      %v377 = vunpack.c.l.b16 %v317
      %v378 = vunpack.c.l.b16 %v318
      %v379 = vunpack.c.l.b16 %v319
      %v380 = vunpack.c.l.b16 %v320
      %v381 = vunpack.c.l.b16 %v321
      %v382 = vunpack.c.l.b16 %v322
      %v383 = vunpack.c.l.b16 %v323
      %v384 = vunpack.c.l.b16 %v324
      %v385 = vunpack.c.l.b16 %v325
      %v386 = vunpack.c.l.b16 %v326
      %v387 = vpack.c.b16 %v368, %v367
      %v388 = vpack.c.b16 %v370, %v369
      %v389 = vpack.c.b16 %v372, %v371
      %v390 = vpack.c.b16 %v374, %v373
      %v391 = vpack.c.b16 %v376, %v375
      %v392 = vpack.c.b16 %v378, %v377
      %v393 = vpack.c.b16 %v380, %v379
      %v394 = vpack.c.b16 %v382, %v381
      %v395 = vpack.c.b16 %v384, %v383
      %v396 = vpack.c.b16 %v386, %v385
      %v407 = vunpack.c.l.b16 %v327
      %v408 = vunpack.c.l.b16 %v328
      %v409 = vunpack.c.l.b16 %v329
      %v410 = vunpack.c.l.b16 %v330
      %v411 = vunpack.c.l.b16 %v331
      %v412 = vunpack.c.l.b16 %v332
      %v413 = vunpack.c.l.b16 %v333
      %v414 = vunpack.c.l.b16 %v334
      %v415 = vunpack.c.l.b16 %v335
      %v416 = vunpack.c.l.b16 %v336
      %v417 = vpack.c.b16 %v407, %v407
      %v418 = vpack.c.b16 %v408, %v408
      %v419 = vpack.c.b16 %v409, %v409
      %v420 = vpack.c.b16 %v410, %v410
      %v421 = vpack.c.b16 %v411, %v411
      %v422 = vpack.c.b16 %v412, %v412
      %v423 = vpack.c.b16 %v413, %v413
      %v424 = vpack.c.b16 %v414, %v414
      %v425 = vpack.c.b16 %v415, %v415
      %v426 = vpack.c.b16 %v416, %v416
      %vm427 = vsmask.f32 7424
      %v429 = vshrl.u32 %v387, 16
      %v431 = vshll.u32 %v387, 16
      %v433 = vrot.slane %v431, 1
      %v434 = vor.u32 %v429, %v433
      %v436 = vshll.u32 %v417, 16
      %v438 = vrot.slane %v436, 1
      %v439 = vsel %vm427, %v434, %v438
      %v441 = vshrl.u32 %v388, 16
      %v443 = vshll.u32 %v388, 16
      %v445 = vrot.slane %v443, 1
      %v446 = vor.u32 %v441, %v445
      %v448 = vshll.u32 %v418, 16
      %v450 = vrot.slane %v448, 1
      %v451 = vsel %vm427, %v446, %v450
      %v453 = vshrl.u32 %v389, 16
      %v455 = vshll.u32 %v389, 16
      %v457 = vrot.slane %v455, 1
      %v458 = vor.u32 %v453, %v457
      %v460 = vshll.u32 %v419, 16
      %v462 = vrot.slane %v460, 1
      %v463 = vsel %vm427, %v458, %v462
      %v465 = vshrl.u32 %v390, 16
      %v467 = vshll.u32 %v390, 16
      %v469 = vrot.slane %v467, 1
      %v470 = vor.u32 %v465, %v469
      %v472 = vshll.u32 %v420, 16
      %v474 = vrot.slane %v472, 1
      %v475 = vsel %vm427, %v470, %v474
      %v477 = vshrl.u32 %v391, 16
      %v479 = vshll.u32 %v391, 16
      %v481 = vrot.slane %v479, 1
      %v482 = vor.u32 %v477, %v481
      %v484 = vshll.u32 %v421, 16
      %v486 = vrot.slane %v484, 1
      %v487 = vsel %vm427, %v482, %v486
      %v489 = vshrl.u32 %v392, 16
      %v491 = vshll.u32 %v392, 16
      %v493 = vrot.slane %v491, 1
      %v494 = vor.u32 %v489, %v493
      %v496 = vshll.u32 %v422, 16
      %v498 = vrot.slane %v496, 1
      %v499 = vsel %vm427, %v494, %v498
      %v501 = vshrl.u32 %v393, 16
      %v503 = vshll.u32 %v393, 16
      %v505 = vrot.slane %v503, 1
      %v506 = vor.u32 %v501, %v505
      %v508 = vshll.u32 %v423, 16
      %v510 = vrot.slane %v508, 1
      %v511 = vsel %vm427, %v506, %v510
      %v513 = vshrl.u32 %v394, 16
      %v515 = vshll.u32 %v394, 16
      %v517 = vrot.slane %v515, 1
      %v518 = vor.u32 %v513, %v517
      %v520 = vshll.u32 %v424, 16
      %v522 = vrot.slane %v520, 1
      %v523 = vsel %vm427, %v518, %v522
      %v525 = vshrl.u32 %v395, 16
      %v527 = vshll.u32 %v395, 16
      %v529 = vrot.slane %v527, 1
      %v530 = vor.u32 %v525, %v529
      %v532 = vshll.u32 %v425, 16
      %v534 = vrot.slane %v532, 1
      %v535 = vsel %vm427, %v530, %v534
      %v537 = vshrl.u32 %v396, 16
      %v539 = vshll.u32 %v396, 16
      %v541 = vrot.slane %v539, 1
      %v542 = vor.u32 %v537, %v541
      %v544 = vshll.u32 %v426, 16
      %v546 = vrot.slane %v544, 1
      %v547 = vsel %vm427, %v542, %v546
      %548 = vrot.lane.b32.xlu0 %v439, 4
      %v549 = vpop.permute.xlu0 %548
      %550 = vrot.lane.b32.xlu0 %v451, 4
      %v551 = vpop.permute.xlu0 %550
      %552 = vrot.lane.b32.xlu0 %v463, 4
      %v553 = vpop.permute.xlu0 %552
      %554 = vrot.lane.b32.xlu0 %v475, 4
      %v555 = vpop.permute.xlu0 %554
      %556 = vrot.lane.b32.xlu0 %v487, 4
      %v557 = vpop.permute.xlu0 %556
      %558 = vrot.lane.b32.xlu0 %v499, 4
      %v559 = vpop.permute.xlu0 %558
      %560 = vrot.lane.b32.xlu0 %v511, 4
      %v561 = vpop.permute.xlu0 %560
      %562 = vrot.lane.b32.xlu0 %v523, 4
      %v563 = vpop.permute.xlu0 %562
      %564 = vrot.lane.b32.xlu0 %v535, 4
      %v565 = vpop.permute.xlu0 %564
      %566 = vrot.lane.b32.xlu0 %v547, 4
      %v567 = vpop.permute.xlu0 %566
      %v578 = vunpack.c.l.b16 %v337
      %v579 = vunpack.c.l.b16 %v338
      %v580 = vunpack.c.l.b16 %v339
      %v581 = vunpack.c.l.b16 %v340
      %v582 = vunpack.c.l.b16 %v341
      %v583 = vunpack.c.l.b16 %v342
      %v584 = vunpack.c.l.b16 %v343
      %v585 = vunpack.c.l.b16 %v344
      %v586 = vunpack.c.l.b16 %v345
      %v587 = vunpack.c.l.b16 %v346
      %v588 = vpack.c.b16 %v368, %v578
      %v589 = vpack.c.b16 %v370, %v579
      %v590 = vpack.c.b16 %v372, %v580
      %v591 = vpack.c.b16 %v374, %v581
      %v592 = vpack.c.b16 %v376, %v582
      %v593 = vpack.c.b16 %v378, %v583
      %v594 = vpack.c.b16 %v380, %v584
      %v595 = vpack.c.b16 %v382, %v585
      %v596 = vpack.c.b16 %v384, %v586
      %v597 = vpack.c.b16 %v386, %v587
      %vm598 = vcmask 1046528
      %v599 = vrot.slane %v588, 1
      %v600 = vrot.slane %v417, 1
      %v601 = vsel %vm598, %v599, %v600
      %v602 = vrot.slane %v589, 1
      %v603 = vrot.slane %v418, 1
      %v604 = vsel %vm598, %v602, %v603
      %v605 = vrot.slane %v590, 1
      %v606 = vrot.slane %v419, 1
      %v607 = vsel %vm598, %v605, %v606
      %v608 = vrot.slane %v591, 1
      %v609 = vrot.slane %v420, 1
      %v610 = vsel %vm598, %v608, %v609
      %v611 = vrot.slane %v592, 1
      %v612 = vrot.slane %v421, 1
      %v613 = vsel %vm598, %v611, %v612
      %v614 = vrot.slane %v593, 1
      %v615 = vrot.slane %v422, 1
      %v616 = vsel %vm598, %v614, %v615
      %v617 = vrot.slane %v594, 1
      %v618 = vrot.slane %v423, 1
      %v619 = vsel %vm598, %v617, %v618
      %v620 = vrot.slane %v595, 1
      %v621 = vrot.slane %v424, 1
      %v622 = vsel %vm598, %v620, %v621
      %v623 = vrot.slane %v596, 1
      %v624 = vrot.slane %v425, 1
      %v625 = vsel %vm598, %v623, %v624
      %v626 = vrot.slane %v597, 1
      %v627 = vrot.slane %v426, 1
      %v628 = vsel %vm598, %v626, %v627
      %629 = vrot.lane.b32.xlu0 %v601, 8
      %v630 = vpop.permute.xlu0 %629
      %631 = vrot.lane.b32.xlu0 %v604, 8
      %v632 = vpop.permute.xlu0 %631
      %633 = vrot.lane.b32.xlu0 %v607, 8
      %v634 = vpop.permute.xlu0 %633
      %635 = vrot.lane.b32.xlu0 %v610, 8
      %v636 = vpop.permute.xlu0 %635
      %637 = vrot.lane.b32.xlu0 %v613, 8
      %v638 = vpop.permute.xlu0 %637
      %639 = vrot.lane.b32.xlu0 %v616, 8
      %v640 = vpop.permute.xlu0 %639
      %641 = vrot.lane.b32.xlu0 %v619, 8
      %v642 = vpop.permute.xlu0 %641
      %643 = vrot.lane.b32.xlu0 %v622, 8
      %v644 = vpop.permute.xlu0 %643
      %645 = vrot.lane.b32.xlu0 %v625, 8
      %v646 = vpop.permute.xlu0 %645
      %647 = vrot.lane.b32.xlu0 %v628, 8
      %v648 = vpop.permute.xlu0 %647
      %vm649 = vcmask 31744
      %v651 = vsel %vm649, %v387, %v549
      %v653 = vsel %vm649, %v388, %v551
      %v655 = vsel %vm649, %v389, %v553
      %v657 = vsel %vm649, %v390, %v555
      %v659 = vsel %vm649, %v391, %v557
      %v661 = vsel %vm649, %v392, %v559
      %v663 = vsel %vm649, %v393, %v561
      %v665 = vsel %vm649, %v394, %v563
      %v667 = vsel %vm649, %v395, %v565
      %v669 = vsel %vm649, %v396, %v567
      %vm670 = vcmask 64512
      %v672 = vsel %vm670, %v651, %v630
      %v674 = vsel %vm670, %v653, %v632
      %v676 = vsel %vm670, %v655, %v634
      %v678 = vsel %vm670, %v657, %v636
      %v680 = vsel %vm670, %v659, %v638
      %v682 = vsel %vm670, %v661, %v640
      %v684 = vsel %vm670, %v663, %v642
      %v686 = vsel %vm670, %v665, %v644
      %v688 = vsel %vm670, %v667, %v646
      %v690 = vsel %vm670, %v669, %v648
      %v691 = vld [vmem:[%s1] sm:$0xf]
      %v692 = vld [vmem:[%s1 + $0x4] sm:$0x3]
      %s693 = sadd.s32 %s303, 1
      %s694 = smul.u32 %s693, 3
      %s695 = smul.addr %s694, 4
      %s696 = scalar_lea.vmem %s291, %s695
      %v697 = vld [vmem:[%s696] sm:$0xf]
      %v698 = vld [vmem:[%s696 + $0x4] sm:$0xf]
      %v699 = vld [vmem:[%s696 + $0xc] sm:$0xf]
      %v700 = vld [vmem:[%s696 + $0x10] sm:$0xf]
      %v701 = vld [vmem:[%s696 + $0x18] sm:$0xf]
      %v702 = vld [vmem:[%s696 + $0x1c] sm:$0xf]
      %v703 = vld [vmem:[%s696 + $0x24] sm:$0xf]
      %v704 = vld [vmem:[%s696 + $0x28] sm:$0xf]
      %v705 = vld [vmem:[%s696 + $0x30] sm:$0xf]
      %v706 = vld [vmem:[%s696 + $0x34] sm:$0xf]
      %v707 = vld [vmem:[%s696 + $0x3c] sm:$0xf]
      %v708 = vld [vmem:[%s696 + $0x40] sm:$0xf]
      %v709 = vld [vmem:[%s696 + $0x48] sm:$0xf]
      %v710 = vld [vmem:[%s696 + $0x4c] sm:$0xf]
      %v711 = vld [vmem:[%s696 + $0x54] sm:$0xf]
      %v712 = vld [vmem:[%s696 + $0x58] sm:$0xf]
      %v713 = vld [vmem:[%s696 + $0x60] sm:$0xf]
      %v714 = vld [vmem:[%s696 + $0x64] sm:$0xf]
      %v715 = vld [vmem:[%s696 + $0x6c] sm:$0xf]
      %v716 = vld [vmem:[%s696 + $0x70] sm:$0xf]
      %v717 = vld [vmem:[%s696 + $0x8] sm:$0x1]
      %v718 = vld [vmem:[%s696 + $0x14] sm:$0x1]
      %v719 = vld [vmem:[%s696 + $0x20] sm:$0x1]
      %v720 = vld [vmem:[%s696 + $0x2c] sm:$0x1]
      %v721 = vld [vmem:[%s696 + $0x38] sm:$0x1]
      %v722 = vld [vmem:[%s696 + $0x44] sm:$0x1]
      %v723 = vld [vmem:[%s696 + $0x50] sm:$0x1]
      %v724 = vld [vmem:[%s696 + $0x5c] sm:$0x1]
      %v725 = vld [vmem:[%s696 + $0x68] sm:$0x1]
      %v726 = vld [vmem:[%s696 + $0x74] sm:$0x1]
      %v727 = vld [vmem:[%s696] sm:$0xe]
      %v728 = vld [vmem:[%s696 + $0xc] sm:$0xe]
      %v729 = vld [vmem:[%s696 + $0x18] sm:$0xe]
      %v730 = vld [vmem:[%s696 + $0x24] sm:$0xe]
      %v731 = vld [vmem:[%s696 + $0x30] sm:$0xe]
      %v732 = vld [vmem:[%s696 + $0x3c] sm:$0xe]
      %v733 = vld [vmem:[%s696 + $0x48] sm:$0xe]
      %v734 = vld [vmem:[%s696 + $0x54] sm:$0xe]
      %v735 = vld [vmem:[%s696 + $0x60] sm:$0xe]
      %v736 = vld [vmem:[%s696 + $0x6c] sm:$0xe]
      %v757 = vunpack.c.l.b16 %v697
      %v758 = vunpack.c.l.b16 %v698
      %v759 = vunpack.c.l.b16 %v699
      %v760 = vunpack.c.l.b16 %v700
      %v761 = vunpack.c.l.b16 %v701
      %v762 = vunpack.c.l.b16 %v702
      %v763 = vunpack.c.l.b16 %v703
      %v764 = vunpack.c.l.b16 %v704
      %v765 = vunpack.c.l.b16 %v705
      %v766 = vunpack.c.l.b16 %v706
      %v767 = vunpack.c.l.b16 %v707
      %v768 = vunpack.c.l.b16 %v708
      %v769 = vunpack.c.l.b16 %v709
      %v770 = vunpack.c.l.b16 %v710
      %v771 = vunpack.c.l.b16 %v711
      %v772 = vunpack.c.l.b16 %v712
      %v773 = vunpack.c.l.b16 %v713
      %v774 = vunpack.c.l.b16 %v714
      %v775 = vunpack.c.l.b16 %v715
      %v776 = vunpack.c.l.b16 %v716
      %v777 = vpack.c.b16 %v758, %v757
      %v778 = vpack.c.b16 %v760, %v759
      %v779 = vpack.c.b16 %v762, %v761
      %v780 = vpack.c.b16 %v764, %v763
      %v781 = vpack.c.b16 %v766, %v765
      %v782 = vpack.c.b16 %v768, %v767
      %v783 = vpack.c.b16 %v770, %v769
      %v784 = vpack.c.b16 %v772, %v771
      %v785 = vpack.c.b16 %v774, %v773
      %v786 = vpack.c.b16 %v776, %v775
      %v797 = vunpack.c.l.b16 %v717
      %v798 = vunpack.c.l.b16 %v718
      %v799 = vunpack.c.l.b16 %v719
      %v800 = vunpack.c.l.b16 %v720
      %v801 = vunpack.c.l.b16 %v721
      %v802 = vunpack.c.l.b16 %v722
      %v803 = vunpack.c.l.b16 %v723
      %v804 = vunpack.c.l.b16 %v724
      %v805 = vunpack.c.l.b16 %v725
      %v806 = vunpack.c.l.b16 %v726
      %v807 = vpack.c.b16 %v797, %v797
      %v808 = vpack.c.b16 %v798, %v798
      %v809 = vpack.c.b16 %v799, %v799
      %v810 = vpack.c.b16 %v800, %v800
      %v811 = vpack.c.b16 %v801, %v801
      %v812 = vpack.c.b16 %v802, %v802
      %v813 = vpack.c.b16 %v803, %v803
      %v814 = vpack.c.b16 %v804, %v804
      %v815 = vpack.c.b16 %v805, %v805
      %v816 = vpack.c.b16 %v806, %v806
      %v818 = vshrl.u32 %v777, 16
      %v820 = vshll.u32 %v777, 16
      %v822 = vrot.slane %v820, 1
      %v823 = vor.u32 %v818, %v822
      %v825 = vshll.u32 %v807, 16
      %v827 = vrot.slane %v825, 1
      %v828 = vsel %vm427, %v823, %v827
      %v830 = vshrl.u32 %v778, 16
      %v832 = vshll.u32 %v778, 16
      %v834 = vrot.slane %v832, 1
      %v835 = vor.u32 %v830, %v834
      %v837 = vshll.u32 %v808, 16
      %v839 = vrot.slane %v837, 1
      %v840 = vsel %vm427, %v835, %v839
      %v842 = vshrl.u32 %v779, 16
      %v844 = vshll.u32 %v779, 16
      %v846 = vrot.slane %v844, 1
      %v847 = vor.u32 %v842, %v846
      %v849 = vshll.u32 %v809, 16
      %v851 = vrot.slane %v849, 1
      %v852 = vsel %vm427, %v847, %v851
      %v854 = vshrl.u32 %v780, 16
      %v856 = vshll.u32 %v780, 16
      %v858 = vrot.slane %v856, 1
      %v859 = vor.u32 %v854, %v858
      %v861 = vshll.u32 %v810, 16
      %v863 = vrot.slane %v861, 1
      %v864 = vsel %vm427, %v859, %v863
      %v866 = vshrl.u32 %v781, 16
      %v868 = vshll.u32 %v781, 16
      %v870 = vrot.slane %v868, 1
      %v871 = vor.u32 %v866, %v870
      %v873 = vshll.u32 %v811, 16
      %v875 = vrot.slane %v873, 1
      %v876 = vsel %vm427, %v871, %v875
      %v878 = vshrl.u32 %v782, 16
      %v880 = vshll.u32 %v782, 16
      %v882 = vrot.slane %v880, 1
      %v883 = vor.u32 %v878, %v882
      %v885 = vshll.u32 %v812, 16
      %v887 = vrot.slane %v885, 1
      %v888 = vsel %vm427, %v883, %v887
      %v890 = vshrl.u32 %v783, 16
      %v892 = vshll.u32 %v783, 16
      %v894 = vrot.slane %v892, 1
      %v895 = vor.u32 %v890, %v894
      %v897 = vshll.u32 %v813, 16
      %v899 = vrot.slane %v897, 1
      %v900 = vsel %vm427, %v895, %v899
      %v902 = vshrl.u32 %v784, 16
      %v904 = vshll.u32 %v784, 16
      %v906 = vrot.slane %v904, 1
      %v907 = vor.u32 %v902, %v906
      %v909 = vshll.u32 %v814, 16
      %v911 = vrot.slane %v909, 1
      %v912 = vsel %vm427, %v907, %v911
      %v914 = vshrl.u32 %v785, 16
      %v916 = vshll.u32 %v785, 16
      %v918 = vrot.slane %v916, 1
      %v919 = vor.u32 %v914, %v918
      %v921 = vshll.u32 %v815, 16
      %v923 = vrot.slane %v921, 1
      %v924 = vsel %vm427, %v919, %v923
      %v926 = vshrl.u32 %v786, 16
      %v928 = vshll.u32 %v786, 16
      %v930 = vrot.slane %v928, 1
      %v931 = vor.u32 %v926, %v930
      %v933 = vshll.u32 %v816, 16
      %v935 = vrot.slane %v933, 1
      %v936 = vsel %vm427, %v931, %v935
      %937 = vrot.lane.b32.xlu0 %v828, 4
      %v938 = vpop.permute.xlu0 %937
      %939 = vrot.lane.b32.xlu0 %v840, 4
      %v940 = vpop.permute.xlu0 %939
      %941 = vrot.lane.b32.xlu0 %v852, 4
      %v942 = vpop.permute.xlu0 %941
      %943 = vrot.lane.b32.xlu0 %v864, 4
      %v944 = vpop.permute.xlu0 %943
      %945 = vrot.lane.b32.xlu0 %v876, 4
      %v946 = vpop.permute.xlu0 %945
      %947 = vrot.lane.b32.xlu0 %v888, 4
      %v948 = vpop.permute.xlu0 %947
      %949 = vrot.lane.b32.xlu0 %v900, 4
      %v950 = vpop.permute.xlu0 %949
      %951 = vrot.lane.b32.xlu0 %v912, 4
      %v952 = vpop.permute.xlu0 %951
      %953 = vrot.lane.b32.xlu0 %v924, 4
      %v954 = vpop.permute.xlu0 %953
      %955 = vrot.lane.b32.xlu0 %v936, 4
      %v956 = vpop.permute.xlu0 %955
      %v967 = vunpack.c.l.b16 %v727
      %v968 = vunpack.c.l.b16 %v728
      %v969 = vunpack.c.l.b16 %v729
      %v970 = vunpack.c.l.b16 %v730
      %v971 = vunpack.c.l.b16 %v731
      %v972 = vunpack.c.l.b16 %v732
      %v973 = vunpack.c.l.b16 %v733
      %v974 = vunpack.c.l.b16 %v734
      %v975 = vunpack.c.l.b16 %v735
      %v976 = vunpack.c.l.b16 %v736
      %v977 = vpack.c.b16 %v758, %v967
      %v978 = vpack.c.b16 %v760, %v968
      %v979 = vpack.c.b16 %v762, %v969
      %v980 = vpack.c.b16 %v764, %v970
      %v981 = vpack.c.b16 %v766, %v971
      %v982 = vpack.c.b16 %v768, %v972
      %v983 = vpack.c.b16 %v770, %v973
      %v984 = vpack.c.b16 %v772, %v974
      %v985 = vpack.c.b16 %v774, %v975
      %v986 = vpack.c.b16 %v776, %v976
      %v987 = vrot.slane %v977, 1
      %v988 = vrot.slane %v807, 1
      %v989 = vsel %vm598, %v987, %v988
      %v990 = vrot.slane %v978, 1
      %v991 = vrot.slane %v808, 1
      %v992 = vsel %vm598, %v990, %v991
      %v993 = vrot.slane %v979, 1
      %v994 = vrot.slane %v809, 1
      %v995 = vsel %vm598, %v993, %v994
      %v996 = vrot.slane %v980, 1
      %v997 = vrot.slane %v810, 1
      %v998 = vsel %vm598, %v996, %v997
      %v999 = vrot.slane %v981, 1
      %v1000 = vrot.slane %v811, 1
      %v1001 = vsel %vm598, %v999, %v1000
      %v1002 = vrot.slane %v982, 1
      %v1003 = vrot.slane %v812, 1
      %v1004 = vsel %vm598, %v1002, %v1003
      %v1005 = vrot.slane %v983, 1
      %v1006 = vrot.slane %v813, 1
      %v1007 = vsel %vm598, %v1005, %v1006
      %v1008 = vrot.slane %v984, 1
      %v1009 = vrot.slane %v814, 1
      %v1010 = vsel %vm598, %v1008, %v1009
      %v1011 = vrot.slane %v985, 1
      %v1012 = vrot.slane %v815, 1
      %v1013 = vsel %vm598, %v1011, %v1012
      %v1014 = vrot.slane %v986, 1
      %v1015 = vrot.slane %v816, 1
      %v1016 = vsel %vm598, %v1014, %v1015
      %1017 = vrot.lane.b32.xlu0 %v989, 8
      %v1018 = vpop.permute.xlu0 %1017
      %1019 = vrot.lane.b32.xlu0 %v992, 8
      %v1020 = vpop.permute.xlu0 %1019
      %1021 = vrot.lane.b32.xlu0 %v995, 8
      %v1022 = vpop.permute.xlu0 %1021
      %1023 = vrot.lane.b32.xlu0 %v998, 8
      %v1024 = vpop.permute.xlu0 %1023
      %1025 = vrot.lane.b32.xlu0 %v1001, 8
      %v1026 = vpop.permute.xlu0 %1025
      %1027 = vrot.lane.b32.xlu0 %v1004, 8
      %v1028 = vpop.permute.xlu0 %1027
      %1029 = vrot.lane.b32.xlu0 %v1007, 8
      %v1030 = vpop.permute.xlu0 %1029
      %1031 = vrot.lane.b32.xlu0 %v1010, 8
      %v1032 = vpop.permute.xlu0 %1031
      %1033 = vrot.lane.b32.xlu0 %v1013, 8
      %v1034 = vpop.permute.xlu0 %1033
      %1035 = vrot.lane.b32.xlu0 %v1016, 8
      %v1036 = vpop.permute.xlu0 %1035
      %v1038 = vsel %vm649, %v777, %v938
      %v1040 = vsel %vm649, %v778, %v940
      %v1042 = vsel %vm649, %v779, %v942
      %v1044 = vsel %vm649, %v780, %v944
      %v1046 = vsel %vm649, %v781, %v946
      %v1048 = vsel %vm649, %v782, %v948
      %v1050 = vsel %vm649, %v783, %v950
      %v1052 = vsel %vm649, %v784, %v952
      %v1054 = vsel %vm649, %v785, %v954
      %v1056 = vsel %vm649, %v786, %v956
      %v1058 = vsel %vm670, %v1038, %v1018
      %v1060 = vsel %vm670, %v1040, %v1020
      %v1062 = vsel %vm670, %v1042, %v1022
      %v1064 = vsel %vm670, %v1044, %v1024
      %v1066 = vsel %vm670, %v1046, %v1026
      %v1068 = vsel %vm670, %v1048, %v1028
      %v1070 = vsel %vm670, %v1050, %v1030
      %v1072 = vsel %vm670, %v1052, %v1032
      %v1074 = vsel %vm670, %v1054, %v1034
      %v1076 = vsel %vm670, %v1056, %v1036
      %s1077 = scalar_lea.vmem %s1, 8
      %v1078 = vld [vmem:[%s1077] sm:$0xf]
      %v1079 = vld [vmem:[%s1077 + $0x4] sm:$0x3]
      %v1082 = vunpack.c.l.b16 %v1078
      %v1083 = vunpack.c.l.b16 %v1079
      %v1084 = vpack.c.b16 %v1083, %v1082
      %vm1085 = vcmask 97280
      %v1086 = vsel %vm1085, %v1058, 0
      %v1088 = vsel %vm1085, %v1060, 0
      %v1090 = vsel %vm1085, %v1062, 0
      %v1092 = vsel %vm1085, %v1064, 0
      %v1094 = vsel %vm1085, %v1066, 0
      %v1096 = vsel %vm1085, %v1068, 0
      %v1098 = vsel %vm1085, %v1070, 0
      %v1100 = vsel %vm1085, %v1072, 0
      %v1102 = vsel %vm1085, %v1074, 0
      %v1104 = vsel %vm1085, %v1076, 0
      %vm1106 = vcmask 1045504
      %v1108 = vsel %vm1106, %v1084, 0
      %1110 = vmatprep.subr.bf16.mxu0 0
      %1111 = vmatpush1.bf16.msra.mxu0 %v1108
      %1112 = vmatprep.subr.bf16.mxu0 0
      %1113 = vmatpush1.bf16.msra.mxu0 0
      %1114 = vmatprep.subr.bf16.mxu0 0
      %1115 = vmatpush1.bf16.msra.mxu0 0
      %1116 = vmatprep.subr.bf16.mxu0 0
      %1117 = vmatpush1.bf16.msra.mxu0 0
      %1118 = vmatprep.subr.bf16.mxu0 0
      %1119 = vmatpush1.bf16.msra.mxu0 0
      %1120 = vmatprep.subr.bf16.mxu0 0
      %1121 = vmatpush1.bf16.msra.mxu0 0
      %1122 = vmatprep.subr.bf16.mxu0 0
      %1123 = vmatpush1.bf16.msra.mxu0 0
      %1124 = vmatprep.subr.bf16.mxu0 0
      %1125 = vmatpush1.bf16.msra.mxu0 0
      %1126 = vmatprep.subr.bf16.mxu0 0
      %1127 = vmatpush1.bf16.msra.mxu0 0
      %1128 = vmatprep.subr.bf16.mxu0 0
      %1129 = vmatpush1.bf16.msra.mxu0 0
      %1130 = vmatprep.subr.bf16.mxu0 0
      %1131 = vmatpush1.bf16.msra.mxu0 0
      %1132 = vmatprep.subr.bf16.mxu0 0
      %1133 = vmatpush1.bf16.msra.mxu0 0
      %1134 = vmatprep.subr.bf16.mxu0 0
      %1135 = vmatpush1.bf16.msra.mxu0 0
      %1136 = vmatprep.subr.bf16.mxu0 0
      %1137 = vmatpush1.bf16.msra.mxu0 0
      %1138 = vmatprep.subr.bf16.mxu0 0
      %1139 = vmatpush1.bf16.msra.mxu0 0
      %1140 = vmatprep.subr.bf16.mxu0 0
      %1141 = vmatpush1.bf16.msra.mxu0 0
      %1142 = vmatprep.mubr.bf16.mxu0 0
      %1143 = vmatmul.mubr.bf16.gmra.mrb[0].mxu0 %v1086
      %v1144 = vpop.f32.mrb[0].mxu0
      %v1145 = vadd.f32 0.0, %v1144
      %v1146 = vpop.f32.mrb[0].mxu0
      %v1147 = vpop.f32.mrb[0].mxu0
      %v1148 = vadd.f32 0.0, %v1147
      %v1149 = vpop.f32.mrb[0].mxu0
      %1150 = vmatprep.mubr.bf16.mxu0 0
      %1151 = vmatmul.mubr.bf16.gmra.mrb[0].mxu0 %v1088
      %v1152 = vpop.f32.mrb[0].mxu0
      %v1153 = vadd.f32 0.0, %v1152
      %v1154 = vpop.f32.mrb[0].mxu0
      %v1155 = vpop.f32.mrb[0].mxu0
      %v1156 = vadd.f32 0.0, %v1155
      %v1157 = vpop.f32.mrb[0].mxu0
      %1158 = vmatprep.mubr.bf16.mxu0 0
      %1159 = vmatmul.mubr.bf16.gmra.mrb[0].mxu0 %v1090
      %v1160 = vpop.f32.mrb[0].mxu0
      %v1161 = vadd.f32 0.0, %v1160
      %v1162 = vpop.f32.mrb[0].mxu0
      %v1163 = vpop.f32.mrb[0].mxu0
      %v1164 = vadd.f32 0.0, %v1163
      %v1165 = vpop.f32.mrb[0].mxu0
      %1166 = vmatprep.mubr.bf16.mxu0 0
      %1167 = vmatmul.mubr.bf16.gmra.mrb[0].mxu0 %v1092
      %v1168 = vpop.f32.mrb[0].mxu0
      %v1169 = vadd.f32 0.0, %v1168
      %v1170 = vpop.f32.mrb[0].mxu0
      %v1171 = vpop.f32.mrb[0].mxu0
      %v1172 = vadd.f32 0.0, %v1171
      %v1173 = vpop.f32.mrb[0].mxu0
      %1174 = vmatprep.mubr.bf16.mxu0 0
      %1175 = vmatmul.mubr.bf16.gmra.mrb[0].mxu0 %v1094
      %v1176 = vpop.f32.mrb[0].mxu0
      %v1177 = vadd.f32 0.0, %v1176
      %v1178 = vpop.f32.mrb[0].mxu0
      %v1179 = vpop.f32.mrb[0].mxu0
      %v1180 = vadd.f32 0.0, %v1179
      %v1181 = vpop.f32.mrb[0].mxu0
      %1182 = vmatprep.mubr.bf16.mxu0 0
      %1183 = vmatmul.mubr.bf16.gmra.mrb[0].mxu0 %v1096
      %v1184 = vpop.f32.mrb[0].mxu0
      %v1185 = vadd.f32 0.0, %v1184
      %v1186 = vpop.f32.mrb[0].mxu0
      %v1187 = vpop.f32.mrb[0].mxu0
      %v1188 = vadd.f32 0.0, %v1187
      %v1189 = vpop.f32.mrb[0].mxu0
      %1190 = vmatprep.mubr.bf16.mxu0 0
      %1191 = vmatmul.mubr.bf16.gmra.mrb[0].mxu0 %v1098
      %v1192 = vpop.f32.mrb[0].mxu0
      %v1193 = vadd.f32 0.0, %v1192
      %v1194 = vpop.f32.mrb[0].mxu0
      %v1195 = vpop.f32.mrb[0].mxu0
      %v1196 = vadd.f32 0.0, %v1195
      %v1197 = vpop.f32.mrb[0].mxu0
      %1198 = vmatprep.mubr.bf16.mxu0 0
      %1199 = vmatmul.mubr.bf16.gmra.mrb[0].mxu0 %v1100
      %v1200 = vpop.f32.mrb[0].mxu0
      %v1201 = vadd.f32 0.0, %v1200
      %v1202 = vpop.f32.mrb[0].mxu0
      %v1203 = vpop.f32.mrb[0].mxu0
      %v1204 = vadd.f32 0.0, %v1203
      %v1205 = vpop.f32.mrb[0].mxu0
      %1206 = vmatprep.mubr.bf16.mxu0 0
      %1207 = vmatmul.mubr.bf16.gmra.mrb[0].mxu0 %v1102
      %v1208 = vpop.f32.mrb[0].mxu0
      %v1209 = vadd.f32 0.0, %v1208
      %v1210 = vpop.f32.mrb[0].mxu0
      %v1211 = vpop.f32.mrb[0].mxu0
      %v1212 = vadd.f32 0.0, %v1211
      %v1213 = vpop.f32.mrb[0].mxu0
      %1214 = vmatprep.mubr.bf16.mxu0 0
      %1215 = vmatmul.mubr.bf16.gmra.mrb[0].mxu0 %v1104
      %v1216 = vpop.f32.mrb[0].mxu0
      %v1217 = vadd.f32 0.0, %v1216
      %v1218 = vpop.f32.mrb[0].mxu0
      %v1219 = vpop.f32.mrb[0].mxu0
      %v1220 = vadd.f32 0.0, %v1219
      %v1221 = vpop.f32.mrb[0].mxu0
      %1222 = vdwg.mxu0
      %v1225 = vunpack.c.l.b16 %v691
      %v1226 = vunpack.c.l.b16 %v692
      %v1227 = vpack.c.b16 %v1226, %v1225
      %v1228 = vsel %vm1085, %v672, 0
      %v1230 = vsel %vm1085, %v674, 0
      %v1232 = vsel %vm1085, %v676, 0
      %v1234 = vsel %vm1085, %v678, 0
      %v1236 = vsel %vm1085, %v680, 0
      %v1238 = vsel %vm1085, %v682, 0
      %v1240 = vsel %vm1085, %v684, 0
      %v1242 = vsel %vm1085, %v686, 0
      %v1244 = vsel %vm1085, %v688, 0
      %v1246 = vsel %vm1085, %v690, 0
      %v1249 = vsel %vm1106, %v1227, 0
      %1251 = vmatprep.subr.bf16.mxu0 0
      %1252 = vmatpush1.bf16.msra.mxu0 %v1249
      %1253 = vmatprep.subr.bf16.mxu0 0
      %1254 = vmatpush1.bf16.msra.mxu0 0
      %1255 = vmatprep.subr.bf16.mxu0 0
      %1256 = vmatpush1.bf16.msra.mxu0 0
      %1257 = vmatprep.subr.bf16.mxu0 0
      %1258 = vmatpush1.bf16.msra.mxu0 0
      %1259 = vmatprep.subr.bf16.mxu0 0
      %1260 = vmatpush1.bf16.msra.mxu0 0
      %1261 = vmatprep.subr.bf16.mxu0 0
      %1262 = vmatpush1.bf16.msra.mxu0 0
      %1263 = vmatprep.subr.bf16.mxu0 0
      %1264 = vmatpush1.bf16.msra.mxu0 0
      %1265 = vmatprep.subr.bf16.mxu0 0
      %1266 = vmatpush1.bf16.msra.mxu0 0
      %1267 = vmatprep.subr.bf16.mxu0 0
      %1268 = vmatpush1.bf16.msra.mxu0 0
      %1269 = vmatprep.subr.bf16.mxu0 0
      %1270 = vmatpush1.bf16.msra.mxu0 0
      %1271 = vmatprep.subr.bf16.mxu0 0
      %1272 = vmatpush1.bf16.msra.mxu0 0
      %1273 = vmatprep.subr.bf16.mxu0 0
      %1274 = vmatpush1.bf16.msra.mxu0 0
      %1275 = vmatprep.subr.bf16.mxu0 0
      %1276 = vmatpush1.bf16.msra.mxu0 0
      %1277 = vmatprep.subr.bf16.mxu0 0
      %1278 = vmatpush1.bf16.msra.mxu0 0
      %1279 = vmatprep.subr.bf16.mxu0 0
      %1280 = vmatpush1.bf16.msra.mxu0 0
      %1281 = vmatprep.subr.bf16.mxu0 0
      %1282 = vmatpush1.bf16.msra.mxu0 0
      %1283 = vmatprep.mubr.bf16.mxu0 0
      %1284 = vmatmul.mubr.bf16.gmra.mrb[0].mxu0 %v1228
      %v1285 = vpop.f32.mrb[0].mxu0
      %v1286 = vadd.f32 %v1145, %v1285
      %v1287 = vpop.f32.mrb[0].mxu0
      %v1288 = vpop.f32.mrb[0].mxu0
      %v1289 = vadd.f32 %v1148, %v1288
      %v1290 = vpop.f32.mrb[0].mxu0
      %1291 = vmatprep.mubr.bf16.mxu0 0
      %1292 = vmatmul.mubr.bf16.gmra.mrb[0].mxu0 %v1230
      %v1293 = vpop.f32.mrb[0].mxu0
      %v1294 = vadd.f32 %v1153, %v1293
      %v1295 = vpop.f32.mrb[0].mxu0
      %v1296 = vpop.f32.mrb[0].mxu0
      %v1297 = vadd.f32 %v1156, %v1296
      %v1298 = vpop.f32.mrb[0].mxu0
      %1299 = vmatprep.mubr.bf16.mxu0 0
      %1300 = vmatmul.mubr.bf16.gmra.mrb[0].mxu0 %v1232
      %v1301 = vpop.f32.mrb[0].mxu0
      %v1302 = vadd.f32 %v1161, %v1301
      %v1303 = vpop.f32.mrb[0].mxu0
      %v1304 = vpop.f32.mrb[0].mxu0
      %v1305 = vadd.f32 %v1164, %v1304
      %v1306 = vpop.f32.mrb[0].mxu0
      %1307 = vmatprep.mubr.bf16.mxu0 0
      %1308 = vmatmul.mubr.bf16.gmra.mrb[0].mxu0 %v1234
      %v1309 = vpop.f32.mrb[0].mxu0
      %v1310 = vadd.f32 %v1169, %v1309
      %v1311 = vpop.f32.mrb[0].mxu0
      %v1312 = vpop.f32.mrb[0].mxu0
      %v1313 = vadd.f32 %v1172, %v1312
      %v1314 = vpop.f32.mrb[0].mxu0
      %1315 = vmatprep.mubr.bf16.mxu0 0
      %1316 = vmatmul.mubr.bf16.gmra.mrb[0].mxu0 %v1236
      %v1317 = vpop.f32.mrb[0].mxu0
      %v1318 = vadd.f32 %v1177, %v1317
      %v1319 = vpop.f32.mrb[0].mxu0
      %v1320 = vpop.f32.mrb[0].mxu0
      %v1321 = vadd.f32 %v1180, %v1320
      %v1322 = vpop.f32.mrb[0].mxu0
      %1323 = vmatprep.mubr.bf16.mxu0 0
      %1324 = vmatmul.mubr.bf16.gmra.mrb[0].mxu0 %v1238
      %v1325 = vpop.f32.mrb[0].mxu0
      %v1326 = vadd.f32 %v1185, %v1325
      %v1327 = vpop.f32.mrb[0].mxu0
      %v1328 = vpop.f32.mrb[0].mxu0
      %v1329 = vadd.f32 %v1188, %v1328
      %v1330 = vpop.f32.mrb[0].mxu0
      %1331 = vmatprep.mubr.bf16.mxu0 0
      %1332 = vmatmul.mubr.bf16.gmra.mrb[0].mxu0 %v1240
      %v1333 = vpop.f32.mrb[0].mxu0
      %v1334 = vadd.f32 %v1193, %v1333
      %v1335 = vpop.f32.mrb[0].mxu0
      %v1336 = vpop.f32.mrb[0].mxu0
      %v1337 = vadd.f32 %v1196, %v1336
      %v1338 = vpop.f32.mrb[0].mxu0
      %1339 = vmatprep.mubr.bf16.mxu0 0
      %1340 = vmatmul.mubr.bf16.gmra.mrb[0].mxu0 %v1242
      %v1341 = vpop.f32.mrb[0].mxu0
      %v1342 = vadd.f32 %v1201, %v1341
      %v1343 = vpop.f32.mrb[0].mxu0
      %v1344 = vpop.f32.mrb[0].mxu0
      %v1345 = vadd.f32 %v1204, %v1344
      %v1346 = vpop.f32.mrb[0].mxu0
      %1347 = vmatprep.mubr.bf16.mxu0 0
      %1348 = vmatmul.mubr.bf16.gmra.mrb[0].mxu0 %v1244
      %v1349 = vpop.f32.mrb[0].mxu0
      %v1350 = vadd.f32 %v1209, %v1349
      %v1351 = vpop.f32.mrb[0].mxu0
      %v1352 = vpop.f32.mrb[0].mxu0
      %v1353 = vadd.f32 %v1212, %v1352
      %v1354 = vpop.f32.mrb[0].mxu0
      %1355 = vmatprep.mubr.bf16.mxu0 0
      %1356 = vmatmul.mubr.bf16.gmra.mrb[0].mxu0 %v1246
      %v1357 = vpop.f32.mrb[0].mxu0
      %v1358 = vadd.f32 %v1217, %v1357
      %v1359 = vpop.f32.mrb[0].mxu0
      %v1360 = vpop.f32.mrb[0].mxu0
      %v1361 = vadd.f32 %v1220, %v1360
      %v1362 = vpop.f32.mrb[0].mxu0
      %1363 = vdwg.mxu0
      %s1364 = sadd.s32 %s303, 2
      %s1365 = smul.u32 %s1364, 3
      %s1366 = smul.addr %s1365, 4
      %s1367 = scalar_lea.vmem %s291, %s1366
      %v1368 = vld [vmem:[%s1367] sm:$0xf]
      %v1369 = vld [vmem:[%s1367 + $0x4] sm:$0xf]
      %v1370 = vld [vmem:[%s1367 + $0xc] sm:$0xf]
      %v1371 = vld [vmem:[%s1367 + $0x10] sm:$0xf]
      %v1372 = vld [vmem:[%s1367 + $0x18] sm:$0xf]
      %v1373 = vld [vmem:[%s1367 + $0x1c] sm:$0xf]
      %v1374 = vld [vmem:[%s1367 + $0x24] sm:$0xf]
      %v1375 = vld [vmem:[%s1367 + $0x28] sm:$0xf]
      %v1376 = vld [vmem:[%s1367 + $0x30] sm:$0xf]
      %v1377 = vld [vmem:[%s1367 + $0x34] sm:$0xf]
      %v1378 = vld [vmem:[%s1367 + $0x3c] sm:$0xf]
      %v1379 = vld [vmem:[%s1367 + $0x40] sm:$0xf]
      %v1380 = vld [vmem:[%s1367 + $0x48] sm:$0xf]
      %v1381 = vld [vmem:[%s1367 + $0x4c] sm:$0xf]
      %v1382 = vld [vmem:[%s1367 + $0x54] sm:$0xf]
      %v1383 = vld [vmem:[%s1367 + $0x58] sm:$0xf]
      %v1384 = vld [vmem:[%s1367 + $0x60] sm:$0xf]
      %v1385 = vld [vmem:[%s1367 + $0x64] sm:$0xf]
      %v1386 = vld [vmem:[%s1367 + $0x6c] sm:$0xf]
      %v1387 = vld [vmem:[%s1367 + $0x70] sm:$0xf]
      %v1388 = vld [vmem:[%s1367 + $0x8] sm:$0x1]
      %v1389 = vld [vmem:[%s1367 + $0x14] sm:$0x1]
      %v1390 = vld [vmem:[%s1367 + $0x20] sm:$0x1]
      %v1391 = vld [vmem:[%s1367 + $0x2c] sm:$0x1]
      %v1392 = vld [vmem:[%s1367 + $0x38] sm:$0x1]
      %v1393 = vld [vmem:[%s1367 + $0x44] sm:$0x1]
      %v1394 = vld [vmem:[%s1367 + $0x50] sm:$0x1]
      %v1395 = vld [vmem:[%s1367 + $0x5c] sm:$0x1]
      %v1396 = vld [vmem:[%s1367 + $0x68] sm:$0x1]
      %v1397 = vld [vmem:[%s1367 + $0x74] sm:$0x1]
      %v1398 = vld [vmem:[%s1367] sm:$0xe]
      %v1399 = vld [vmem:[%s1367 + $0xc] sm:$0xe]
      %v1400 = vld [vmem:[%s1367 + $0x18] sm:$0xe]
      %v1401 = vld [vmem:[%s1367 + $0x24] sm:$0xe]
      %v1402 = vld [vmem:[%s1367 + $0x30] sm:$0xe]
      %v1403 = vld [vmem:[%s1367 + $0x3c] sm:$0xe]
      %v1404 = vld [vmem:[%s1367 + $0x48] sm:$0xe]
      %v1405 = vld [vmem:[%s1367 + $0x54] sm:$0xe]
      %v1406 = vld [vmem:[%s1367 + $0x60] sm:$0xe]
      %v1407 = vld [vmem:[%s1367 + $0x6c] sm:$0xe]
      %v1428 = vunpack.c.l.b16 %v1368
      %v1429 = vunpack.c.l.b16 %v1369
      %v1430 = vunpack.c.l.b16 %v1370
      %v1431 = vunpack.c.l.b16 %v1371
      %v1432 = vunpack.c.l.b16 %v1372
      %v1433 = vunpack.c.l.b16 %v1373
      %v1434 = vunpack.c.l.b16 %v1374
      %v1435 = vunpack.c.l.b16 %v1375
      %v1436 = vunpack.c.l.b16 %v1376
      %v1437 = vunpack.c.l.b16 %v1377
      %v1438 = vunpack.c.l.b16 %v1378
      %v1439 = vunpack.c.l.b16 %v1379
      %v1440 = vunpack.c.l.b16 %v1380
      %v1441 = vunpack.c.l.b16 %v1381
      %v1442 = vunpack.c.l.b16 %v1382
      %v1443 = vunpack.c.l.b16 %v1383
      %v1444 = vunpack.c.l.b16 %v1384
      %v1445 = vunpack.c.l.b16 %v1385
      %v1446 = vunpack.c.l.b16 %v1386
      %v1447 = vunpack.c.l.b16 %v1387
      %v1448 = vpack.c.b16 %v1429, %v1428
      %v1449 = vpack.c.b16 %v1431, %v1430
      %v1450 = vpack.c.b16 %v1433, %v1432
      %v1451 = vpack.c.b16 %v1435, %v1434
      %v1452 = vpack.c.b16 %v1437, %v1436
      %v1453 = vpack.c.b16 %v1439, %v1438
      %v1454 = vpack.c.b16 %v1441, %v1440
      %v1455 = vpack.c.b16 %v1443, %v1442
      %v1456 = vpack.c.b16 %v1445, %v1444
      %v1457 = vpack.c.b16 %v1447, %v1446
      %v1468 = vunpack.c.l.b16 %v1388
      %v1469 = vunpack.c.l.b16 %v1389
      %v1470 = vunpack.c.l.b16 %v1390
      %v1471 = vunpack.c.l.b16 %v1391
      %v1472 = vunpack.c.l.b16 %v1392
      %v1473 = vunpack.c.l.b16 %v1393
      %v1474 = vunpack.c.l.b16 %v1394
      %v1475 = vunpack.c.l.b16 %v1395
      %v1476 = vunpack.c.l.b16 %v1396
      %v1477 = vunpack.c.l.b16 %v1397
      %v1478 = vpack.c.b16 %v1468, %v1468
      %v1479 = vpack.c.b16 %v1469, %v1469
      %v1480 = vpack.c.b16 %v1470, %v1470
      %v1481 = vpack.c.b16 %v1471, %v1471
      %v1482 = vpack.c.b16 %v1472, %v1472
      %v1483 = vpack.c.b16 %v1473, %v1473
      %v1484 = vpack.c.b16 %v1474, %v1474
      %v1485 = vpack.c.b16 %v1475, %v1475
      %v1486 = vpack.c.b16 %v1476, %v1476
      %v1487 = vpack.c.b16 %v1477, %v1477
      %v1489 = vshrl.u32 %v1448, 16
      %v1491 = vshll.u32 %v1448, 16
      %v1493 = vrot.slane %v1491, 1
      %v1494 = vor.u32 %v1489, %v1493
      %v1496 = vshll.u32 %v1478, 16
      %v1498 = vrot.slane %v1496, 1
      %v1499 = vsel %vm427, %v1494, %v1498
      %v1501 = vshrl.u32 %v1449, 16
      %v1503 = vshll.u32 %v1449, 16
      %v1505 = vrot.slane %v1503, 1
      %v1506 = vor.u32 %v1501, %v1505
      %v1508 = vshll.u32 %v1479, 16
      %v1510 = vrot.slane %v1508, 1
      %v1511 = vsel %vm427, %v1506, %v1510
      %v1513 = vshrl.u32 %v1450, 16
      %v1515 = vshll.u32 %v1450, 16
      %v1517 = vrot.slane %v1515, 1
      %v1518 = vor.u32 %v1513, %v1517
      %v1520 = vshll.u32 %v1480, 16
      %v1522 = vrot.slane %v1520, 1
      %v1523 = vsel %vm427, %v1518, %v1522
      %v1525 = vshrl.u32 %v1451, 16
      %v1527 = vshll.u32 %v1451, 16
      %v1529 = vrot.slane %v1527, 1
      %v1530 = vor.u32 %v1525, %v1529
      %v1532 = vshll.u32 %v1481, 16
      %v1534 = vrot.slane %v1532, 1
      %v1535 = vsel %vm427, %v1530, %v1534
      %v1537 = vshrl.u32 %v1452, 16
      %v1539 = vshll.u32 %v1452, 16
      %v1541 = vrot.slane %v1539, 1
      %v1542 = vor.u32 %v1537, %v1541
      %v1544 = vshll.u32 %v1482, 16
      %v1546 = vrot.slane %v1544, 1
      %v1547 = vsel %vm427, %v1542, %v1546
      %v1549 = vshrl.u32 %v1453, 16
      %v1551 = vshll.u32 %v1453, 16
      %v1553 = vrot.slane %v1551, 1
      %v1554 = vor.u32 %v1549, %v1553
      %v1556 = vshll.u32 %v1483, 16
      %v1558 = vrot.slane %v1556, 1
      %v1559 = vsel %vm427, %v1554, %v1558
      %v1561 = vshrl.u32 %v1454, 16
      %v1563 = vshll.u32 %v1454, 16
      %v1565 = vrot.slane %v1563, 1
      %v1566 = vor.u32 %v1561, %v1565
      %v1568 = vshll.u32 %v1484, 16
      %v1570 = vrot.slane %v1568, 1
      %v1571 = vsel %vm427, %v1566, %v1570
      %v1573 = vshrl.u32 %v1455, 16
      %v1575 = vshll.u32 %v1455, 16
      %v1577 = vrot.slane %v1575, 1
      %v1578 = vor.u32 %v1573, %v1577
      %v1580 = vshll.u32 %v1485, 16
      %v1582 = vrot.slane %v1580, 1
      %v1583 = vsel %vm427, %v1578, %v1582
      %v1585 = vshrl.u32 %v1456, 16
      %v1587 = vshll.u32 %v1456, 16
      %v1589 = vrot.slane %v1587, 1
      %v1590 = vor.u32 %v1585, %v1589
      %v1592 = vshll.u32 %v1486, 16
      %v1594 = vrot.slane %v1592, 1
      %v1595 = vsel %vm427, %v1590, %v1594
      %v1597 = vshrl.u32 %v1457, 16
      %v1599 = vshll.u32 %v1457, 16
      %v1601 = vrot.slane %v1599, 1
      %v1602 = vor.u32 %v1597, %v1601
      %v1604 = vshll.u32 %v1487, 16
      %v1606 = vrot.slane %v1604, 1
      %v1607 = vsel %vm427, %v1602, %v1606
      %1608 = vrot.lane.b32.xlu0 %v1499, 4
      %v1609 = vpop.permute.xlu0 %1608
      %1610 = vrot.lane.b32.xlu0 %v1511, 4
      %v1611 = vpop.permute.xlu0 %1610
      %1612 = vrot.lane.b32.xlu0 %v1523, 4
      %v1613 = vpop.permute.xlu0 %1612
      %1614 = vrot.lane.b32.xlu0 %v1535, 4
      %v1615 = vpop.permute.xlu0 %1614
      %1616 = vrot.lane.b32.xlu0 %v1547, 4
      %v1617 = vpop.permute.xlu0 %1616
      %1618 = vrot.lane.b32.xlu0 %v1559, 4
      %v1619 = vpop.permute.xlu0 %1618
      %1620 = vrot.lane.b32.xlu0 %v1571, 4
      %v1621 = vpop.permute.xlu0 %1620
      %1622 = vrot.lane.b32.xlu0 %v1583, 4
      %v1623 = vpop.permute.xlu0 %1622
      %1624 = vrot.lane.b32.xlu0 %v1595, 4
      %v1625 = vpop.permute.xlu0 %1624
      %1626 = vrot.lane.b32.xlu0 %v1607, 4
      %v1627 = vpop.permute.xlu0 %1626
      %v1638 = vunpack.c.l.b16 %v1398
      %v1639 = vunpack.c.l.b16 %v1399
      %v1640 = vunpack.c.l.b16 %v1400
      %v1641 = vunpack.c.l.b16 %v1401
      %v1642 = vunpack.c.l.b16 %v1402
      %v1643 = vunpack.c.l.b16 %v1403
      %v1644 = vunpack.c.l.b16 %v1404
      %v1645 = vunpack.c.l.b16 %v1405
      %v1646 = vunpack.c.l.b16 %v1406
      %v1647 = vunpack.c.l.b16 %v1407
      %v1648 = vpack.c.b16 %v1429, %v1638
      %v1649 = vpack.c.b16 %v1431, %v1639
      %v1650 = vpack.c.b16 %v1433, %v1640
      %v1651 = vpack.c.b16 %v1435, %v1641
      %v1652 = vpack.c.b16 %v1437, %v1642
      %v1653 = vpack.c.b16 %v1439, %v1643
      %v1654 = vpack.c.b16 %v1441, %v1644
      %v1655 = vpack.c.b16 %v1443, %v1645
      %v1656 = vpack.c.b16 %v1445, %v1646
      %v1657 = vpack.c.b16 %v1447, %v1647
      %v1658 = vrot.slane %v1648, 1
      %v1659 = vrot.slane %v1478, 1
      %v1660 = vsel %vm598, %v1658, %v1659
      %v1661 = vrot.slane %v1649, 1
      %v1662 = vrot.slane %v1479, 1
      %v1663 = vsel %vm598, %v1661, %v1662
      %v1664 = vrot.slane %v1650, 1
      %v1665 = vrot.slane %v1480, 1
      %v1666 = vsel %vm598, %v1664, %v1665
      %v1667 = vrot.slane %v1651, 1
      %v1668 = vrot.slane %v1481, 1
      %v1669 = vsel %vm598, %v1667, %v1668
      %v1670 = vrot.slane %v1652, 1
      %v1671 = vrot.slane %v1482, 1
      %v1672 = vsel %vm598, %v1670, %v1671
      %v1673 = vrot.slane %v1653, 1
      %v1674 = vrot.slane %v1483, 1
      %v1675 = vsel %vm598, %v1673, %v1674
      %v1676 = vrot.slane %v1654, 1
      %v1677 = vrot.slane %v1484, 1
      %v1678 = vsel %vm598, %v1676, %v1677
      %v1679 = vrot.slane %v1655, 1
      %v1680 = vrot.slane %v1485, 1
      %v1681 = vsel %vm598, %v1679, %v1680
      %v1682 = vrot.slane %v1656, 1
      %v1683 = vrot.slane %v1486, 1
      %v1684 = vsel %vm598, %v1682, %v1683
      %v1685 = vrot.slane %v1657, 1
      %v1686 = vrot.slane %v1487, 1
      %v1687 = vsel %vm598, %v1685, %v1686
      %1688 = vrot.lane.b32.xlu0 %v1660, 8
      %v1689 = vpop.permute.xlu0 %1688
      %1690 = vrot.lane.b32.xlu0 %v1663, 8
      %v1691 = vpop.permute.xlu0 %1690
      %1692 = vrot.lane.b32.xlu0 %v1666, 8
      %v1693 = vpop.permute.xlu0 %1692
      %1694 = vrot.lane.b32.xlu0 %v1669, 8
      %v1695 = vpop.permute.xlu0 %1694
      %1696 = vrot.lane.b32.xlu0 %v1672, 8
      %v1697 = vpop.permute.xlu0 %1696
      %1698 = vrot.lane.b32.xlu0 %v1675, 8
      %v1699 = vpop.permute.xlu0 %1698
      %1700 = vrot.lane.b32.xlu0 %v1678, 8
      %v1701 = vpop.permute.xlu0 %1700
      %1702 = vrot.lane.b32.xlu0 %v1681, 8
      %v1703 = vpop.permute.xlu0 %1702
      %1704 = vrot.lane.b32.xlu0 %v1684, 8
      %v1705 = vpop.permute.xlu0 %1704
      %1706 = vrot.lane.b32.xlu0 %v1687, 8
      %v1707 = vpop.permute.xlu0 %1706
      %v1709 = vsel %vm649, %v1448, %v1609
      %v1711 = vsel %vm649, %v1449, %v1611
      %v1713 = vsel %vm649, %v1450, %v1613
      %v1715 = vsel %vm649, %v1451, %v1615
      %v1717 = vsel %vm649, %v1452, %v1617
      %v1719 = vsel %vm649, %v1453, %v1619
      %v1721 = vsel %vm649, %v1454, %v1621
      %v1723 = vsel %vm649, %v1455, %v1623
      %v1725 = vsel %vm649, %v1456, %v1625
      %v1727 = vsel %vm649, %v1457, %v1627
      %v1729 = vsel %vm670, %v1709, %v1689
      %v1731 = vsel %vm670, %v1711, %v1691
      %v1733 = vsel %vm670, %v1713, %v1693
      %v1735 = vsel %vm670, %v1715, %v1695
      %v1737 = vsel %vm670, %v1717, %v1697
      %v1739 = vsel %vm670, %v1719, %v1699
      %v1741 = vsel %vm670, %v1721, %v1701
      %v1743 = vsel %vm670, %v1723, %v1703
      %v1745 = vsel %vm670, %v1725, %v1705
      %v1747 = vsel %vm670, %v1727, %v1707
      %s1748 = scalar_lea.vmem %s1, 16
      %v1749 = vld [vmem:[%s1748] sm:$0xf]
      %v1750 = vld [vmem:[%s1748 + $0x4] sm:$0x3]
      %v1753 = vunpack.c.l.b16 %v1749
      %v1754 = vunpack.c.l.b16 %v1750
      %v1755 = vpack.c.b16 %v1754, %v1753
      %v1756 = vsel %vm1085, %v1729, 0
      %v1758 = vsel %vm1085, %v1731, 0
      %v1760 = vsel %vm1085, %v1733, 0
      %v1762 = vsel %vm1085, %v1735, 0
      %v1764 = vsel %vm1085, %v1737, 0
      %v1766 = vsel %vm1085, %v1739, 0
      %v1768 = vsel %vm1085, %v1741, 0
      %v1770 = vsel %vm1085, %v1743, 0
      %v1772 = vsel %vm1085, %v1745, 0
      %v1774 = vsel %vm1085, %v1747, 0
      %v1777 = vsel %vm1106, %v1755, 0
      %1779 = vmatprep.subr.bf16.mxu0 0
      %1780 = vmatpush1.bf16.msra.mxu0 %v1777
      %1781 = vmatprep.subr.bf16.mxu0 0
      %1782 = vmatpush1.bf16.msra.mxu0 0
      %1783 = vmatprep.subr.bf16.mxu0 0
      %1784 = vmatpush1.bf16.msra.mxu0 0
      %1785 = vmatprep.subr.bf16.mxu0 0
      %1786 = vmatpush1.bf16.msra.mxu0 0
      %1787 = vmatprep.subr.bf16.mxu0 0
      %1788 = vmatpush1.bf16.msra.mxu0 0
      %1789 = vmatprep.subr.bf16.mxu0 0
      %1790 = vmatpush1.bf16.msra.mxu0 0
      %1791 = vmatprep.subr.bf16.mxu0 0
      %1792 = vmatpush1.bf16.msra.mxu0 0
      %1793 = vmatprep.subr.bf16.mxu0 0
      %1794 = vmatpush1.bf16.msra.mxu0 0
      %1795 = vmatprep.subr.bf16.mxu0 0
      %1796 = vmatpush1.bf16.msra.mxu0 0
      %1797 = vmatprep.subr.bf16.mxu0 0
      %1798 = vmatpush1.bf16.msra.mxu0 0
      %1799 = vmatprep.subr.bf16.mxu0 0
      %1800 = vmatpush1.bf16.msra.mxu0 0
      %1801 = vmatprep.subr.bf16.mxu0 0
      %1802 = vmatpush1.bf16.msra.mxu0 0
      %1803 = vmatprep.subr.bf16.mxu0 0
      %1804 = vmatpush1.bf16.msra.mxu0 0
      %1805 = vmatprep.subr.bf16.mxu0 0
      %1806 = vmatpush1.bf16.msra.mxu0 0
      %1807 = vmatprep.subr.bf16.mxu0 0
      %1808 = vmatpush1.bf16.msra.mxu0 0
      %1809 = vmatprep.subr.bf16.mxu0 0
      %1810 = vmatpush1.bf16.msra.mxu0 0
      %1811 = vmatprep.mubr.bf16.mxu0 0
      %1812 = vmatmul.mubr.bf16.gmra.mrb[0].mxu0 %v1756
      %v1813 = vpop.f32.mrb[0].mxu0
      %v1814 = vadd.f32 0.0, %v1813
      %v1815 = vpop.f32.mrb[0].mxu0
      %v1816 = vpop.f32.mrb[0].mxu0
      %v1817 = vadd.f32 0.0, %v1816
      %v1818 = vpop.f32.mrb[0].mxu0
      %1819 = vmatprep.mubr.bf16.mxu0 0
      %1820 = vmatmul.mubr.bf16.gmra.mrb[0].mxu0 %v1758
      %v1821 = vpop.f32.mrb[0].mxu0
      %v1822 = vadd.f32 0.0, %v1821
      %v1823 = vpop.f32.mrb[0].mxu0
      %v1824 = vpop.f32.mrb[0].mxu0
      %v1825 = vadd.f32 0.0, %v1824
      %v1826 = vpop.f32.mrb[0].mxu0
      %1827 = vmatprep.mubr.bf16.mxu0 0
      %1828 = vmatmul.mubr.bf16.gmra.mrb[0].mxu0 %v1760
      %v1829 = vpop.f32.mrb[0].mxu0
      %v1830 = vadd.f32 0.0, %v1829
      %v1831 = vpop.f32.mrb[0].mxu0
      %v1832 = vpop.f32.mrb[0].mxu0
      %v1833 = vadd.f32 0.0, %v1832
      %v1834 = vpop.f32.mrb[0].mxu0
      %1835 = vmatprep.mubr.bf16.mxu0 0
      %1836 = vmatmul.mubr.bf16.gmra.mrb[0].mxu0 %v1762
      %v1837 = vpop.f32.mrb[0].mxu0
      %v1838 = vadd.f32 0.0, %v1837
      %v1839 = vpop.f32.mrb[0].mxu0
      %v1840 = vpop.f32.mrb[0].mxu0
      %v1841 = vadd.f32 0.0, %v1840
      %v1842 = vpop.f32.mrb[0].mxu0
      %1843 = vmatprep.mubr.bf16.mxu0 0
      %1844 = vmatmul.mubr.bf16.gmra.mrb[0].mxu0 %v1764
      %v1845 = vpop.f32.mrb[0].mxu0
      %v1846 = vadd.f32 0.0, %v1845
      %v1847 = vpop.f32.mrb[0].mxu0
      %v1848 = vpop.f32.mrb[0].mxu0
      %v1849 = vadd.f32 0.0, %v1848
      %v1850 = vpop.f32.mrb[0].mxu0
      %1851 = vmatprep.mubr.bf16.mxu0 0
      %1852 = vmatmul.mubr.bf16.gmra.mrb[0].mxu0 %v1766
      %v1853 = vpop.f32.mrb[0].mxu0
      %v1854 = vadd.f32 0.0, %v1853
      %v1855 = vpop.f32.mrb[0].mxu0
      %v1856 = vpop.f32.mrb[0].mxu0
      %v1857 = vadd.f32 0.0, %v1856
      %v1858 = vpop.f32.mrb[0].mxu0
      %1859 = vmatprep.mubr.bf16.mxu0 0
      %1860 = vmatmul.mubr.bf16.gmra.mrb[0].mxu0 %v1768
      %v1861 = vpop.f32.mrb[0].mxu0
      %v1862 = vadd.f32 0.0, %v1861
      %v1863 = vpop.f32.mrb[0].mxu0
      %v1864 = vpop.f32.mrb[0].mxu0
      %v1865 = vadd.f32 0.0, %v1864
      %v1866 = vpop.f32.mrb[0].mxu0
      %1867 = vmatprep.mubr.bf16.mxu0 0
      %1868 = vmatmul.mubr.bf16.gmra.mrb[0].mxu0 %v1770
      %v1869 = vpop.f32.mrb[0].mxu0
      %v1870 = vadd.f32 0.0, %v1869
      %v1871 = vpop.f32.mrb[0].mxu0
      %v1872 = vpop.f32.mrb[0].mxu0
      %v1873 = vadd.f32 0.0, %v1872
      %v1874 = vpop.f32.mrb[0].mxu0
      %1875 = vmatprep.mubr.bf16.mxu0 0
      %1876 = vmatmul.mubr.bf16.gmra.mrb[0].mxu0 %v1772
      %v1877 = vpop.f32.mrb[0].mxu0
      %v1878 = vadd.f32 0.0, %v1877
      %v1879 = vpop.f32.mrb[0].mxu0
      %v1880 = vpop.f32.mrb[0].mxu0
      %v1881 = vadd.f32 0.0, %v1880
      %v1882 = vpop.f32.mrb[0].mxu0
      %1883 = vmatprep.mubr.bf16.mxu0 0
      %1884 = vmatmul.mubr.bf16.gmra.mrb[0].mxu0 %v1774
      %v1885 = vpop.f32.mrb[0].mxu0
      %v1886 = vadd.f32 0.0, %v1885
      %v1887 = vpop.f32.mrb[0].mxu0
      %v1888 = vpop.f32.mrb[0].mxu0
      %v1889 = vadd.f32 0.0, %v1888
      %v1890 = vpop.f32.mrb[0].mxu0
      %1891 = vdwg.mxu0
      %v1892 = vadd.f32 %v1286, %v1814
      %v1893 = vadd.f32 %v1289, %v1817
      %v1894 = vadd.f32 %v1294, %v1822
      %v1895 = vadd.f32 %v1297, %v1825
      %v1896 = vadd.f32 %v1302, %v1830
      %v1897 = vadd.f32 %v1305, %v1833
      %v1898 = vadd.f32 %v1310, %v1838
      %v1899 = vadd.f32 %v1313, %v1841
      %v1900 = vadd.f32 %v1318, %v1846
      %v1901 = vadd.f32 %v1321, %v1849
      %v1902 = vadd.f32 %v1326, %v1854
      %v1903 = vadd.f32 %v1329, %v1857
      %v1904 = vadd.f32 %v1334, %v1862
      %v1905 = vadd.f32 %v1337, %v1865
      %v1906 = vadd.f32 %v1342, %v1870
      %v1907 = vadd.f32 %v1345, %v1873
      %v1908 = vadd.f32 %v1350, %v1878
      %v1909 = vadd.f32 %v1353, %v1881
      %v1910 = vadd.f32 %v1358, %v1886
      %v1911 = vadd.f32 %v1361, %v1889
      %v1912 = vld [vmem:[%s2] sm:$0x1]
      %v1914 = vlaneseq
      %v1915 = vshrl.u32 %v1914, 7
      %v1916 = vsub.s32 0, %v1915
      %v1917 = vrot.slane %v1912, %v1916
      %v1919 = vadd.f32 %v1892, %v1917
      %v1920 = vadd.f32 %v1893, %v1917
      %v1921 = vadd.f32 %v1894, %v1917
      %v1922 = vadd.f32 %v1895, %v1917
      %v1923 = vadd.f32 %v1896, %v1917
      %v1924 = vadd.f32 %v1897, %v1917
      %v1925 = vadd.f32 %v1898, %v1917
      %v1926 = vadd.f32 %v1899, %v1917
      %v1927 = vadd.f32 %v1900, %v1917
      %v1928 = vadd.f32 %v1901, %v1917
      %v1929 = vadd.f32 %v1902, %v1917
      %v1930 = vadd.f32 %v1903, %v1917
      %v1931 = vadd.f32 %v1904, %v1917
      %v1932 = vadd.f32 %v1905, %v1917
      %v1933 = vadd.f32 %v1906, %v1917
      %v1934 = vadd.f32 %v1907, %v1917
      %v1935 = vadd.f32 %v1908, %v1917
      %v1936 = vadd.f32 %v1909, %v1917
      %v1937 = vadd.f32 %v1910, %v1917
      %v1938 = vadd.f32 %v1911, %v1917
      %v1939 = vmax.f32 %v1919, 0.0
      %v1940 = vmax.f32 %v1920, 0.0
      %v1941 = vmax.f32 %v1921, 0.0
      %v1942 = vmax.f32 %v1922, 0.0
      %v1943 = vmax.f32 %v1923, 0.0
      %v1944 = vmax.f32 %v1924, 0.0
      %v1945 = vmax.f32 %v1925, 0.0
      %v1946 = vmax.f32 %v1926, 0.0
      %v1947 = vmax.f32 %v1927, 0.0
      %v1948 = vmax.f32 %v1928, 0.0
      %v1949 = vmax.f32 %v1929, 0.0
      %v1950 = vmax.f32 %v1930, 0.0
      %v1951 = vmax.f32 %v1931, 0.0
      %v1952 = vmax.f32 %v1932, 0.0
      %v1953 = vmax.f32 %v1933, 0.0
      %v1954 = vmax.f32 %v1934, 0.0
      %v1955 = vmax.f32 %v1935, 0.0
      %v1956 = vmax.f32 %v1936, 0.0
      %v1957 = vmax.f32 %v1937, 0.0
      %v1958 = vmax.f32 %v1938, 0.0
      %v1959 = vpack.c.bf16 %v1940, %v1939
      %v1960 = vpack.c.bf16 %v1942, %v1941
      %v1961 = vpack.c.bf16 %v1944, %v1943
      %v1962 = vpack.c.bf16 %v1946, %v1945
      %v1963 = vpack.c.bf16 %v1948, %v1947
      %v1964 = vpack.c.bf16 %v1950, %v1949
      %v1965 = vpack.c.bf16 %v1952, %v1951
      %v1966 = vpack.c.bf16 %v1954, %v1953
      %v1967 = vpack.c.bf16 %v1956, %v1955
      %v1968 = vpack.c.bf16 %v1958, %v1957
      %vm1969 = vcmask 60416
      %1970 = vst.msk [vmem:[#allocation2] sm:$0xf] %vm1969, 0
      %1971 = vst.msk [vmem:[#allocation2 + $0x10] sm:$0xf] %vm1969, 0
      %1972 = vst.msk [vmem:[#allocation2 + $0x20] sm:$0xf] %vm1969, 0
      %1973 = vst.msk [vmem:[#allocation2 + $0x30] sm:$0xf] %vm1969, 0
      %1974 = vst.msk [vmem:[#allocation2 + $0x40] sm:$0xf] %vm1969, 0
      %1975 = vst.msk [vmem:[#allocation2 + $0x50] sm:$0xf] %vm1969, 0
      %1976 = vst.msk [vmem:[#allocation2 + $0x60] sm:$0xf] %vm1969, 0
      %1977 = vst.msk [vmem:[#allocation2 + $0x70] sm:$0xf] %vm1969, 0
      %1978 = vst.msk [vmem:[#allocation2 + $0x80] sm:$0xf] %vm1969, 0
      %1979 = vst.msk [vmem:[#allocation2 + $0x90] sm:$0xf] %vm1969, 0
      %vm1980 = vcmask 64516
      %1981 = vst.msk [vmem:[#allocation2 + $0x8] sm:$0xf0] %vm1980, 0
      %1982 = vst.msk [vmem:[#allocation2 + $0x18] sm:$0xf0] %vm1980, 0
      %1983 = vst.msk [vmem:[#allocation2 + $0x28] sm:$0xf0] %vm1980, 0
      %1984 = vst.msk [vmem:[#allocation2 + $0x38] sm:$0xf0] %vm1980, 0
      %1985 = vst.msk [vmem:[#allocation2 + $0x48] sm:$0xf0] %vm1980, 0
      %1986 = vst.msk [vmem:[#allocation2 + $0x58] sm:$0xf0] %vm1980, 0
      %1987 = vst.msk [vmem:[#allocation2 + $0x68] sm:$0xf0] %vm1980, 0
      %1988 = vst.msk [vmem:[#allocation2 + $0x78] sm:$0xf0] %vm1980, 0
      %1989 = vst.msk [vmem:[#allocation2 + $0x88] sm:$0xf0] %vm1980, 0
      %1990 = vst.msk [vmem:[#allocation2 + $0x98] sm:$0xf0] %vm1980, 0
      %v2001 = vrot.slane %v1959, 4
      %v2002 = vrot.slane %v1960, 4
      %v2003 = vrot.slane %v1961, 4
      %v2004 = vrot.slane %v1962, 4
      %v2005 = vrot.slane %v1963, 4
      %v2006 = vrot.slane %v1964, 4
      %v2007 = vrot.slane %v1965, 4
      %v2008 = vrot.slane %v1966, 4
      %v2009 = vrot.slane %v1967, 4
      %v2010 = vrot.slane %v1968, 4
      %2021 = vst.msk [vmem:[#allocation2] sm:$0xf0] %vm1980, %v2001
      %2022 = vst.msk [vmem:[#allocation2 + $0x8] sm:$0xf] %vm1969, %v2001
      %2023 = vst.msk [vmem:[#allocation2 + $0x10] sm:$0xf0] %vm1980, %v2002
      %2024 = vst.msk [vmem:[#allocation2 + $0x18] sm:$0xf] %vm1969, %v2002
      %2025 = vst.msk [vmem:[#allocation2 + $0x20] sm:$0xf0] %vm1980, %v2003
      %2026 = vst.msk [vmem:[#allocation2 + $0x28] sm:$0xf] %vm1969, %v2003
      %2027 = vst.msk [vmem:[#allocation2 + $0x30] sm:$0xf0] %vm1980, %v2004
      %2028 = vst.msk [vmem:[#allocation2 + $0x38] sm:$0xf] %vm1969, %v2004
      %2029 = vst.msk [vmem:[#allocation2 + $0x40] sm:$0xf0] %vm1980, %v2005
      %2030 = vst.msk [vmem:[#allocation2 + $0x48] sm:$0xf] %vm1969, %v2005
      %2031 = vst.msk [vmem:[#allocation2 + $0x50] sm:$0xf0] %vm1980, %v2006
      %2032 = vst.msk [vmem:[#allocation2 + $0x58] sm:$0xf] %vm1969, %v2006
      %2033 = vst.msk [vmem:[#allocation2 + $0x60] sm:$0xf0] %vm1980, %v2007
      %2034 = vst.msk [vmem:[#allocation2 + $0x68] sm:$0xf] %vm1969, %v2007
      %2035 = vst.msk [vmem:[#allocation2 + $0x70] sm:$0xf0] %vm1980, %v2008
      %2036 = vst.msk [vmem:[#allocation2 + $0x78] sm:$0xf] %vm1969, %v2008
      %2037 = vst.msk [vmem:[#allocation2 + $0x80] sm:$0xf0] %vm1980, %v2009
      %2038 = vst.msk [vmem:[#allocation2 + $0x88] sm:$0xf] %vm1969, %v2009
      %2039 = vst.msk [vmem:[#allocation2 + $0x90] sm:$0xf0] %vm1980, %v2010
      %2040 = vst.msk [vmem:[#allocation2 + $0x98] sm:$0xf] %vm1969, %v2010
      %p2041 = scmp.eq.s32.totalorder %s23, 0
      // Predicated region
      $region49: #{tpu_custom_call.1} parent=47 // pred_check
        %p2042 = pneg %p2041
      $region50: #{tpu_custom_call.1} parent=47 // pred_check_branch
        %2044 = sbr.rel (%p2042) target = $region52
      $region51: #{tpu_custom_call.1} parent=47 // pred_region
        %2045 = vst.msk [vmem:[#allocation2] sm:$0xff] %vm670, 0
        %2046 = vst.msk [vmem:[#allocation2 + $0x8] sm:$0xff] %vm670, 0
      $region52: #{tpu_custom_call.1} parent=47 // pred_fallthru
        _
      %p2047 = scmp.eq.s32.totalorder %s23, 1
      // Predicated region
      $region53: #{tpu_custom_call.1} parent=47 // pred_check
        %p2048 = pneg %p2047
      $region54: #{tpu_custom_call.1} parent=47 // pred_check_branch
        %2050 = sbr.rel (%p2048) target = $region56
      $region55: #{tpu_custom_call.1} parent=47 // pred_region
        %s2051 = scalar_lea.vmem [#allocation2], 144
        %2052 = vst.msk [vmem:[%s2051] sm:$0xff] %vm670, 0
        %2053 = vst.msk [vmem:[%s2051 + $0x8] sm:$0xff] %vm670, 0
      $region56: #{tpu_custom_call.1} parent=47 // pred_fallthru
        _
      %v2054 = vld [vmem:[#allocation2] sm:$0xf8]
      %v2055 = vld [vmem:[#allocation2 + $0x8] sm:$0xf]
      %v2056 = vld [vmem:[#allocation2 + $0x10] sm:$0xf8]
      %v2057 = vld [vmem:[#allocation2 + $0x18] sm:$0xf]
      %v2058 = vld [vmem:[#allocation2 + $0x20] sm:$0xf8]
      %v2059 = vld [vmem:[#allocation2 + $0x28] sm:$0xf]
      %v2060 = vld [vmem:[#allocation2 + $0x30] sm:$0xf8]
      %v2061 = vld [vmem:[#allocation2 + $0x38] sm:$0xf]
      %v2062 = vld [vmem:[#allocation2 + $0x40] sm:$0xf8]
      %v2063 = vld [vmem:[#allocation2 + $0x48] sm:$0xf]
      %v2064 = vld [vmem:[#allocation2 + $0x50] sm:$0xf8]
      %v2065 = vld [vmem:[#allocation2 + $0x58] sm:$0xf]
      %v2066 = vld [vmem:[#allocation2 + $0x60] sm:$0xf8]
      %v2067 = vld [vmem:[#allocation2 + $0x68] sm:$0xf]
      %v2068 = vld [vmem:[#allocation2 + $0x70] sm:$0xf8]
      %v2069 = vld [vmem:[#allocation2 + $0x78] sm:$0xf]
      %v2070 = vld [vmem:[#allocation2] sm:$0xf0]
      %v2071 = vld [vmem:[#allocation2 + $0x10] sm:$0xf0]
      %v2072 = vld [vmem:[#allocation2 + $0x20] sm:$0xf0]
      %v2073 = vld [vmem:[#allocation2 + $0x30] sm:$0xf0]
      %v2074 = vld [vmem:[#allocation2 + $0x40] sm:$0xf0]
      %v2075 = vld [vmem:[#allocation2 + $0x50] sm:$0xf0]
      %v2076 = vld [vmem:[#allocation2 + $0x60] sm:$0xf0]
      %v2077 = vld [vmem:[#allocation2 + $0x70] sm:$0xf0]
      %v2078 = vld [vmem:[#allocation2 + $0x8] sm:$0x1f]
      %v2079 = vld [vmem:[#allocation2 + $0x18] sm:$0x1f]
      %v2080 = vld [vmem:[#allocation2 + $0x28] sm:$0x1f]
      %v2081 = vld [vmem:[#allocation2 + $0x38] sm:$0x1f]
      %v2082 = vld [vmem:[#allocation2 + $0x48] sm:$0x1f]
      %v2083 = vld [vmem:[#allocation2 + $0x58] sm:$0x1f]
      %v2084 = vld [vmem:[#allocation2 + $0x68] sm:$0x1f]
      %v2085 = vld [vmem:[#allocation2 + $0x78] sm:$0x1f]
      %v2087 = vshrl.u32 %v2070, 16
      %v2089 = vshll.u32 %v2070, 16
      %v2091 = vrot.slane %v2089, 1
      %v2092 = vor.u32 %v2087, %v2091
      %v2094 = vshll.u32 %v2055, 16
      %v2096 = vrot.slane %v2094, 1
      %v2097 = vsel %vm427, %v2092, %v2096
      %v2098 = vshrl.u32 %v2055, 16
      %v2100 = vor.u32 %v2098, %v2096
      %v2102 = vshrl.u32 %v2071, 16
      %v2104 = vshll.u32 %v2071, 16
      %v2106 = vrot.slane %v2104, 1
      %v2107 = vor.u32 %v2102, %v2106
      %v2109 = vshll.u32 %v2057, 16
      %v2111 = vrot.slane %v2109, 1
      %v2112 = vsel %vm427, %v2107, %v2111
      %v2113 = vshrl.u32 %v2057, 16
      %v2115 = vor.u32 %v2113, %v2111
      %v2117 = vshrl.u32 %v2072, 16
      %v2119 = vshll.u32 %v2072, 16
      %v2121 = vrot.slane %v2119, 1
      %v2122 = vor.u32 %v2117, %v2121
      %v2124 = vshll.u32 %v2059, 16
      %v2126 = vrot.slane %v2124, 1
      %v2127 = vsel %vm427, %v2122, %v2126
      %v2128 = vshrl.u32 %v2059, 16
      %v2130 = vor.u32 %v2128, %v2126
      %v2132 = vshrl.u32 %v2073, 16
      %v2134 = vshll.u32 %v2073, 16
      %v2136 = vrot.slane %v2134, 1
      %v2137 = vor.u32 %v2132, %v2136
      %v2139 = vshll.u32 %v2061, 16
      %v2141 = vrot.slane %v2139, 1
      %v2142 = vsel %vm427, %v2137, %v2141
      %v2143 = vshrl.u32 %v2061, 16
      %v2145 = vor.u32 %v2143, %v2141
      %v2147 = vshrl.u32 %v2074, 16
      %v2149 = vshll.u32 %v2074, 16
      %v2151 = vrot.slane %v2149, 1
      %v2152 = vor.u32 %v2147, %v2151
      %v2154 = vshll.u32 %v2063, 16
      %v2156 = vrot.slane %v2154, 1
      %v2157 = vsel %vm427, %v2152, %v2156
      %v2158 = vshrl.u32 %v2063, 16
      %v2160 = vor.u32 %v2158, %v2156
      %v2162 = vshrl.u32 %v2075, 16
      %v2164 = vshll.u32 %v2075, 16
      %v2166 = vrot.slane %v2164, 1
      %v2167 = vor.u32 %v2162, %v2166
      %v2169 = vshll.u32 %v2065, 16
      %v2171 = vrot.slane %v2169, 1
      %v2172 = vsel %vm427, %v2167, %v2171
      %v2173 = vshrl.u32 %v2065, 16
      %v2175 = vor.u32 %v2173, %v2171
      %v2177 = vshrl.u32 %v2076, 16
      %v2179 = vshll.u32 %v2076, 16
      %v2181 = vrot.slane %v2179, 1
      %v2182 = vor.u32 %v2177, %v2181
      %v2184 = vshll.u32 %v2067, 16
      %v2186 = vrot.slane %v2184, 1
      %v2187 = vsel %vm427, %v2182, %v2186
      %v2188 = vshrl.u32 %v2067, 16
      %v2190 = vor.u32 %v2188, %v2186
      %v2192 = vshrl.u32 %v2077, 16
      %v2194 = vshll.u32 %v2077, 16
      %v2196 = vrot.slane %v2194, 1
      %v2197 = vor.u32 %v2192, %v2196
      %v2199 = vshll.u32 %v2069, 16
      %v2201 = vrot.slane %v2199, 1
      %v2202 = vsel %vm427, %v2197, %v2201
      %v2203 = vshrl.u32 %v2069, 16
      %v2205 = vor.u32 %v2203, %v2201
      %2206 = vrot.lane.b32.xlu0 %v2097, 8
      %v2207 = vpop.permute.xlu0 %2206
      %2208 = vrot.lane.b32.xlu0 %v2100, 8
      %v2209 = vpop.permute.xlu0 %2208
      %2210 = vrot.lane.b32.xlu0 %v2112, 8
      %v2211 = vpop.permute.xlu0 %2210
      %2212 = vrot.lane.b32.xlu0 %v2115, 8
      %v2213 = vpop.permute.xlu0 %2212
      %2214 = vrot.lane.b32.xlu0 %v2127, 8
      %v2215 = vpop.permute.xlu0 %2214
      %2216 = vrot.lane.b32.xlu0 %v2130, 8
      %v2217 = vpop.permute.xlu0 %2216
      %2218 = vrot.lane.b32.xlu0 %v2142, 8
      %v2219 = vpop.permute.xlu0 %2218
      %2220 = vrot.lane.b32.xlu0 %v2145, 8
      %v2221 = vpop.permute.xlu0 %2220
      %2222 = vrot.lane.b32.xlu0 %v2157, 8
      %v2223 = vpop.permute.xlu0 %2222
      %2224 = vrot.lane.b32.xlu0 %v2160, 8
      %v2225 = vpop.permute.xlu0 %2224
      %2226 = vrot.lane.b32.xlu0 %v2172, 8
      %v2227 = vpop.permute.xlu0 %2226
      %2228 = vrot.lane.b32.xlu0 %v2175, 8
      %v2229 = vpop.permute.xlu0 %2228
      %2230 = vrot.lane.b32.xlu0 %v2187, 8
      %v2231 = vpop.permute.xlu0 %2230
      %2232 = vrot.lane.b32.xlu0 %v2190, 8
      %v2233 = vpop.permute.xlu0 %2232
      %2234 = vrot.lane.b32.xlu0 %v2202, 8
      %v2235 = vpop.permute.xlu0 %2234
      %2236 = vrot.lane.b32.xlu0 %v2205, 8
      %v2237 = vpop.permute.xlu0 %2236
      %v2254 = vrot.slane %v2070, 1
      %v2255 = vrot.slane %v2078, 1
      %v2256 = vsel %vm598, %v2254, %v2255
      %v2257 = vrot.slane %v2071, 1
      %v2258 = vrot.slane %v2079, 1
      %v2259 = vsel %vm598, %v2257, %v2258
      %v2260 = vrot.slane %v2072, 1
      %v2261 = vrot.slane %v2080, 1
      %v2262 = vsel %vm598, %v2260, %v2261
      %v2263 = vrot.slane %v2073, 1
      %v2264 = vrot.slane %v2081, 1
      %v2265 = vsel %vm598, %v2263, %v2264
      %v2266 = vrot.slane %v2074, 1
      %v2267 = vrot.slane %v2082, 1
      %v2268 = vsel %vm598, %v2266, %v2267
      %v2269 = vrot.slane %v2075, 1
      %v2270 = vrot.slane %v2083, 1
      %v2271 = vsel %vm598, %v2269, %v2270
      %v2272 = vrot.slane %v2076, 1
      %v2273 = vrot.slane %v2084, 1
      %v2274 = vsel %vm598, %v2272, %v2273
      %v2275 = vrot.slane %v2077, 1
      %v2276 = vrot.slane %v2085, 1
      %v2277 = vsel %vm598, %v2275, %v2276
      %2278 = vrot.lane.b32.xlu0 %v2256, 16
      %v2279 = vpop.permute.xlu0 %2278
      %2280 = vrot.lane.b32.xlu0 %v2255, 16
      %v2281 = vpop.permute.xlu0 %2280
      %2282 = vrot.lane.b32.xlu0 %v2259, 16
      %v2283 = vpop.permute.xlu0 %2282
      %2284 = vrot.lane.b32.xlu0 %v2258, 16
      %v2285 = vpop.permute.xlu0 %2284
      %2286 = vrot.lane.b32.xlu0 %v2262, 16
      %v2287 = vpop.permute.xlu0 %2286
      %2288 = vrot.lane.b32.xlu0 %v2261, 16
      %v2289 = vpop.permute.xlu0 %2288
      %2290 = vrot.lane.b32.xlu0 %v2265, 16
      %v2291 = vpop.permute.xlu0 %2290
      %2292 = vrot.lane.b32.xlu0 %v2264, 16
      %v2293 = vpop.permute.xlu0 %2292
      %2294 = vrot.lane.b32.xlu0 %v2268, 16
      %v2295 = vpop.permute.xlu0 %2294
      %2296 = vrot.lane.b32.xlu0 %v2267, 16
      %v2297 = vpop.permute.xlu0 %2296
      %2298 = vrot.lane.b32.xlu0 %v2271, 16
      %v2299 = vpop.permute.xlu0 %2298
      %2300 = vrot.lane.b32.xlu0 %v2270, 16
      %v2301 = vpop.permute.xlu0 %2300
      %2302 = vrot.lane.b32.xlu0 %v2274, 16
      %v2303 = vpop.permute.xlu0 %2302
      %2304 = vrot.lane.b32.xlu0 %v2273, 16
      %v2305 = vpop.permute.xlu0 %2304
      %2306 = vrot.lane.b32.xlu0 %v2277, 16
      %v2307 = vpop.permute.xlu0 %2306
      %2308 = vrot.lane.b32.xlu0 %v2276, 16
      %v2309 = vpop.permute.xlu0 %2308
      %v2312 = vsel %vm670, %v2054, %v2207
      %v2314 = vsel %vm670, %v2055, %v2209
      %v2317 = vsel %vm670, %v2056, %v2211
      %v2319 = vsel %vm670, %v2057, %v2213
      %v2322 = vsel %vm670, %v2058, %v2215
      %v2324 = vsel %vm670, %v2059, %v2217
      %v2327 = vsel %vm670, %v2060, %v2219
      %v2329 = vsel %vm670, %v2061, %v2221
      %v2332 = vsel %vm670, %v2062, %v2223
      %v2334 = vsel %vm670, %v2063, %v2225
      %v2337 = vsel %vm670, %v2064, %v2227
      %v2339 = vsel %vm670, %v2065, %v2229
      %v2342 = vsel %vm670, %v2066, %v2231
      %v2344 = vsel %vm670, %v2067, %v2233
      %v2347 = vsel %vm670, %v2068, %v2235
      %v2349 = vsel %vm670, %v2069, %v2237
      %vm2350 = vcmask 130048
      %v2352 = vsel %vm2350, %v2312, %v2279
      %v2354 = vsel %vm2350, %v2314, %v2281
      %v2356 = vsel %vm2350, %v2317, %v2283
      %v2358 = vsel %vm2350, %v2319, %v2285
      %v2360 = vsel %vm2350, %v2322, %v2287
      %v2362 = vsel %vm2350, %v2324, %v2289
      %v2364 = vsel %vm2350, %v2327, %v2291
      %v2366 = vsel %vm2350, %v2329, %v2293
      %v2368 = vsel %vm2350, %v2332, %v2295
      %v2370 = vsel %vm2350, %v2334, %v2297
      %v2372 = vsel %vm2350, %v2337, %v2299
      %v2374 = vsel %vm2350, %v2339, %v2301
      %v2376 = vsel %vm2350, %v2342, %v2303
      %v2378 = vsel %vm2350, %v2344, %v2305
      %v2380 = vsel %vm2350, %v2347, %v2307
      %v2382 = vsel %vm2350, %v2349, %v2309
      %vm2383 = vsmask.f32 4352
      %v2384 = vshrl.u32 %v2352, 16
      %v2386 = vrot.slane %v2384, 3
      %v2387 = vshll.u32 %v2352, 16
      %v2389 = vrot.slane %v2387, 4
      %v2390 = vor.u32 %v2386, %v2389
      %v2391 = vshrl.u32 %v2354, 16
      %v2393 = vrot.slane %v2391, 3
      %v2394 = vshll.u32 %v2354, 16
      %v2396 = vrot.slane %v2394, 4
      %v2397 = vor.u32 %v2393, %v2396
      %v2398 = vsel %vm2383, %v2390, %v2397
      %v2399 = vshrl.u32 %v2356, 16
      %v2401 = vrot.slane %v2399, 3
      %v2402 = vshll.u32 %v2356, 16
      %v2404 = vrot.slane %v2402, 4
      %v2405 = vor.u32 %v2401, %v2404
      %v2406 = vshrl.u32 %v2358, 16
      %v2408 = vrot.slane %v2406, 3
      %v2409 = vshll.u32 %v2358, 16
      %v2411 = vrot.slane %v2409, 4
      %v2412 = vor.u32 %v2408, %v2411
      %v2413 = vsel %vm2383, %v2405, %v2412
      %v2414 = vshrl.u32 %v2360, 16
      %v2416 = vrot.slane %v2414, 3
      %v2417 = vshll.u32 %v2360, 16
      %v2419 = vrot.slane %v2417, 4
      %v2420 = vor.u32 %v2416, %v2419
      %v2421 = vshrl.u32 %v2362, 16
      %v2423 = vrot.slane %v2421, 3
      %v2424 = vshll.u32 %v2362, 16
      %v2426 = vrot.slane %v2424, 4
      %v2427 = vor.u32 %v2423, %v2426
      %v2428 = vsel %vm2383, %v2420, %v2427
      %v2429 = vshrl.u32 %v2364, 16
      %v2431 = vrot.slane %v2429, 3
      %v2432 = vshll.u32 %v2364, 16
      %v2434 = vrot.slane %v2432, 4
      %v2435 = vor.u32 %v2431, %v2434
      %v2436 = vshrl.u32 %v2366, 16
      %v2438 = vrot.slane %v2436, 3
      %v2439 = vshll.u32 %v2366, 16
      %v2441 = vrot.slane %v2439, 4
      %v2442 = vor.u32 %v2438, %v2441
      %v2443 = vsel %vm2383, %v2435, %v2442
      %v2444 = vshrl.u32 %v2368, 16
      %v2446 = vrot.slane %v2444, 3
      %v2447 = vshll.u32 %v2368, 16
      %v2449 = vrot.slane %v2447, 4
      %v2450 = vor.u32 %v2446, %v2449
      %v2451 = vshrl.u32 %v2370, 16
      %v2453 = vrot.slane %v2451, 3
      %v2454 = vshll.u32 %v2370, 16
      %v2456 = vrot.slane %v2454, 4
      %v2457 = vor.u32 %v2453, %v2456
      %v2458 = vsel %vm2383, %v2450, %v2457
      %v2459 = vshrl.u32 %v2372, 16
      %v2461 = vrot.slane %v2459, 3
      %v2462 = vshll.u32 %v2372, 16
      %v2464 = vrot.slane %v2462, 4
      %v2465 = vor.u32 %v2461, %v2464
      %v2466 = vshrl.u32 %v2374, 16
      %v2468 = vrot.slane %v2466, 3
      %v2469 = vshll.u32 %v2374, 16
      %v2471 = vrot.slane %v2469, 4
      %v2472 = vor.u32 %v2468, %v2471
      %v2473 = vsel %vm2383, %v2465, %v2472
      %v2474 = vshrl.u32 %v2376, 16
      %v2476 = vrot.slane %v2474, 3
      %v2477 = vshll.u32 %v2376, 16
      %v2479 = vrot.slane %v2477, 4
      %v2480 = vor.u32 %v2476, %v2479
      %v2481 = vshrl.u32 %v2378, 16
      %v2483 = vrot.slane %v2481, 3
      %v2484 = vshll.u32 %v2378, 16
      %v2486 = vrot.slane %v2484, 4
      %v2487 = vor.u32 %v2483, %v2486
      %v2488 = vsel %vm2383, %v2480, %v2487
      %v2489 = vshrl.u32 %v2380, 16
      %v2491 = vrot.slane %v2489, 3
      %v2492 = vshll.u32 %v2380, 16
      %v2494 = vrot.slane %v2492, 4
      %v2495 = vor.u32 %v2491, %v2494
      %v2496 = vshrl.u32 %v2382, 16
      %v2498 = vrot.slane %v2496, 3
      %v2499 = vshll.u32 %v2382, 16
      %v2501 = vrot.slane %v2499, 4
      %v2502 = vor.u32 %v2498, %v2501
      %v2503 = vsel %vm2383, %v2495, %v2502
      %v2504 = vld [vmem:[%s3] sm:$0xf]
      %v2505 = vld [vmem:[%s3 + $0x4] sm:$0xf]
      %v2506 = vld [vmem:[%s3 + $0x8] sm:$0xf]
      %s2507 = scalar_lea.vmem [#allocation2], 16
      %v2508 = vld [vmem:[%s2507] sm:$0xf8]
      %v2509 = vld [vmem:[%s2507 + $0x8] sm:$0xf]
      %v2510 = vld [vmem:[%s2507 + $0x10] sm:$0xf8]
      %v2511 = vld [vmem:[%s2507 + $0x18] sm:$0xf]
      %v2512 = vld [vmem:[%s2507 + $0x20] sm:$0xf8]
      %v2513 = vld [vmem:[%s2507 + $0x28] sm:$0xf]
      %v2514 = vld [vmem:[%s2507 + $0x30] sm:$0xf8]
      %v2515 = vld [vmem:[%s2507 + $0x38] sm:$0xf]
      %v2516 = vld [vmem:[%s2507 + $0x40] sm:$0xf8]
      %v2517 = vld [vmem:[%s2507 + $0x48] sm:$0xf]
      %v2518 = vld [vmem:[%s2507 + $0x50] sm:$0xf8]
      %v2519 = vld [vmem:[%s2507 + $0x58] sm:$0xf]
      %v2520 = vld [vmem:[%s2507 + $0x60] sm:$0xf8]
      %v2521 = vld [vmem:[%s2507 + $0x68] sm:$0xf]
      %v2522 = vld [vmem:[%s2507 + $0x70] sm:$0xf8]
      %v2523 = vld [vmem:[%s2507 + $0x78] sm:$0xf]
      %v2524 = vld [vmem:[%s2507] sm:$0xf0]
      %v2525 = vld [vmem:[%s2507 + $0x10] sm:$0xf0]
      %v2526 = vld [vmem:[%s2507 + $0x20] sm:$0xf0]
      %v2527 = vld [vmem:[%s2507 + $0x30] sm:$0xf0]
      %v2528 = vld [vmem:[%s2507 + $0x40] sm:$0xf0]
      %v2529 = vld [vmem:[%s2507 + $0x50] sm:$0xf0]
      %v2530 = vld [vmem:[%s2507 + $0x60] sm:$0xf0]
      %v2531 = vld [vmem:[%s2507 + $0x70] sm:$0xf0]
      %v2532 = vld [vmem:[%s2507 + $0x8] sm:$0x1f]
      %v2533 = vld [vmem:[%s2507 + $0x18] sm:$0x1f]
      %v2534 = vld [vmem:[%s2507 + $0x28] sm:$0x1f]
      %v2535 = vld [vmem:[%s2507 + $0x38] sm:$0x1f]
      %v2536 = vld [vmem:[%s2507 + $0x48] sm:$0x1f]
      %v2537 = vld [vmem:[%s2507 + $0x58] sm:$0x1f]
      %v2538 = vld [vmem:[%s2507 + $0x68] sm:$0x1f]
      %v2539 = vld [vmem:[%s2507 + $0x78] sm:$0x1f]
      %v2541 = vshrl.u32 %v2524, 16
      %v2543 = vshll.u32 %v2524, 16
      %v2545 = vrot.slane %v2543, 1
      %v2546 = vor.u32 %v2541, %v2545
      %v2548 = vshll.u32 %v2509, 16
      %v2550 = vrot.slane %v2548, 1
      %v2551 = vsel %vm427, %v2546, %v2550
      %v2552 = vshrl.u32 %v2509, 16
      %v2554 = vor.u32 %v2552, %v2550
      %v2556 = vshrl.u32 %v2525, 16
      %v2558 = vshll.u32 %v2525, 16
      %v2560 = vrot.slane %v2558, 1
      %v2561 = vor.u32 %v2556, %v2560
      %v2563 = vshll.u32 %v2511, 16
      %v2565 = vrot.slane %v2563, 1
      %v2566 = vsel %vm427, %v2561, %v2565
      %v2567 = vshrl.u32 %v2511, 16
      %v2569 = vor.u32 %v2567, %v2565
      %v2571 = vshrl.u32 %v2526, 16
      %v2573 = vshll.u32 %v2526, 16
      %v2575 = vrot.slane %v2573, 1
      %v2576 = vor.u32 %v2571, %v2575
      %v2578 = vshll.u32 %v2513, 16
      %v2580 = vrot.slane %v2578, 1
      %v2581 = vsel %vm427, %v2576, %v2580
      %v2582 = vshrl.u32 %v2513, 16
      %v2584 = vor.u32 %v2582, %v2580
      %v2586 = vshrl.u32 %v2527, 16
      %v2588 = vshll.u32 %v2527, 16
      %v2590 = vrot.slane %v2588, 1
      %v2591 = vor.u32 %v2586, %v2590
      %v2593 = vshll.u32 %v2515, 16
      %v2595 = vrot.slane %v2593, 1
      %v2596 = vsel %vm427, %v2591, %v2595
      %v2597 = vshrl.u32 %v2515, 16
      %v2599 = vor.u32 %v2597, %v2595
      %v2601 = vshrl.u32 %v2528, 16
      %v2603 = vshll.u32 %v2528, 16
      %v2605 = vrot.slane %v2603, 1
      %v2606 = vor.u32 %v2601, %v2605
      %v2608 = vshll.u32 %v2517, 16
      %v2610 = vrot.slane %v2608, 1
      %v2611 = vsel %vm427, %v2606, %v2610
      %v2612 = vshrl.u32 %v2517, 16
      %v2614 = vor.u32 %v2612, %v2610
      %v2616 = vshrl.u32 %v2529, 16
      %v2618 = vshll.u32 %v2529, 16
      %v2620 = vrot.slane %v2618, 1
      %v2621 = vor.u32 %v2616, %v2620
      %v2623 = vshll.u32 %v2519, 16
      %v2625 = vrot.slane %v2623, 1
      %v2626 = vsel %vm427, %v2621, %v2625
      %v2627 = vshrl.u32 %v2519, 16
      %v2629 = vor.u32 %v2627, %v2625
      %v2631 = vshrl.u32 %v2530, 16
      %v2633 = vshll.u32 %v2530, 16
      %v2635 = vrot.slane %v2633, 1
      %v2636 = vor.u32 %v2631, %v2635
      %v2638 = vshll.u32 %v2521, 16
      %v2640 = vrot.slane %v2638, 1
      %v2641 = vsel %vm427, %v2636, %v2640
      %v2642 = vshrl.u32 %v2521, 16
      %v2644 = vor.u32 %v2642, %v2640
      %v2646 = vshrl.u32 %v2531, 16
      %v2648 = vshll.u32 %v2531, 16
      %v2650 = vrot.slane %v2648, 1
      %v2651 = vor.u32 %v2646, %v2650
      %v2653 = vshll.u32 %v2523, 16
      %v2655 = vrot.slane %v2653, 1
      %v2656 = vsel %vm427, %v2651, %v2655
      %v2657 = vshrl.u32 %v2523, 16
      %v2659 = vor.u32 %v2657, %v2655
      %2660 = vrot.lane.b32.xlu0 %v2551, 8
      %v2661 = vpop.permute.xlu0 %2660
      %2662 = vrot.lane.b32.xlu0 %v2554, 8
      %v2663 = vpop.permute.xlu0 %2662
      %2664 = vrot.lane.b32.xlu0 %v2566, 8
      %v2665 = vpop.permute.xlu0 %2664
      %2666 = vrot.lane.b32.xlu0 %v2569, 8
      %v2667 = vpop.permute.xlu0 %2666
      %2668 = vrot.lane.b32.xlu0 %v2581, 8
      %v2669 = vpop.permute.xlu0 %2668
      %2670 = vrot.lane.b32.xlu0 %v2584, 8
      %v2671 = vpop.permute.xlu0 %2670
      %2672 = vrot.lane.b32.xlu0 %v2596, 8
      %v2673 = vpop.permute.xlu0 %2672
      %2674 = vrot.lane.b32.xlu0 %v2599, 8
      %v2675 = vpop.permute.xlu0 %2674
      %2676 = vrot.lane.b32.xlu0 %v2611, 8
      %v2677 = vpop.permute.xlu0 %2676
      %2678 = vrot.lane.b32.xlu0 %v2614, 8
      %v2679 = vpop.permute.xlu0 %2678
      %2680 = vrot.lane.b32.xlu0 %v2626, 8
      %v2681 = vpop.permute.xlu0 %2680
      %2682 = vrot.lane.b32.xlu0 %v2629, 8
      %v2683 = vpop.permute.xlu0 %2682
      %2684 = vrot.lane.b32.xlu0 %v2641, 8
      %v2685 = vpop.permute.xlu0 %2684
      %2686 = vrot.lane.b32.xlu0 %v2644, 8
      %v2687 = vpop.permute.xlu0 %2686
      %2688 = vrot.lane.b32.xlu0 %v2656, 8
      %v2689 = vpop.permute.xlu0 %2688
      %2690 = vrot.lane.b32.xlu0 %v2659, 8
      %v2691 = vpop.permute.xlu0 %2690
      %v2708 = vrot.slane %v2524, 1
      %v2709 = vrot.slane %v2532, 1
      %v2710 = vsel %vm598, %v2708, %v2709
      %v2711 = vrot.slane %v2525, 1
      %v2712 = vrot.slane %v2533, 1
      %v2713 = vsel %vm598, %v2711, %v2712
      %v2714 = vrot.slane %v2526, 1
      %v2715 = vrot.slane %v2534, 1
      %v2716 = vsel %vm598, %v2714, %v2715
      %v2717 = vrot.slane %v2527, 1
      %v2718 = vrot.slane %v2535, 1
      %v2719 = vsel %vm598, %v2717, %v2718
      %v2720 = vrot.slane %v2528, 1
      %v2721 = vrot.slane %v2536, 1
      %v2722 = vsel %vm598, %v2720, %v2721
      %v2723 = vrot.slane %v2529, 1
      %v2724 = vrot.slane %v2537, 1
      %v2725 = vsel %vm598, %v2723, %v2724
      %v2726 = vrot.slane %v2530, 1
      %v2727 = vrot.slane %v2538, 1
      %v2728 = vsel %vm598, %v2726, %v2727
      %v2729 = vrot.slane %v2531, 1
      %v2730 = vrot.slane %v2539, 1
      %v2731 = vsel %vm598, %v2729, %v2730
      %2732 = vrot.lane.b32.xlu0 %v2710, 16
      %v2733 = vpop.permute.xlu0 %2732
      %2734 = vrot.lane.b32.xlu0 %v2709, 16
      %v2735 = vpop.permute.xlu0 %2734
      %2736 = vrot.lane.b32.xlu0 %v2713, 16
      %v2737 = vpop.permute.xlu0 %2736
      %2738 = vrot.lane.b32.xlu0 %v2712, 16
      %v2739 = vpop.permute.xlu0 %2738
      %2740 = vrot.lane.b32.xlu0 %v2716, 16
      %v2741 = vpop.permute.xlu0 %2740
      %2742 = vrot.lane.b32.xlu0 %v2715, 16
      %v2743 = vpop.permute.xlu0 %2742
      %2744 = vrot.lane.b32.xlu0 %v2719, 16
      %v2745 = vpop.permute.xlu0 %2744
      %2746 = vrot.lane.b32.xlu0 %v2718, 16
      %v2747 = vpop.permute.xlu0 %2746
      %2748 = vrot.lane.b32.xlu0 %v2722, 16
      %v2749 = vpop.permute.xlu0 %2748
      %2750 = vrot.lane.b32.xlu0 %v2721, 16
      %v2751 = vpop.permute.xlu0 %2750
      %2752 = vrot.lane.b32.xlu0 %v2725, 16
      %v2753 = vpop.permute.xlu0 %2752
      %2754 = vrot.lane.b32.xlu0 %v2724, 16
      %v2755 = vpop.permute.xlu0 %2754
      %2756 = vrot.lane.b32.xlu0 %v2728, 16
      %v2757 = vpop.permute.xlu0 %2756
      %2758 = vrot.lane.b32.xlu0 %v2727, 16
      %v2759 = vpop.permute.xlu0 %2758
      %2760 = vrot.lane.b32.xlu0 %v2731, 16
      %v2761 = vpop.permute.xlu0 %2760
      %2762 = vrot.lane.b32.xlu0 %v2730, 16
      %v2763 = vpop.permute.xlu0 %2762
      %v2766 = vsel %vm670, %v2508, %v2661
      %v2768 = vsel %vm670, %v2509, %v2663
      %v2771 = vsel %vm670, %v2510, %v2665
      %v2773 = vsel %vm670, %v2511, %v2667
      %v2776 = vsel %vm670, %v2512, %v2669
      %v2778 = vsel %vm670, %v2513, %v2671
      %v2781 = vsel %vm670, %v2514, %v2673
      %v2783 = vsel %vm670, %v2515, %v2675
      %v2786 = vsel %vm670, %v2516, %v2677
      %v2788 = vsel %vm670, %v2517, %v2679
      %v2791 = vsel %vm670, %v2518, %v2681
      %v2793 = vsel %vm670, %v2519, %v2683
      %v2796 = vsel %vm670, %v2520, %v2685
      %v2798 = vsel %vm670, %v2521, %v2687
      %v2801 = vsel %vm670, %v2522, %v2689
      %v2803 = vsel %vm670, %v2523, %v2691
      %v2805 = vsel %vm2350, %v2766, %v2733
      %v2807 = vsel %vm2350, %v2768, %v2735
      %v2809 = vsel %vm2350, %v2771, %v2737
      %v2811 = vsel %vm2350, %v2773, %v2739
      %v2813 = vsel %vm2350, %v2776, %v2741
      %v2815 = vsel %vm2350, %v2778, %v2743
      %v2817 = vsel %vm2350, %v2781, %v2745
      %v2819 = vsel %vm2350, %v2783, %v2747
      %v2821 = vsel %vm2350, %v2786, %v2749
      %v2823 = vsel %vm2350, %v2788, %v2751
      %v2825 = vsel %vm2350, %v2791, %v2753
      %v2827 = vsel %vm2350, %v2793, %v2755
      %v2829 = vsel %vm2350, %v2796, %v2757
      %v2831 = vsel %vm2350, %v2798, %v2759
      %v2833 = vsel %vm2350, %v2801, %v2761
      %v2835 = vsel %vm2350, %v2803, %v2763
      %v2836 = vshrl.u32 %v2805, 16
      %v2838 = vrot.slane %v2836, 3
      %v2839 = vshll.u32 %v2805, 16
      %v2841 = vrot.slane %v2839, 4
      %v2842 = vor.u32 %v2838, %v2841
      %v2843 = vshrl.u32 %v2807, 16
      %v2845 = vrot.slane %v2843, 3
      %v2846 = vshll.u32 %v2807, 16
      %v2848 = vrot.slane %v2846, 4
      %v2849 = vor.u32 %v2845, %v2848
      %v2850 = vsel %vm2383, %v2842, %v2849
      %v2851 = vshrl.u32 %v2809, 16
      %v2853 = vrot.slane %v2851, 3
      %v2854 = vshll.u32 %v2809, 16
      %v2856 = vrot.slane %v2854, 4
      %v2857 = vor.u32 %v2853, %v2856
      %v2858 = vshrl.u32 %v2811, 16
      %v2860 = vrot.slane %v2858, 3
      %v2861 = vshll.u32 %v2811, 16
      %v2863 = vrot.slane %v2861, 4
      %v2864 = vor.u32 %v2860, %v2863
      %v2865 = vsel %vm2383, %v2857, %v2864
      %v2866 = vshrl.u32 %v2813, 16
      %v2868 = vrot.slane %v2866, 3
      %v2869 = vshll.u32 %v2813, 16
      %v2871 = vrot.slane %v2869, 4
      %v2872 = vor.u32 %v2868, %v2871
      %v2873 = vshrl.u32 %v2815, 16
      %v2875 = vrot.slane %v2873, 3
      %v2876 = vshll.u32 %v2815, 16
      %v2878 = vrot.slane %v2876, 4
      %v2879 = vor.u32 %v2875, %v2878
      %v2880 = vsel %vm2383, %v2872, %v2879
      %v2881 = vshrl.u32 %v2817, 16
      %v2883 = vrot.slane %v2881, 3
      %v2884 = vshll.u32 %v2817, 16
      %v2886 = vrot.slane %v2884, 4
      %v2887 = vor.u32 %v2883, %v2886
      %v2888 = vshrl.u32 %v2819, 16
      %v2890 = vrot.slane %v2888, 3
      %v2891 = vshll.u32 %v2819, 16
      %v2893 = vrot.slane %v2891, 4
      %v2894 = vor.u32 %v2890, %v2893
      %v2895 = vsel %vm2383, %v2887, %v2894
      %v2896 = vshrl.u32 %v2821, 16
      %v2898 = vrot.slane %v2896, 3
      %v2899 = vshll.u32 %v2821, 16
      %v2901 = vrot.slane %v2899, 4
      %v2902 = vor.u32 %v2898, %v2901
      %v2903 = vshrl.u32 %v2823, 16
      %v2905 = vrot.slane %v2903, 3
      %v2906 = vshll.u32 %v2823, 16
      %v2908 = vrot.slane %v2906, 4
      %v2909 = vor.u32 %v2905, %v2908
      %v2910 = vsel %vm2383, %v2902, %v2909
      %v2911 = vshrl.u32 %v2825, 16
      %v2913 = vrot.slane %v2911, 3
      %v2914 = vshll.u32 %v2825, 16
      %v2916 = vrot.slane %v2914, 4
      %v2917 = vor.u32 %v2913, %v2916
      %v2918 = vshrl.u32 %v2827, 16
      %v2920 = vrot.slane %v2918, 3
      %v2921 = vshll.u32 %v2827, 16
      %v2923 = vrot.slane %v2921, 4
      %v2924 = vor.u32 %v2920, %v2923
      %v2925 = vsel %vm2383, %v2917, %v2924
      %v2926 = vshrl.u32 %v2829, 16
      %v2928 = vrot.slane %v2926, 3
      %v2929 = vshll.u32 %v2829, 16
      %v2931 = vrot.slane %v2929, 4
      %v2932 = vor.u32 %v2928, %v2931
      %v2933 = vshrl.u32 %v2831, 16
      %v2935 = vrot.slane %v2933, 3
      %v2936 = vshll.u32 %v2831, 16
      %v2938 = vrot.slane %v2936, 4
      %v2939 = vor.u32 %v2935, %v2938
      %v2940 = vsel %vm2383, %v2932, %v2939
      %v2941 = vshrl.u32 %v2833, 16
      %v2943 = vrot.slane %v2941, 3
      %v2944 = vshll.u32 %v2833, 16
      %v2946 = vrot.slane %v2944, 4
      %v2947 = vor.u32 %v2943, %v2946
      %v2948 = vshrl.u32 %v2835, 16
      %v2950 = vrot.slane %v2948, 3
      %v2951 = vshll.u32 %v2835, 16
      %v2953 = vrot.slane %v2951, 4
      %v2954 = vor.u32 %v2950, %v2953
      %v2955 = vsel %vm2383, %v2947, %v2954
      %s2956 = scalar_lea.vmem %s3, 12
      %v2957 = vld [vmem:[%s2956] sm:$0xf]
      %v2958 = vld [vmem:[%s2956 + $0x4] sm:$0xf]
      %v2959 = vld [vmem:[%s2956 + $0x8] sm:$0xf]
      %v2963 = vunpack.c.l.b16 %v2957
      %v2964 = vunpack.c.l.b16 %v2958
      %v2965 = vunpack.c.l.b16 %v2959
      %v2966 = vpack.c.b16 %v2964, %v2963
      %v2967 = vpack.c.b16 %v2965, %v2965
      %vm2969 = vcmask 195584
      %v2971 = vsel %vm2969, %v2850, 0
      %v2974 = vsel %vm2969, %v2865, 0
      %v2977 = vsel %vm2969, %v2880, 0
      %v2980 = vsel %vm2969, %v2895, 0
      %v2983 = vsel %vm2969, %v2910, 0
      %v2986 = vsel %vm2969, %v2925, 0
      %v2989 = vsel %vm2969, %v2940, 0
      %v2992 = vsel %vm2969, %v2955, 0
      %vm2994 = vcmask 1043456
      %v2996 = vsel %vm2994, %v2967, 0
      %2998 = vmatprep.subr.bf16.mxu0 0
      %2999 = vmatpush1.bf16.msra.mxu0 %v2966
      %3000 = vmatprep.subr.bf16.mxu0 0
      %3001 = vmatpush1.bf16.msra.mxu0 %v2996
      %3002 = vmatprep.subr.bf16.mxu0 0
      %3003 = vmatpush1.bf16.msra.mxu0 0
      %3004 = vmatprep.subr.bf16.mxu0 0
      %3005 = vmatpush1.bf16.msra.mxu0 0
      %3006 = vmatprep.subr.bf16.mxu0 0
      %3007 = vmatpush1.bf16.msra.mxu0 0
      %3008 = vmatprep.subr.bf16.mxu0 0
      %3009 = vmatpush1.bf16.msra.mxu0 0
      %3010 = vmatprep.subr.bf16.mxu0 0
      %3011 = vmatpush1.bf16.msra.mxu0 0
      %3012 = vmatprep.subr.bf16.mxu0 0
      %3013 = vmatpush1.bf16.msra.mxu0 0
      %3014 = vmatprep.subr.bf16.mxu0 0
      %3015 = vmatpush1.bf16.msra.mxu0 0
      %3016 = vmatprep.subr.bf16.mxu0 0
      %3017 = vmatpush1.bf16.msra.mxu0 0
      %3018 = vmatprep.subr.bf16.mxu0 0
      %3019 = vmatpush1.bf16.msra.mxu0 0
      %3020 = vmatprep.subr.bf16.mxu0 0
      %3021 = vmatpush1.bf16.msra.mxu0 0
      %3022 = vmatprep.subr.bf16.mxu0 0
      %3023 = vmatpush1.bf16.msra.mxu0 0
      %3024 = vmatprep.subr.bf16.mxu0 0
      %3025 = vmatpush1.bf16.msra.mxu0 0
      %3026 = vmatprep.subr.bf16.mxu0 0
      %3027 = vmatpush1.bf16.msra.mxu0 0
      %3028 = vmatprep.subr.bf16.mxu0 0
      %3029 = vmatpush1.bf16.msra.mxu0 0
      %3030 = vmatprep.mubr.bf16.mxu0 0
      %3031 = vmatmul.mubr.bf16.gmra.mrb[0].mxu0 %v2971
      %v3032 = vpop.f32.mrb[0].mxu0
      %v3033 = vadd.f32 0.0, %v3032
      %v3034 = vpop.f32.mrb[0].mxu0
      %v3035 = vpop.f32.mrb[0].mxu0
      %v3036 = vadd.f32 0.0, %v3035
      %v3037 = vpop.f32.mrb[0].mxu0
      %3038 = vmatprep.mubr.bf16.mxu0 0
      %3039 = vmatmul.mubr.bf16.gmra.mrb[0].mxu0 %v2974
      %v3040 = vpop.f32.mrb[0].mxu0
      %v3041 = vadd.f32 0.0, %v3040
      %v3042 = vpop.f32.mrb[0].mxu0
      %v3043 = vpop.f32.mrb[0].mxu0
      %v3044 = vadd.f32 0.0, %v3043
      %v3045 = vpop.f32.mrb[0].mxu0
      %3046 = vmatprep.mubr.bf16.mxu0 0
      %3047 = vmatmul.mubr.bf16.gmra.mrb[0].mxu0 %v2977
      %v3048 = vpop.f32.mrb[0].mxu0
      %v3049 = vadd.f32 0.0, %v3048
      %v3050 = vpop.f32.mrb[0].mxu0
      %v3051 = vpop.f32.mrb[0].mxu0
      %v3052 = vadd.f32 0.0, %v3051
      %v3053 = vpop.f32.mrb[0].mxu0
      %3054 = vmatprep.mubr.bf16.mxu0 0
      %3055 = vmatmul.mubr.bf16.gmra.mrb[0].mxu0 %v2980
      %v3056 = vpop.f32.mrb[0].mxu0
      %v3057 = vadd.f32 0.0, %v3056
      %v3058 = vpop.f32.mrb[0].mxu0
      %v3059 = vpop.f32.mrb[0].mxu0
      %v3060 = vadd.f32 0.0, %v3059
      %v3061 = vpop.f32.mrb[0].mxu0
      %3062 = vmatprep.mubr.bf16.mxu0 0
      %3063 = vmatmul.mubr.bf16.gmra.mrb[0].mxu0 %v2983
      %v3064 = vpop.f32.mrb[0].mxu0
      %v3065 = vadd.f32 0.0, %v3064
      %v3066 = vpop.f32.mrb[0].mxu0
      %v3067 = vpop.f32.mrb[0].mxu0
      %v3068 = vadd.f32 0.0, %v3067
      %v3069 = vpop.f32.mrb[0].mxu0
      %3070 = vmatprep.mubr.bf16.mxu0 0
      %3071 = vmatmul.mubr.bf16.gmra.mrb[0].mxu0 %v2986
      %v3072 = vpop.f32.mrb[0].mxu0
      %v3073 = vadd.f32 0.0, %v3072
      %v3074 = vpop.f32.mrb[0].mxu0
      %v3075 = vpop.f32.mrb[0].mxu0
      %v3076 = vadd.f32 0.0, %v3075
      %v3077 = vpop.f32.mrb[0].mxu0
      %3078 = vmatprep.mubr.bf16.mxu0 0
      %3079 = vmatmul.mubr.bf16.gmra.mrb[0].mxu0 %v2989
      %v3080 = vpop.f32.mrb[0].mxu0
      %v3081 = vadd.f32 0.0, %v3080
      %v3082 = vpop.f32.mrb[0].mxu0
      %v3083 = vpop.f32.mrb[0].mxu0
      %v3084 = vadd.f32 0.0, %v3083
      %v3085 = vpop.f32.mrb[0].mxu0
      %3086 = vmatprep.mubr.bf16.mxu0 0
      %3087 = vmatmul.mubr.bf16.gmra.mrb[0].mxu0 %v2992
      %v3088 = vpop.f32.mrb[0].mxu0
      %v3089 = vadd.f32 0.0, %v3088
      %v3090 = vpop.f32.mrb[0].mxu0
      %v3091 = vpop.f32.mrb[0].mxu0
      %v3092 = vadd.f32 0.0, %v3091
      %v3093 = vpop.f32.mrb[0].mxu0
      %3094 = vdwg.mxu0
      %v3098 = vunpack.c.l.b16 %v2504
      %v3099 = vunpack.c.l.b16 %v2505
      %v3100 = vunpack.c.l.b16 %v2506
      %v3101 = vpack.c.b16 %v3099, %v3098
      %v3102 = vpack.c.b16 %v3100, %v3100
      %v3105 = vsel %vm2969, %v2398, 0
      %v3108 = vsel %vm2969, %v2413, 0
      %v3111 = vsel %vm2969, %v2428, 0
      %v3114 = vsel %vm2969, %v2443, 0
      %v3117 = vsel %vm2969, %v2458, 0
      %v3120 = vsel %vm2969, %v2473, 0
      %v3123 = vsel %vm2969, %v2488, 0
      %v3126 = vsel %vm2969, %v2503, 0
      %v3129 = vsel %vm2994, %v3102, 0
      %3131 = vmatprep.subr.bf16.mxu0 0
      %3132 = vmatpush1.bf16.msra.mxu0 %v3101
      %3133 = vmatprep.subr.bf16.mxu0 0
      %3134 = vmatpush1.bf16.msra.mxu0 %v3129
      %3135 = vmatprep.subr.bf16.mxu0 0
      %3136 = vmatpush1.bf16.msra.mxu0 0
      %3137 = vmatprep.subr.bf16.mxu0 0
      %3138 = vmatpush1.bf16.msra.mxu0 0
      %3139 = vmatprep.subr.bf16.mxu0 0
      %3140 = vmatpush1.bf16.msra.mxu0 0
      %3141 = vmatprep.subr.bf16.mxu0 0
      %3142 = vmatpush1.bf16.msra.mxu0 0
      %3143 = vmatprep.subr.bf16.mxu0 0
      %3144 = vmatpush1.bf16.msra.mxu0 0
      %3145 = vmatprep.subr.bf16.mxu0 0
      %3146 = vmatpush1.bf16.msra.mxu0 0
      %3147 = vmatprep.subr.bf16.mxu0 0
      %3148 = vmatpush1.bf16.msra.mxu0 0
      %3149 = vmatprep.subr.bf16.mxu0 0
      %3150 = vmatpush1.bf16.msra.mxu0 0
      %3151 = vmatprep.subr.bf16.mxu0 0
      %3152 = vmatpush1.bf16.msra.mxu0 0
      %3153 = vmatprep.subr.bf16.mxu0 0
      %3154 = vmatpush1.bf16.msra.mxu0 0
      %3155 = vmatprep.subr.bf16.mxu0 0
      %3156 = vmatpush1.bf16.msra.mxu0 0
      %3157 = vmatprep.subr.bf16.mxu0 0
      %3158 = vmatpush1.bf16.msra.mxu0 0
      %3159 = vmatprep.subr.bf16.mxu0 0
      %3160 = vmatpush1.bf16.msra.mxu0 0
      %3161 = vmatprep.subr.bf16.mxu0 0
      %3162 = vmatpush1.bf16.msra.mxu0 0
      %3163 = vmatprep.mubr.bf16.mxu0 0
      %3164 = vmatmul.mubr.bf16.gmra.mrb[0].mxu0 %v3105
      %v3165 = vpop.f32.mrb[0].mxu0
      %v3166 = vadd.f32 %v3033, %v3165
      %v3167 = vpop.f32.mrb[0].mxu0
      %v3168 = vpop.f32.mrb[0].mxu0
      %v3169 = vadd.f32 %v3036, %v3168
      %v3170 = vpop.f32.mrb[0].mxu0
      %3171 = vmatprep.mubr.bf16.mxu0 0
      %3172 = vmatmul.mubr.bf16.gmra.mrb[0].mxu0 %v3108
      %v3173 = vpop.f32.mrb[0].mxu0
      %v3174 = vadd.f32 %v3041, %v3173
      %v3175 = vpop.f32.mrb[0].mxu0
      %v3176 = vpop.f32.mrb[0].mxu0
      %v3177 = vadd.f32 %v3044, %v3176
      %v3178 = vpop.f32.mrb[0].mxu0
      %3179 = vmatprep.mubr.bf16.mxu0 0
      %3180 = vmatmul.mubr.bf16.gmra.mrb[0].mxu0 %v3111
      %v3181 = vpop.f32.mrb[0].mxu0
      %v3182 = vadd.f32 %v3049, %v3181
      %v3183 = vpop.f32.mrb[0].mxu0
      %v3184 = vpop.f32.mrb[0].mxu0
      %v3185 = vadd.f32 %v3052, %v3184
      %v3186 = vpop.f32.mrb[0].mxu0
      %3187 = vmatprep.mubr.bf16.mxu0 0
      %3188 = vmatmul.mubr.bf16.gmra.mrb[0].mxu0 %v3114
      %v3189 = vpop.f32.mrb[0].mxu0
      %v3190 = vadd.f32 %v3057, %v3189
      %v3191 = vpop.f32.mrb[0].mxu0
      %v3192 = vpop.f32.mrb[0].mxu0
      %v3193 = vadd.f32 %v3060, %v3192
      %v3194 = vpop.f32.mrb[0].mxu0
      %3195 = vmatprep.mubr.bf16.mxu0 0
      %3196 = vmatmul.mubr.bf16.gmra.mrb[0].mxu0 %v3117
      %v3197 = vpop.f32.mrb[0].mxu0
      %v3198 = vadd.f32 %v3065, %v3197
      %v3199 = vpop.f32.mrb[0].mxu0
      %v3200 = vpop.f32.mrb[0].mxu0
      %v3201 = vadd.f32 %v3068, %v3200
      %v3202 = vpop.f32.mrb[0].mxu0
      %3203 = vmatprep.mubr.bf16.mxu0 0
      %3204 = vmatmul.mubr.bf16.gmra.mrb[0].mxu0 %v3120
      %v3205 = vpop.f32.mrb[0].mxu0
      %v3206 = vadd.f32 %v3073, %v3205
      %v3207 = vpop.f32.mrb[0].mxu0
      %v3208 = vpop.f32.mrb[0].mxu0
      %v3209 = vadd.f32 %v3076, %v3208
      %v3210 = vpop.f32.mrb[0].mxu0
      %3211 = vmatprep.mubr.bf16.mxu0 0
      %3212 = vmatmul.mubr.bf16.gmra.mrb[0].mxu0 %v3123
      %v3213 = vpop.f32.mrb[0].mxu0
      %v3214 = vadd.f32 %v3081, %v3213
      %v3215 = vpop.f32.mrb[0].mxu0
      %v3216 = vpop.f32.mrb[0].mxu0
      %v3217 = vadd.f32 %v3084, %v3216
      %v3218 = vpop.f32.mrb[0].mxu0
      %3219 = vmatprep.mubr.bf16.mxu0 0
      %3220 = vmatmul.mubr.bf16.gmra.mrb[0].mxu0 %v3126
      %v3221 = vpop.f32.mrb[0].mxu0
      %v3222 = vadd.f32 %v3089, %v3221
      %v3223 = vpop.f32.mrb[0].mxu0
      %v3224 = vpop.f32.mrb[0].mxu0
      %v3225 = vadd.f32 %v3092, %v3224
      %v3226 = vpop.f32.mrb[0].mxu0
      %3227 = vdwg.mxu0
      %s3228 = scalar_lea.vmem [#allocation2], 32
      %v3229 = vld [vmem:[%s3228] sm:$0xf8]
      %v3230 = vld [vmem:[%s3228 + $0x8] sm:$0xf]
      %v3231 = vld [vmem:[%s3228 + $0x10] sm:$0xf8]
      %v3232 = vld [vmem:[%s3228 + $0x18] sm:$0xf]
      %v3233 = vld [vmem:[%s3228 + $0x20] sm:$0xf8]
      %v3234 = vld [vmem:[%s3228 + $0x28] sm:$0xf]
      %v3235 = vld [vmem:[%s3228 + $0x30] sm:$0xf8]
      %v3236 = vld [vmem:[%s3228 + $0x38] sm:$0xf]
      %v3237 = vld [vmem:[%s3228 + $0x40] sm:$0xf8]
      %v3238 = vld [vmem:[%s3228 + $0x48] sm:$0xf]
      %v3239 = vld [vmem:[%s3228 + $0x50] sm:$0xf8]
      %v3240 = vld [vmem:[%s3228 + $0x58] sm:$0xf]
      %v3241 = vld [vmem:[%s3228 + $0x60] sm:$0xf8]
      %v3242 = vld [vmem:[%s3228 + $0x68] sm:$0xf]
      %v3243 = vld [vmem:[%s3228 + $0x70] sm:$0xf8]
      %v3244 = vld [vmem:[%s3228 + $0x78] sm:$0xf]
      %v3245 = vld [vmem:[%s3228] sm:$0xf0]
      %v3246 = vld [vmem:[%s3228 + $0x10] sm:$0xf0]
      %v3247 = vld [vmem:[%s3228 + $0x20] sm:$0xf0]
      %v3248 = vld [vmem:[%s3228 + $0x30] sm:$0xf0]
      %v3249 = vld [vmem:[%s3228 + $0x40] sm:$0xf0]
      %v3250 = vld [vmem:[%s3228 + $0x50] sm:$0xf0]
      %v3251 = vld [vmem:[%s3228 + $0x60] sm:$0xf0]
      %v3252 = vld [vmem:[%s3228 + $0x70] sm:$0xf0]
      %v3253 = vld [vmem:[%s3228 + $0x8] sm:$0x1f]
      %v3254 = vld [vmem:[%s3228 + $0x18] sm:$0x1f]
      %v3255 = vld [vmem:[%s3228 + $0x28] sm:$0x1f]
      %v3256 = vld [vmem:[%s3228 + $0x38] sm:$0x1f]
      %v3257 = vld [vmem:[%s3228 + $0x48] sm:$0x1f]
      %v3258 = vld [vmem:[%s3228 + $0x58] sm:$0x1f]
      %v3259 = vld [vmem:[%s3228 + $0x68] sm:$0x1f]
      %v3260 = vld [vmem:[%s3228 + $0x78] sm:$0x1f]
      %v3262 = vshrl.u32 %v3245, 16
      %v3264 = vshll.u32 %v3245, 16
      %v3266 = vrot.slane %v3264, 1
      %v3267 = vor.u32 %v3262, %v3266
      %v3269 = vshll.u32 %v3230, 16
      %v3271 = vrot.slane %v3269, 1
      %v3272 = vsel %vm427, %v3267, %v3271
      %v3273 = vshrl.u32 %v3230, 16
      %v3275 = vor.u32 %v3273, %v3271
      %v3277 = vshrl.u32 %v3246, 16
      %v3279 = vshll.u32 %v3246, 16
      %v3281 = vrot.slane %v3279, 1
      %v3282 = vor.u32 %v3277, %v3281
      %v3284 = vshll.u32 %v3232, 16
      %v3286 = vrot.slane %v3284, 1
      %v3287 = vsel %vm427, %v3282, %v3286
      %v3288 = vshrl.u32 %v3232, 16
      %v3290 = vor.u32 %v3288, %v3286
      %v3292 = vshrl.u32 %v3247, 16
      %v3294 = vshll.u32 %v3247, 16
      %v3296 = vrot.slane %v3294, 1
      %v3297 = vor.u32 %v3292, %v3296
      %v3299 = vshll.u32 %v3234, 16
      %v3301 = vrot.slane %v3299, 1
      %v3302 = vsel %vm427, %v3297, %v3301
      %v3303 = vshrl.u32 %v3234, 16
      %v3305 = vor.u32 %v3303, %v3301
      %v3307 = vshrl.u32 %v3248, 16
      %v3309 = vshll.u32 %v3248, 16
      %v3311 = vrot.slane %v3309, 1
      %v3312 = vor.u32 %v3307, %v3311
      %v3314 = vshll.u32 %v3236, 16
      %v3316 = vrot.slane %v3314, 1
      %v3317 = vsel %vm427, %v3312, %v3316
      %v3318 = vshrl.u32 %v3236, 16
      %v3320 = vor.u32 %v3318, %v3316
      %v3322 = vshrl.u32 %v3249, 16
      %v3324 = vshll.u32 %v3249, 16
      %v3326 = vrot.slane %v3324, 1
      %v3327 = vor.u32 %v3322, %v3326
      %v3329 = vshll.u32 %v3238, 16
      %v3331 = vrot.slane %v3329, 1
      %v3332 = vsel %vm427, %v3327, %v3331
      %v3333 = vshrl.u32 %v3238, 16
      %v3335 = vor.u32 %v3333, %v3331
      %v3337 = vshrl.u32 %v3250, 16
      %v3339 = vshll.u32 %v3250, 16
      %v3341 = vrot.slane %v3339, 1
      %v3342 = vor.u32 %v3337, %v3341
      %v3344 = vshll.u32 %v3240, 16
      %v3346 = vrot.slane %v3344, 1
      %v3347 = vsel %vm427, %v3342, %v3346
      %v3348 = vshrl.u32 %v3240, 16
      %v3350 = vor.u32 %v3348, %v3346
      %v3352 = vshrl.u32 %v3251, 16
      %v3354 = vshll.u32 %v3251, 16
      %v3356 = vrot.slane %v3354, 1
      %v3357 = vor.u32 %v3352, %v3356
      %v3359 = vshll.u32 %v3242, 16
      %v3361 = vrot.slane %v3359, 1
      %v3362 = vsel %vm427, %v3357, %v3361
      %v3363 = vshrl.u32 %v3242, 16
      %v3365 = vor.u32 %v3363, %v3361
      %v3367 = vshrl.u32 %v3252, 16
      %v3369 = vshll.u32 %v3252, 16
      %v3371 = vrot.slane %v3369, 1
      %v3372 = vor.u32 %v3367, %v3371
      %v3374 = vshll.u32 %v3244, 16
      %v3376 = vrot.slane %v3374, 1
      %v3377 = vsel %vm427, %v3372, %v3376
      %v3378 = vshrl.u32 %v3244, 16
      %v3380 = vor.u32 %v3378, %v3376
      %3381 = vrot.lane.b32.xlu0 %v3272, 8
      %v3382 = vpop.permute.xlu0 %3381
      %3383 = vrot.lane.b32.xlu0 %v3275, 8
      %v3384 = vpop.permute.xlu0 %3383
      %3385 = vrot.lane.b32.xlu0 %v3287, 8
      %v3386 = vpop.permute.xlu0 %3385
      %3387 = vrot.lane.b32.xlu0 %v3290, 8
      %v3388 = vpop.permute.xlu0 %3387
      %3389 = vrot.lane.b32.xlu0 %v3302, 8
      %v3390 = vpop.permute.xlu0 %3389
      %3391 = vrot.lane.b32.xlu0 %v3305, 8
      %v3392 = vpop.permute.xlu0 %3391
      %3393 = vrot.lane.b32.xlu0 %v3317, 8
      %v3394 = vpop.permute.xlu0 %3393
      %3395 = vrot.lane.b32.xlu0 %v3320, 8
      %v3396 = vpop.permute.xlu0 %3395
      %3397 = vrot.lane.b32.xlu0 %v3332, 8
      %v3398 = vpop.permute.xlu0 %3397
      %3399 = vrot.lane.b32.xlu0 %v3335, 8
      %v3400 = vpop.permute.xlu0 %3399
      %3401 = vrot.lane.b32.xlu0 %v3347, 8
      %v3402 = vpop.permute.xlu0 %3401
      %3403 = vrot.lane.b32.xlu0 %v3350, 8
      %v3404 = vpop.permute.xlu0 %3403
      %3405 = vrot.lane.b32.xlu0 %v3362, 8
      %v3406 = vpop.permute.xlu0 %3405
      %3407 = vrot.lane.b32.xlu0 %v3365, 8
      %v3408 = vpop.permute.xlu0 %3407
      %3409 = vrot.lane.b32.xlu0 %v3377, 8
      %v3410 = vpop.permute.xlu0 %3409
      %3411 = vrot.lane.b32.xlu0 %v3380, 8
      %v3412 = vpop.permute.xlu0 %3411
      %v3429 = vrot.slane %v3245, 1
      %v3430 = vrot.slane %v3253, 1
      %v3431 = vsel %vm598, %v3429, %v3430
      %v3432 = vrot.slane %v3246, 1
      %v3433 = vrot.slane %v3254, 1
      %v3434 = vsel %vm598, %v3432, %v3433
      %v3435 = vrot.slane %v3247, 1
      %v3436 = vrot.slane %v3255, 1
      %v3437 = vsel %vm598, %v3435, %v3436
      %v3438 = vrot.slane %v3248, 1
      %v3439 = vrot.slane %v3256, 1
      %v3440 = vsel %vm598, %v3438, %v3439
      %v3441 = vrot.slane %v3249, 1
      %v3442 = vrot.slane %v3257, 1
      %v3443 = vsel %vm598, %v3441, %v3442
      %v3444 = vrot.slane %v3250, 1
      %v3445 = vrot.slane %v3258, 1
      %v3446 = vsel %vm598, %v3444, %v3445
      %v3447 = vrot.slane %v3251, 1
      %v3448 = vrot.slane %v3259, 1
      %v3449 = vsel %vm598, %v3447, %v3448
      %v3450 = vrot.slane %v3252, 1
      %v3451 = vrot.slane %v3260, 1
      %v3452 = vsel %vm598, %v3450, %v3451
      %3453 = vrot.lane.b32.xlu0 %v3431, 16
      %v3454 = vpop.permute.xlu0 %3453
      %3455 = vrot.lane.b32.xlu0 %v3430, 16
      %v3456 = vpop.permute.xlu0 %3455
      %3457 = vrot.lane.b32.xlu0 %v3434, 16
      %v3458 = vpop.permute.xlu0 %3457
      %3459 = vrot.lane.b32.xlu0 %v3433, 16
      %v3460 = vpop.permute.xlu0 %3459
      %3461 = vrot.lane.b32.xlu0 %v3437, 16
      %v3462 = vpop.permute.xlu0 %3461
      %3463 = vrot.lane.b32.xlu0 %v3436, 16
      %v3464 = vpop.permute.xlu0 %3463
      %3465 = vrot.lane.b32.xlu0 %v3440, 16
      %v3466 = vpop.permute.xlu0 %3465
      %3467 = vrot.lane.b32.xlu0 %v3439, 16
      %v3468 = vpop.permute.xlu0 %3467
      %3469 = vrot.lane.b32.xlu0 %v3443, 16
      %v3470 = vpop.permute.xlu0 %3469
      %3471 = vrot.lane.b32.xlu0 %v3442, 16
      %v3472 = vpop.permute.xlu0 %3471
      %3473 = vrot.lane.b32.xlu0 %v3446, 16
      %v3474 = vpop.permute.xlu0 %3473
      %3475 = vrot.lane.b32.xlu0 %v3445, 16
      %v3476 = vpop.permute.xlu0 %3475
      %3477 = vrot.lane.b32.xlu0 %v3449, 16
      %v3478 = vpop.permute.xlu0 %3477
      %3479 = vrot.lane.b32.xlu0 %v3448, 16
      %v3480 = vpop.permute.xlu0 %3479
      %3481 = vrot.lane.b32.xlu0 %v3452, 16
      %v3482 = vpop.permute.xlu0 %3481
      %3483 = vrot.lane.b32.xlu0 %v3451, 16
      %v3484 = vpop.permute.xlu0 %3483
      %v3487 = vsel %vm670, %v3229, %v3382
      %v3489 = vsel %vm670, %v3230, %v3384
      %v3492 = vsel %vm670, %v3231, %v3386
      %v3494 = vsel %vm670, %v3232, %v3388
      %v3497 = vsel %vm670, %v3233, %v3390
      %v3499 = vsel %vm670, %v3234, %v3392
      %v3502 = vsel %vm670, %v3235, %v3394
      %v3504 = vsel %vm670, %v3236, %v3396
      %v3507 = vsel %vm670, %v3237, %v3398
      %v3509 = vsel %vm670, %v3238, %v3400
      %v3512 = vsel %vm670, %v3239, %v3402
      %v3514 = vsel %vm670, %v3240, %v3404
      %v3517 = vsel %vm670, %v3241, %v3406
      %v3519 = vsel %vm670, %v3242, %v3408
      %v3522 = vsel %vm670, %v3243, %v3410
      %v3524 = vsel %vm670, %v3244, %v3412
      %v3526 = vsel %vm2350, %v3487, %v3454
      %v3528 = vsel %vm2350, %v3489, %v3456
      %v3530 = vsel %vm2350, %v3492, %v3458
      %v3532 = vsel %vm2350, %v3494, %v3460
      %v3534 = vsel %vm2350, %v3497, %v3462
      %v3536 = vsel %vm2350, %v3499, %v3464
      %v3538 = vsel %vm2350, %v3502, %v3466
      %v3540 = vsel %vm2350, %v3504, %v3468
      %v3542 = vsel %vm2350, %v3507, %v3470
      %v3544 = vsel %vm2350, %v3509, %v3472
      %v3546 = vsel %vm2350, %v3512, %v3474
      %v3548 = vsel %vm2350, %v3514, %v3476
      %v3550 = vsel %vm2350, %v3517, %v3478
      %v3552 = vsel %vm2350, %v3519, %v3480
      %v3554 = vsel %vm2350, %v3522, %v3482
      %v3556 = vsel %vm2350, %v3524, %v3484
      %v3557 = vshrl.u32 %v3526, 16
      %v3559 = vrot.slane %v3557, 3
      %v3560 = vshll.u32 %v3526, 16
      %v3562 = vrot.slane %v3560, 4
      %v3563 = vor.u32 %v3559, %v3562
      %v3564 = vshrl.u32 %v3528, 16
      %v3566 = vrot.slane %v3564, 3
      %v3567 = vshll.u32 %v3528, 16
      %v3569 = vrot.slane %v3567, 4
      %v3570 = vor.u32 %v3566, %v3569
      %v3571 = vsel %vm2383, %v3563, %v3570
      %v3572 = vshrl.u32 %v3530, 16
      %v3574 = vrot.slane %v3572, 3
      %v3575 = vshll.u32 %v3530, 16
      %v3577 = vrot.slane %v3575, 4
      %v3578 = vor.u32 %v3574, %v3577
      %v3579 = vshrl.u32 %v3532, 16
      %v3581 = vrot.slane %v3579, 3
      %v3582 = vshll.u32 %v3532, 16
      %v3584 = vrot.slane %v3582, 4
      %v3585 = vor.u32 %v3581, %v3584
      %v3586 = vsel %vm2383, %v3578, %v3585
      %v3587 = vshrl.u32 %v3534, 16
      %v3589 = vrot.slane %v3587, 3
      %v3590 = vshll.u32 %v3534, 16
      %v3592 = vrot.slane %v3590, 4
      %v3593 = vor.u32 %v3589, %v3592
      %v3594 = vshrl.u32 %v3536, 16
      %v3596 = vrot.slane %v3594, 3
      %v3597 = vshll.u32 %v3536, 16
      %v3599 = vrot.slane %v3597, 4
      %v3600 = vor.u32 %v3596, %v3599
      %v3601 = vsel %vm2383, %v3593, %v3600
      %v3602 = vshrl.u32 %v3538, 16
      %v3604 = vrot.slane %v3602, 3
      %v3605 = vshll.u32 %v3538, 16
      %v3607 = vrot.slane %v3605, 4
      %v3608 = vor.u32 %v3604, %v3607
      %v3609 = vshrl.u32 %v3540, 16
      %v3611 = vrot.slane %v3609, 3
      %v3612 = vshll.u32 %v3540, 16
      %v3614 = vrot.slane %v3612, 4
      %v3615 = vor.u32 %v3611, %v3614
      %v3616 = vsel %vm2383, %v3608, %v3615
      %v3617 = vshrl.u32 %v3542, 16
      %v3619 = vrot.slane %v3617, 3
      %v3620 = vshll.u32 %v3542, 16
      %v3622 = vrot.slane %v3620, 4
      %v3623 = vor.u32 %v3619, %v3622
      %v3624 = vshrl.u32 %v3544, 16
      %v3626 = vrot.slane %v3624, 3
      %v3627 = vshll.u32 %v3544, 16
      %v3629 = vrot.slane %v3627, 4
      %v3630 = vor.u32 %v3626, %v3629
      %v3631 = vsel %vm2383, %v3623, %v3630
      %v3632 = vshrl.u32 %v3546, 16
      %v3634 = vrot.slane %v3632, 3
      %v3635 = vshll.u32 %v3546, 16
      %v3637 = vrot.slane %v3635, 4
      %v3638 = vor.u32 %v3634, %v3637
      %v3639 = vshrl.u32 %v3548, 16
      %v3641 = vrot.slane %v3639, 3
      %v3642 = vshll.u32 %v3548, 16
      %v3644 = vrot.slane %v3642, 4
      %v3645 = vor.u32 %v3641, %v3644
      %v3646 = vsel %vm2383, %v3638, %v3645
      %v3647 = vshrl.u32 %v3550, 16
      %v3649 = vrot.slane %v3647, 3
      %v3650 = vshll.u32 %v3550, 16
      %v3652 = vrot.slane %v3650, 4
      %v3653 = vor.u32 %v3649, %v3652
      %v3654 = vshrl.u32 %v3552, 16
      %v3656 = vrot.slane %v3654, 3
      %v3657 = vshll.u32 %v3552, 16
      %v3659 = vrot.slane %v3657, 4
      %v3660 = vor.u32 %v3656, %v3659
      %v3661 = vsel %vm2383, %v3653, %v3660
      %v3662 = vshrl.u32 %v3554, 16
      %v3664 = vrot.slane %v3662, 3
      %v3665 = vshll.u32 %v3554, 16
      %v3667 = vrot.slane %v3665, 4
      %v3668 = vor.u32 %v3664, %v3667
      %v3669 = vshrl.u32 %v3556, 16
      %v3671 = vrot.slane %v3669, 3
      %v3672 = vshll.u32 %v3556, 16
      %v3674 = vrot.slane %v3672, 4
      %v3675 = vor.u32 %v3671, %v3674
      %v3676 = vsel %vm2383, %v3668, %v3675
      %s3677 = scalar_lea.vmem %s3, 24
      %v3678 = vld [vmem:[%s3677] sm:$0xf]
      %v3679 = vld [vmem:[%s3677 + $0x4] sm:$0xf]
      %v3680 = vld [vmem:[%s3677 + $0x8] sm:$0xf]
      %v3684 = vunpack.c.l.b16 %v3678
      %v3685 = vunpack.c.l.b16 %v3679
      %v3686 = vunpack.c.l.b16 %v3680
      %v3687 = vpack.c.b16 %v3685, %v3684
      %v3688 = vpack.c.b16 %v3686, %v3686
      %v3691 = vsel %vm2969, %v3571, 0
      %v3694 = vsel %vm2969, %v3586, 0
      %v3697 = vsel %vm2969, %v3601, 0
      %v3700 = vsel %vm2969, %v3616, 0
      %v3703 = vsel %vm2969, %v3631, 0
      %v3706 = vsel %vm2969, %v3646, 0
      %v3709 = vsel %vm2969, %v3661, 0
      %v3712 = vsel %vm2969, %v3676, 0
      %v3715 = vsel %vm2994, %v3688, 0
      %3717 = vmatprep.subr.bf16.mxu0 0
      %3718 = vmatpush1.bf16.msra.mxu0 %v3687
      %3719 = vmatprep.subr.bf16.mxu0 0
      %3720 = vmatpush1.bf16.msra.mxu0 %v3715
      %3721 = vmatprep.subr.bf16.mxu0 0
      %3722 = vmatpush1.bf16.msra.mxu0 0
      %3723 = vmatprep.subr.bf16.mxu0 0
      %3724 = vmatpush1.bf16.msra.mxu0 0
      %3725 = vmatprep.subr.bf16.mxu0 0
      %3726 = vmatpush1.bf16.msra.mxu0 0
      %3727 = vmatprep.subr.bf16.mxu0 0
      %3728 = vmatpush1.bf16.msra.mxu0 0
      %3729 = vmatprep.subr.bf16.mxu0 0
      %3730 = vmatpush1.bf16.msra.mxu0 0
      %3731 = vmatprep.subr.bf16.mxu0 0
      %3732 = vmatpush1.bf16.msra.mxu0 0
      %3733 = vmatprep.subr.bf16.mxu0 0
      %3734 = vmatpush1.bf16.msra.mxu0 0
      %3735 = vmatprep.subr.bf16.mxu0 0
      %3736 = vmatpush1.bf16.msra.mxu0 0
      %3737 = vmatprep.subr.bf16.mxu0 0
      %3738 = vmatpush1.bf16.msra.mxu0 0
      %3739 = vmatprep.subr.bf16.mxu0 0
      %3740 = vmatpush1.bf16.msra.mxu0 0
      %3741 = vmatprep.subr.bf16.mxu0 0
      %3742 = vmatpush1.bf16.msra.mxu0 0
      %3743 = vmatprep.subr.bf16.mxu0 0
      %3744 = vmatpush1.bf16.msra.mxu0 0
      %3745 = vmatprep.subr.bf16.mxu0 0
      %3746 = vmatpush1.bf16.msra.mxu0 0
      %3747 = vmatprep.subr.bf16.mxu0 0
      %3748 = vmatpush1.bf16.msra.mxu0 0
      %3749 = vmatprep.mubr.bf16.mxu0 0
      %3750 = vmatmul.mubr.bf16.gmra.mrb[0].mxu0 %v3691
      %v3751 = vpop.f32.mrb[0].mxu0
      %v3752 = vadd.f32 0.0, %v3751
      %v3753 = vpop.f32.mrb[0].mxu0
      %v3754 = vpop.f32.mrb[0].mxu0
      %v3755 = vadd.f32 0.0, %v3754
      %v3756 = vpop.f32.mrb[0].mxu0
      %3757 = vmatprep.mubr.bf16.mxu0 0
      %3758 = vmatmul.mubr.bf16.gmra.mrb[0].mxu0 %v3694
      %v3759 = vpop.f32.mrb[0].mxu0
      %v3760 = vadd.f32 0.0, %v3759
      %v3761 = vpop.f32.mrb[0].mxu0
      %v3762 = vpop.f32.mrb[0].mxu0
      %v3763 = vadd.f32 0.0, %v3762
      %v3764 = vpop.f32.mrb[0].mxu0
      %3765 = vmatprep.mubr.bf16.mxu0 0
      %3766 = vmatmul.mubr.bf16.gmra.mrb[0].mxu0 %v3697
      %v3767 = vpop.f32.mrb[0].mxu0
      %v3768 = vadd.f32 0.0, %v3767
      %v3769 = vpop.f32.mrb[0].mxu0
      %v3770 = vpop.f32.mrb[0].mxu0
      %v3771 = vadd.f32 0.0, %v3770
      %v3772 = vpop.f32.mrb[0].mxu0
      %3773 = vmatprep.mubr.bf16.mxu0 0
      %3774 = vmatmul.mubr.bf16.gmra.mrb[0].mxu0 %v3700
      %v3775 = vpop.f32.mrb[0].mxu0
      %v3776 = vadd.f32 0.0, %v3775
      %v3777 = vpop.f32.mrb[0].mxu0
      %v3778 = vpop.f32.mrb[0].mxu0
      %v3779 = vadd.f32 0.0, %v3778
      %v3780 = vpop.f32.mrb[0].mxu0
      %3781 = vmatprep.mubr.bf16.mxu0 0
      %3782 = vmatmul.mubr.bf16.gmra.mrb[0].mxu0 %v3703
      %v3783 = vpop.f32.mrb[0].mxu0
      %v3784 = vadd.f32 0.0, %v3783
      %v3785 = vpop.f32.mrb[0].mxu0
      %v3786 = vpop.f32.mrb[0].mxu0
      %v3787 = vadd.f32 0.0, %v3786
      %v3788 = vpop.f32.mrb[0].mxu0
      %3789 = vmatprep.mubr.bf16.mxu0 0
      %3790 = vmatmul.mubr.bf16.gmra.mrb[0].mxu0 %v3706
      %v3791 = vpop.f32.mrb[0].mxu0
      %v3792 = vadd.f32 0.0, %v3791
      %v3793 = vpop.f32.mrb[0].mxu0
      %v3794 = vpop.f32.mrb[0].mxu0
      %v3795 = vadd.f32 0.0, %v3794
      %v3796 = vpop.f32.mrb[0].mxu0
      %3797 = vmatprep.mubr.bf16.mxu0 0
      %3798 = vmatmul.mubr.bf16.gmra.mrb[0].mxu0 %v3709
      %v3799 = vpop.f32.mrb[0].mxu0
      %v3800 = vadd.f32 0.0, %v3799
      %v3801 = vpop.f32.mrb[0].mxu0
      %v3802 = vpop.f32.mrb[0].mxu0
      %v3803 = vadd.f32 0.0, %v3802
      %v3804 = vpop.f32.mrb[0].mxu0
      %3805 = vmatprep.mubr.bf16.mxu0 0
      %3806 = vmatmul.mubr.bf16.gmra.mrb[0].mxu0 %v3712
      %v3807 = vpop.f32.mrb[0].mxu0
      %v3808 = vadd.f32 0.0, %v3807
      %v3809 = vpop.f32.mrb[0].mxu0
      %v3810 = vpop.f32.mrb[0].mxu0
      %v3811 = vadd.f32 0.0, %v3810
      %v3812 = vpop.f32.mrb[0].mxu0
      %3813 = vdwg.mxu0
      %v3814 = vadd.f32 %v3166, %v3752
      %v3815 = vadd.f32 %v3169, %v3755
      %v3816 = vadd.f32 %v3174, %v3760
      %v3817 = vadd.f32 %v3177, %v3763
      %v3818 = vadd.f32 %v3182, %v3768
      %v3819 = vadd.f32 %v3185, %v3771
      %v3820 = vadd.f32 %v3190, %v3776
      %v3821 = vadd.f32 %v3193, %v3779
      %v3822 = vadd.f32 %v3198, %v3784
      %v3823 = vadd.f32 %v3201, %v3787
      %v3824 = vadd.f32 %v3206, %v3792
      %v3825 = vadd.f32 %v3209, %v3795
      %v3826 = vadd.f32 %v3214, %v3800
      %v3827 = vadd.f32 %v3217, %v3803
      %v3828 = vadd.f32 %v3222, %v3808
      %v3829 = vadd.f32 %v3225, %v3811
      %v3830 = vld [vmem:[%s4] sm:$0x1]
      %v3832 = vlaneseq
      %v3833 = vshrl.u32 %v3832, 7
      %v3834 = vsub.s32 0, %v3833
      %v3835 = vrot.slane %v3830, %v3834
      %v3837 = vadd.f32 %v3814, %v3835
      %v3838 = vadd.f32 %v3815, %v3835
      %v3839 = vadd.f32 %v3816, %v3835
      %v3840 = vadd.f32 %v3817, %v3835
      %v3841 = vadd.f32 %v3818, %v3835
      %v3842 = vadd.f32 %v3819, %v3835
      %v3843 = vadd.f32 %v3820, %v3835
      %v3844 = vadd.f32 %v3821, %v3835
      %v3845 = vadd.f32 %v3822, %v3835
      %v3846 = vadd.f32 %v3823, %v3835
      %v3847 = vadd.f32 %v3824, %v3835
      %v3848 = vadd.f32 %v3825, %v3835
      %v3849 = vadd.f32 %v3826, %v3835
      %v3850 = vadd.f32 %v3827, %v3835
      %v3851 = vadd.f32 %v3828, %v3835
      %v3852 = vadd.f32 %v3829, %v3835
      %v3853 = vld [vmem:[%s1367] sm:$0xf]
      %v3854 = vld [vmem:[%s1367 + $0x4] sm:$0xf]
      %v3855 = vld [vmem:[%s1367 + $0x8] sm:$0x1]
      %v3856 = vld [vmem:[%s1367 + $0xc] sm:$0xf]
      %v3857 = vld [vmem:[%s1367 + $0x10] sm:$0xf]
      %v3858 = vld [vmem:[%s1367 + $0x14] sm:$0x1]
      %v3859 = vld [vmem:[%s1367 + $0x18] sm:$0xf]
      %v3860 = vld [vmem:[%s1367 + $0x1c] sm:$0xf]
      %v3861 = vld [vmem:[%s1367 + $0x20] sm:$0x1]
      %v3862 = vld [vmem:[%s1367 + $0x24] sm:$0xf]
      %v3863 = vld [vmem:[%s1367 + $0x28] sm:$0xf]
      %v3864 = vld [vmem:[%s1367 + $0x2c] sm:$0x1]
      %v3865 = vld [vmem:[%s1367 + $0x30] sm:$0xf]
      %v3866 = vld [vmem:[%s1367 + $0x34] sm:$0xf]
      %v3867 = vld [vmem:[%s1367 + $0x38] sm:$0x1]
      %v3868 = vld [vmem:[%s1367 + $0x3c] sm:$0xf]
      %v3869 = vld [vmem:[%s1367 + $0x40] sm:$0xf]
      %v3870 = vld [vmem:[%s1367 + $0x44] sm:$0x1]
      %v3871 = vld [vmem:[%s1367 + $0x48] sm:$0xf]
      %v3872 = vld [vmem:[%s1367 + $0x4c] sm:$0xf]
      %v3873 = vld [vmem:[%s1367 + $0x50] sm:$0x1]
      %v3874 = vld [vmem:[%s1367 + $0x54] sm:$0xf]
      %v3875 = vld [vmem:[%s1367 + $0x58] sm:$0xf]
      %v3876 = vld [vmem:[%s1367 + $0x5c] sm:$0x1]
      %vm3877 = vsmask.f32 3328
      %vm3878 = vsmask.f32 7440
      %vm3879 = vmor %vm3877, %vm3878
      %v3881 = vshrl.u32 %v3853, 16
      %v3883 = vrot.slane %v3881, 4
      %v3884 = vshll.u32 %v3853, 16
      %v3886 = vrot.slane %v3884, 5
      %v3887 = vor.u32 %v3883, %v3886
      %v3888 = vrot.slane %v3887, 4
      %v3890 = vshll.u32 %v3854, 16
      %v3892 = vrot.slane %v3890, 5
      %v3893 = vsel %vm3879, %v3888, %v3892
      %v3894 = vshrl.u32 %v3854, 16
      %v3896 = vrot.slane %v3894, 4
      %v3897 = vor.u32 %v3896, %v3892
      %v3898 = vrot.slane %v3897, 4
      %v3900 = vshll.u32 %v3855, 16
      %v3902 = vrot.slane %v3900, 5
      %v3903 = vsel %vm3879, %v3898, %v3902
      %v3905 = vshrl.u32 %v3856, 16
      %v3907 = vrot.slane %v3905, 4
      %v3908 = vshll.u32 %v3856, 16
      %v3910 = vrot.slane %v3908, 5
      %v3911 = vor.u32 %v3907, %v3910
      %v3912 = vrot.slane %v3911, 4
      %v3914 = vshll.u32 %v3857, 16
      %v3916 = vrot.slane %v3914, 5
      %v3917 = vsel %vm3879, %v3912, %v3916
      %v3918 = vshrl.u32 %v3857, 16
      %v3920 = vrot.slane %v3918, 4
      %v3921 = vor.u32 %v3920, %v3916
      %v3922 = vrot.slane %v3921, 4
      %v3924 = vshll.u32 %v3858, 16
      %v3926 = vrot.slane %v3924, 5
      %v3927 = vsel %vm3879, %v3922, %v3926
      %v3929 = vshrl.u32 %v3859, 16
      %v3931 = vrot.slane %v3929, 4
      %v3932 = vshll.u32 %v3859, 16
      %v3934 = vrot.slane %v3932, 5
      %v3935 = vor.u32 %v3931, %v3934
      %v3936 = vrot.slane %v3935, 4
      %v3938 = vshll.u32 %v3860, 16
      %v3940 = vrot.slane %v3938, 5
      %v3941 = vsel %vm3879, %v3936, %v3940
      %v3942 = vshrl.u32 %v3860, 16
      %v3944 = vrot.slane %v3942, 4
      %v3945 = vor.u32 %v3944, %v3940
      %v3946 = vrot.slane %v3945, 4
      %v3948 = vshll.u32 %v3861, 16
      %v3950 = vrot.slane %v3948, 5
      %v3951 = vsel %vm3879, %v3946, %v3950
      %v3953 = vshrl.u32 %v3862, 16
      %v3955 = vrot.slane %v3953, 4
      %v3956 = vshll.u32 %v3862, 16
      %v3958 = vrot.slane %v3956, 5
      %v3959 = vor.u32 %v3955, %v3958
      %v3960 = vrot.slane %v3959, 4
      %v3962 = vshll.u32 %v3863, 16
      %v3964 = vrot.slane %v3962, 5
      %v3965 = vsel %vm3879, %v3960, %v3964
      %v3966 = vshrl.u32 %v3863, 16
      %v3968 = vrot.slane %v3966, 4
      %v3969 = vor.u32 %v3968, %v3964
      %v3970 = vrot.slane %v3969, 4
      %v3972 = vshll.u32 %v3864, 16
      %v3974 = vrot.slane %v3972, 5
      %v3975 = vsel %vm3879, %v3970, %v3974
      %v3977 = vshrl.u32 %v3865, 16
      %v3979 = vrot.slane %v3977, 4
      %v3980 = vshll.u32 %v3865, 16
      %v3982 = vrot.slane %v3980, 5
      %v3983 = vor.u32 %v3979, %v3982
      %v3984 = vrot.slane %v3983, 4
      %v3986 = vshll.u32 %v3866, 16
      %v3988 = vrot.slane %v3986, 5
      %v3989 = vsel %vm3879, %v3984, %v3988
      %v3990 = vshrl.u32 %v3866, 16
      %v3992 = vrot.slane %v3990, 4
      %v3993 = vor.u32 %v3992, %v3988
      %v3994 = vrot.slane %v3993, 4
      %v3996 = vshll.u32 %v3867, 16
      %v3998 = vrot.slane %v3996, 5
      %v3999 = vsel %vm3879, %v3994, %v3998
      %v4001 = vshrl.u32 %v3868, 16
      %v4003 = vrot.slane %v4001, 4
      %v4004 = vshll.u32 %v3868, 16
      %v4006 = vrot.slane %v4004, 5
      %v4007 = vor.u32 %v4003, %v4006
      %v4008 = vrot.slane %v4007, 4
      %v4010 = vshll.u32 %v3869, 16
      %v4012 = vrot.slane %v4010, 5
      %v4013 = vsel %vm3879, %v4008, %v4012
      %v4014 = vshrl.u32 %v3869, 16
      %v4016 = vrot.slane %v4014, 4
      %v4017 = vor.u32 %v4016, %v4012
      %v4018 = vrot.slane %v4017, 4
      %v4020 = vshll.u32 %v3870, 16
      %v4022 = vrot.slane %v4020, 5
      %v4023 = vsel %vm3879, %v4018, %v4022
      %v4025 = vshrl.u32 %v3871, 16
      %v4027 = vrot.slane %v4025, 4
      %v4028 = vshll.u32 %v3871, 16
      %v4030 = vrot.slane %v4028, 5
      %v4031 = vor.u32 %v4027, %v4030
      %v4032 = vrot.slane %v4031, 4
      %v4034 = vshll.u32 %v3872, 16
      %v4036 = vrot.slane %v4034, 5
      %v4037 = vsel %vm3879, %v4032, %v4036
      %v4038 = vshrl.u32 %v3872, 16
      %v4040 = vrot.slane %v4038, 4
      %v4041 = vor.u32 %v4040, %v4036
      %v4042 = vrot.slane %v4041, 4
      %v4044 = vshll.u32 %v3873, 16
      %v4046 = vrot.slane %v4044, 5
      %v4047 = vsel %vm3879, %v4042, %v4046
      %v4049 = vshrl.u32 %v3874, 16
      %v4051 = vrot.slane %v4049, 4
      %v4052 = vshll.u32 %v3874, 16
      %v4054 = vrot.slane %v4052, 5
      %v4055 = vor.u32 %v4051, %v4054
      %v4056 = vrot.slane %v4055, 4
      %v4058 = vshll.u32 %v3875, 16
      %v4060 = vrot.slane %v4058, 5
      %v4061 = vsel %vm3879, %v4056, %v4060
      %v4062 = vshrl.u32 %v3875, 16
      %v4064 = vrot.slane %v4062, 4
      %v4065 = vor.u32 %v4064, %v4060
      %v4066 = vrot.slane %v4065, 4
      %v4068 = vshll.u32 %v3876, 16
      %v4070 = vrot.slane %v4068, 5
      %v4071 = vsel %vm3879, %v4066, %v4070
      %v4072 = vld [vmem:[%s5] sm:$0x3]
      %v4073 = vld [vmem:[%s6] sm:$0x1]
      %v4075 = vlaneseq
      %v4076 = vshrl.u32 %v4075, 7
      %v4077 = vsub.s32 0, %v4076
      %v4078 = vrot.slane %v4073, %v4077
      %v4080 = vunpack.c.l.b16 %v3893
      %v4081 = vunpack.c.l.b16 %v3903
      %v4082 = vunpack.c.l.b16 %v3917
      %v4083 = vunpack.c.l.b16 %v3927
      %v4084 = vunpack.c.l.b16 %v3941
      %v4085 = vunpack.c.l.b16 %v3951
      %v4086 = vunpack.c.l.b16 %v3965
      %v4087 = vunpack.c.l.b16 %v3975
      %v4088 = vunpack.c.l.b16 %v3989
      %v4089 = vunpack.c.l.b16 %v3999
      %v4090 = vunpack.c.l.b16 %v4013
      %v4091 = vunpack.c.l.b16 %v4023
      %v4092 = vunpack.c.l.b16 %v4037
      %v4093 = vunpack.c.l.b16 %v4047
      %v4094 = vunpack.c.l.b16 %v4061
      %v4095 = vunpack.c.l.b16 %v4071
      %v4096 = vpack.c.b16 %v4081, %v4080
      %v4097 = vpack.c.b16 %v4083, %v4082
      %v4098 = vpack.c.b16 %v4085, %v4084
      %v4099 = vpack.c.b16 %v4087, %v4086
      %v4100 = vpack.c.b16 %v4089, %v4088
      %v4101 = vpack.c.b16 %v4091, %v4090
      %v4102 = vpack.c.b16 %v4093, %v4092
      %v4103 = vpack.c.b16 %v4095, %v4094
      %v4105 = vsel %vm649, %v4096, 0
      %v4108 = vsel %vm649, %v4097, 0
      %v4111 = vsel %vm649, %v4098, 0
      %v4114 = vsel %vm649, %v4099, 0
      %v4117 = vsel %vm649, %v4100, 0
      %v4120 = vsel %vm649, %v4101, 0
      %v4123 = vsel %vm649, %v4102, 0
      %v4126 = vsel %vm649, %v4103, 0
      %vm4128 = vcmask 1041408
      %v4130 = vsel %vm4128, %v4072, 0
      %4132 = vmatprep.subr.bf16.mxu0 0
      %4133 = vmatpush1.bf16.msra.mxu0 %v4130
      %4134 = vmatprep.subr.bf16.mxu0 0
      %4135 = vmatpush1.bf16.msra.mxu0 0
      %4136 = vmatprep.subr.bf16.mxu0 0
      %4137 = vmatpush1.bf16.msra.mxu0 0
      %4138 = vmatprep.subr.bf16.mxu0 0
      %4139 = vmatpush1.bf16.msra.mxu0 0
      %4140 = vmatprep.subr.bf16.mxu0 0
      %4141 = vmatpush1.bf16.msra.mxu0 0
      %4142 = vmatprep.subr.bf16.mxu0 0
      %4143 = vmatpush1.bf16.msra.mxu0 0
      %4144 = vmatprep.subr.bf16.mxu0 0
      %4145 = vmatpush1.bf16.msra.mxu0 0
      %4146 = vmatprep.subr.bf16.mxu0 0
      %4147 = vmatpush1.bf16.msra.mxu0 0
      %4148 = vmatprep.subr.bf16.mxu0 0
      %4149 = vmatpush1.bf16.msra.mxu0 0
      %4150 = vmatprep.subr.bf16.mxu0 0
      %4151 = vmatpush1.bf16.msra.mxu0 0
      %4152 = vmatprep.subr.bf16.mxu0 0
      %4153 = vmatpush1.bf16.msra.mxu0 0
      %4154 = vmatprep.subr.bf16.mxu0 0
      %4155 = vmatpush1.bf16.msra.mxu0 0
      %4156 = vmatprep.subr.bf16.mxu0 0
      %4157 = vmatpush1.bf16.msra.mxu0 0
      %4158 = vmatprep.subr.bf16.mxu0 0
      %4159 = vmatpush1.bf16.msra.mxu0 0
      %4160 = vmatprep.subr.bf16.mxu0 0
      %4161 = vmatpush1.bf16.msra.mxu0 0
      %4162 = vmatprep.subr.bf16.mxu0 0
      %4163 = vmatpush1.bf16.msra.mxu0 0
      %4164 = vmatprep.mubr.bf16.mxu0 0
      %4165 = vmatmul.mubr.bf16.gmra.mrb[0].mxu0 %v4105
      %v4166 = vpop.f32.mrb[0].mxu0
      %v4167 = vadd.f32 %v4078, %v4166
      %v4168 = vpop.f32.mrb[0].mxu0
      %v4169 = vpop.f32.mrb[0].mxu0
      %v4170 = vadd.f32 %v4078, %v4169
      %v4171 = vpop.f32.mrb[0].mxu0
      %4172 = vmatprep.mubr.bf16.mxu0 0
      %4173 = vmatmul.mubr.bf16.gmra.mrb[0].mxu0 %v4108
      %v4174 = vpop.f32.mrb[0].mxu0
      %v4175 = vadd.f32 %v4078, %v4174
      %v4176 = vpop.f32.mrb[0].mxu0
      %v4177 = vpop.f32.mrb[0].mxu0
      %v4178 = vadd.f32 %v4078, %v4177
      %v4179 = vpop.f32.mrb[0].mxu0
      %4180 = vmatprep.mubr.bf16.mxu0 0
      %4181 = vmatmul.mubr.bf16.gmra.mrb[0].mxu0 %v4111
      %v4182 = vpop.f32.mrb[0].mxu0
      %v4183 = vadd.f32 %v4078, %v4182
      %v4184 = vpop.f32.mrb[0].mxu0
      %v4185 = vpop.f32.mrb[0].mxu0
      %v4186 = vadd.f32 %v4078, %v4185
      %v4187 = vpop.f32.mrb[0].mxu0
      %4188 = vmatprep.mubr.bf16.mxu0 0
      %4189 = vmatmul.mubr.bf16.gmra.mrb[0].mxu0 %v4114
      %v4190 = vpop.f32.mrb[0].mxu0
      %v4191 = vadd.f32 %v4078, %v4190
      %v4192 = vpop.f32.mrb[0].mxu0
      %v4193 = vpop.f32.mrb[0].mxu0
      %v4194 = vadd.f32 %v4078, %v4193
      %v4195 = vpop.f32.mrb[0].mxu0
      %4196 = vmatprep.mubr.bf16.mxu0 0
      %4197 = vmatmul.mubr.bf16.gmra.mrb[0].mxu0 %v4117
      %v4198 = vpop.f32.mrb[0].mxu0
      %v4199 = vadd.f32 %v4078, %v4198
      %v4200 = vpop.f32.mrb[0].mxu0
      %v4201 = vpop.f32.mrb[0].mxu0
      %v4202 = vadd.f32 %v4078, %v4201
      %v4203 = vpop.f32.mrb[0].mxu0
      %4204 = vmatprep.mubr.bf16.mxu0 0
      %4205 = vmatmul.mubr.bf16.gmra.mrb[0].mxu0 %v4120
      %v4206 = vpop.f32.mrb[0].mxu0
      %v4207 = vadd.f32 %v4078, %v4206
      %v4208 = vpop.f32.mrb[0].mxu0
      %v4209 = vpop.f32.mrb[0].mxu0
      %v4210 = vadd.f32 %v4078, %v4209
      %v4211 = vpop.f32.mrb[0].mxu0
      %4212 = vmatprep.mubr.bf16.mxu0 0
      %4213 = vmatmul.mubr.bf16.gmra.mrb[0].mxu0 %v4123
      %v4214 = vpop.f32.mrb[0].mxu0
      %v4215 = vadd.f32 %v4078, %v4214
      %v4216 = vpop.f32.mrb[0].mxu0
      %v4217 = vpop.f32.mrb[0].mxu0
      %v4218 = vadd.f32 %v4078, %v4217
      %v4219 = vpop.f32.mrb[0].mxu0
      %4220 = vmatprep.mubr.bf16.mxu0 0
      %4221 = vmatmul.mubr.bf16.gmra.mrb[0].mxu0 %v4126
      %v4222 = vpop.f32.mrb[0].mxu0
      %v4223 = vadd.f32 %v4078, %v4222
      %v4224 = vpop.f32.mrb[0].mxu0
      %v4225 = vpop.f32.mrb[0].mxu0
      %v4226 = vadd.f32 %v4078, %v4225
      %v4227 = vpop.f32.mrb[0].mxu0
      %4228 = vdwg.mxu0
      %v4229 = vadd.f32 %v3837, %v4167
      %v4230 = vadd.f32 %v3838, %v4170
      %v4231 = vadd.f32 %v3839, %v4175
      %v4232 = vadd.f32 %v3840, %v4178
      %v4233 = vadd.f32 %v3841, %v4183
      %v4234 = vadd.f32 %v3842, %v4186
      %v4235 = vadd.f32 %v3843, %v4191
      %v4236 = vadd.f32 %v3844, %v4194
      %v4237 = vadd.f32 %v3845, %v4199
      %v4238 = vadd.f32 %v3846, %v4202
      %v4239 = vadd.f32 %v3847, %v4207
      %v4240 = vadd.f32 %v3848, %v4210
      %v4241 = vadd.f32 %v3849, %v4215
      %v4242 = vadd.f32 %v3850, %v4218
      %v4243 = vadd.f32 %v3851, %v4223
      %v4244 = vadd.f32 %v3852, %v4226
      %v4245 = vmax.f32 %v4229, 0.0
      %v4246 = vmax.f32 %v4230, 0.0
      %v4247 = vmax.f32 %v4231, 0.0
      %v4248 = vmax.f32 %v4232, 0.0
      %v4249 = vmax.f32 %v4233, 0.0
      %v4250 = vmax.f32 %v4234, 0.0
      %v4251 = vmax.f32 %v4235, 0.0
      %v4252 = vmax.f32 %v4236, 0.0
      %v4253 = vmax.f32 %v4237, 0.0
      %v4254 = vmax.f32 %v4238, 0.0
      %v4255 = vmax.f32 %v4239, 0.0
      %v4256 = vmax.f32 %v4240, 0.0
      %v4257 = vmax.f32 %v4241, 0.0
      %v4258 = vmax.f32 %v4242, 0.0
      %v4259 = vmax.f32 %v4243, 0.0
      %v4260 = vmax.f32 %v4244, 0.0
      %v4261 = vpack.c.bf16 %v4246, %v4245
      %v4262 = vpack.c.bf16 %v4248, %v4247
      %v4263 = vpack.c.bf16 %v4250, %v4249
      %v4264 = vpack.c.bf16 %v4252, %v4251
      %v4265 = vpack.c.bf16 %v4254, %v4253
      %v4266 = vpack.c.bf16 %v4256, %v4255
      %v4267 = vpack.c.bf16 %v4258, %v4257
      %v4268 = vpack.c.bf16 %v4260, %v4259
      %v4277 = vunpack.c.l.b16 %v4261
      %v4278 = vunpack.c.h.b16 %v4261
      %v4279 = vunpack.c.l.b16 %v4262
      %v4280 = vunpack.c.h.b16 %v4262
      %v4281 = vunpack.c.l.b16 %v4263
      %v4282 = vunpack.c.h.b16 %v4263
      %v4283 = vunpack.c.l.b16 %v4264
      %v4284 = vunpack.c.h.b16 %v4264
      %v4285 = vunpack.c.l.b16 %v4265
      %v4286 = vunpack.c.h.b16 %v4265
      %v4287 = vunpack.c.l.b16 %v4266
      %v4288 = vunpack.c.h.b16 %v4266
      %v4289 = vunpack.c.l.b16 %v4267
      %v4290 = vunpack.c.h.b16 %v4267
      %v4291 = vunpack.c.l.b16 %v4268
      %v4292 = vunpack.c.h.b16 %v4268
      %v4293 = vpack.c.b16 %v4277, %v4277
      %v4294 = vpack.c.b16 %v4278, %v4278
      %v4295 = vpack.c.b16 %v4279, %v4279
      %v4296 = vpack.c.b16 %v4280, %v4280
      %v4297 = vpack.c.b16 %v4281, %v4281
      %v4298 = vpack.c.b16 %v4282, %v4282
      %v4299 = vpack.c.b16 %v4283, %v4283
      %v4300 = vpack.c.b16 %v4284, %v4284
      %v4301 = vpack.c.b16 %v4285, %v4285
      %v4302 = vpack.c.b16 %v4286, %v4286
      %v4303 = vpack.c.b16 %v4287, %v4287
      %v4304 = vpack.c.b16 %v4288, %v4288
      %v4305 = vpack.c.b16 %v4289, %v4289
      %v4306 = vpack.c.b16 %v4290, %v4290
      %v4307 = vpack.c.b16 %v4291, %v4291
      %v4308 = vpack.c.b16 %v4292, %v4292
      %4325 = vst.msk [vmem:[%s300] sm:$0xf] %vm1969, %v4293
      %4326 = vst.msk [vmem:[%s300 + $0x4] sm:$0xf] %vm1969, %v4294
      %4327 = vst.msk [vmem:[%s300 + $0x8] sm:$0xf] %vm1969, %v4295
      %4328 = vst.msk [vmem:[%s300 + $0xc] sm:$0xf] %vm1969, %v4296
      %4329 = vst.msk [vmem:[%s300 + $0x10] sm:$0xf] %vm1969, %v4297
      %4330 = vst.msk [vmem:[%s300 + $0x14] sm:$0xf] %vm1969, %v4298
      %4331 = vst.msk [vmem:[%s300 + $0x18] sm:$0xf] %vm1969, %v4299
      %4332 = vst.msk [vmem:[%s300 + $0x1c] sm:$0xf] %vm1969, %v4300
      %4333 = vst.msk [vmem:[%s300 + $0x20] sm:$0xf] %vm1969, %v4301
      %4334 = vst.msk [vmem:[%s300 + $0x24] sm:$0xf] %vm1969, %v4302
      %4335 = vst.msk [vmem:[%s300 + $0x28] sm:$0xf] %vm1969, %v4303
      %4336 = vst.msk [vmem:[%s300 + $0x2c] sm:$0xf] %vm1969, %v4304
      %4337 = vst.msk [vmem:[%s300 + $0x30] sm:$0xf] %vm1969, %v4305
      %4338 = vst.msk [vmem:[%s300 + $0x34] sm:$0xf] %vm1969, %v4306
      %4339 = vst.msk [vmem:[%s300 + $0x38] sm:$0xf] %vm1969, %v4307
      %4340 = vst.msk [vmem:[%s300 + $0x3c] sm:$0xf] %vm1969, %v4308
      %s4341 = smul.u32 16, %s23
      %p4342 = scmp.lt.s32.totalorder %s22, 1
      %s4343 = scalar_select %p4342, %s22, 1
      %p4344 = scmp.lt.s32.totalorder %s4341, 31
      %s4345 = scalar_select %p4344, %s4341, 31
      %s4346 = smul.addr %s4343, 32
      %s4347 = sadd.s32 %s4345, %s4346
      %s4348 = smul.addr %s4347, 4
      %s4349 = scalar_lea.vmem %s7, %s4348
      // Predicated region
      $region57: #{tpu_custom_call.1} parent=47 // pred_check
        %p4350 = pneg %p202
      $region58: #{tpu_custom_call.1} parent=47 // pred_check_branch
        %4352 = sbr.rel (%p4350) target = $region60
      $region59: #{tpu_custom_call.1} parent=47 // pred_region
        %s4353 = smul.u32 16, %s23
      $region60: #{tpu_custom_call.1} parent=47 // pred_fallthru
        _
    $region48: #{tpu_custom_call.1} parent=5 // pred_fallthru
      _
    %p4354 = scmp.le.s32.totalorder 2, %s13
    // Predicated region
    $region61: #{tpu_custom_call.1} parent=5 // pred_check
      %p4355 = pneg %p4354
    $region62: #{tpu_custom_call.1} parent=5 // pred_check_branch
      %4357 = sbr.rel (%p4355) target = $region64
    $region63: #{tpu_custom_call.1} parent=5 // pred_region
      %s4358 = ssub.s32 %s13, 2
      // Predicated region
      $region65: #{tpu_custom_call.1} parent=63 // pred_check
        %p4359 = pneg %p208
      $region66: #{tpu_custom_call.1} parent=63 // pred_check_branch
        %4361 = sbr.rel (%p4359) target = $region68
      $region67: #{tpu_custom_call.1} parent=63 // pred_region
        %s4362 = smul.u32 16, %s25
        %p4363 = scmp.lt.s32.totalorder %s24, 1
        %s4364 = scalar_select %p4363, %s24, 1
        %p4365 = scmp.lt.s32.totalorder %s4362, 31
        %s4366 = scalar_select %p4365, %s4362, 31
        %s4367 = smul.addr %s4364, 32
        %s4368 = sadd.s32 %s4366, %s4367
        %s4369 = smul.addr %s4368, 4
        %s4370 = scalar_lea.vmem %s7, %s4369
      $region68: #{tpu_custom_call.1} parent=63 // pred_fallthru
        _
    $region64: #{tpu_custom_call.1} parent=5 // pred_fallthru
      _
  $region6: #{tpu_custom_call.1} parent=0 // loop_footer
    %s17 = sadd.s32 1, %s13
  $region7: #{tpu_custom_call.1} parent=0 // loop_footer_branch
    %12 = sbr.rel target = $region3
  $region8: #{tpu_custom_call.1} parent=0 // loop_exit
    _

</llo_original>
